<compile_context>
chip_gen: v5e
topology: v5e:2x2
jax: 0.10.0
libtpu: 0.0.40
codegen_flags: <defaults>
</compile_context>

<pallas_src>
import math

import jax
import jax.numpy as jnp
from jax import lax
from jax.experimental import pallas as pl
from jax.experimental.pallas import tpu as pltpu

CP = 128        # padded channel lanes (all true channel counts here are <= 64)
EPS = 1e-5      # PyTorch InstanceNorm2d default
COL0 = 8        # slab column where the spatial interior starts (sublane aligned);
                # column COL0-1 is the conv's left zero padding.


# ------------------------------ in-kernel helpers ------------------------------

def _norm_relu_inplace(slab, Ho, Wo, s1, sq):
    """InstanceNorm2d(affine=False, eps=1e-5) + ReLU over the slab interior, in place.

    Interior = rows [1, Ho], cols [COL0, COL0+Wo).  s1 / sq are the per-channel sum
    and sum-of-squares over the Ho*Wo positions (one-pass stats, f32)."""
    inv_n = 1.0 / float(Ho * Wo)
    mean = s1 * inv_n
    var = jnp.maximum(sq * inv_n - mean * mean, 0.0)
    rstd = lax.rsqrt(var + EPS)                       # EUP, f32 (fine on v5e too)

    def body(i, _):
        y = slab[1 + i, pl.ds(COL0, Wo), :]
        slab[1 + i, pl.ds(COL0, Wo), :] = jnp.maximum((y - mean) * rstd, 0.0)
        return 0

    lax.fori_loop(0, Ho, body, 0)


def _conv_block_from_slab(s_in, s_out, w_ref, Ho, Wo):
    """One ConvBlock: 3x3 / stride-2 / pad-1 conv + InstanceNorm + ReLU.

    Input is the (2Ho x 2Wo) interior of s_in (its zero border supplies the conv
    padding); output goes to the (Ho x Wo) interior of s_out.  The im2col happens
    here via stride-2 sublane ref slices: per output row the conv is 9 shifted
    (Wo, CP) @ (CP, CP) accumulating bf16 MXU matmuls, f32 accumulation."""
    def row(i, carry):
        s1, sq = carry
        acc = jnp.zeros((Wo, CP), jnp.float32)
        for ki in range(3):
            r = 2 * i + ki                            # slab row (row 0 = zero pad)
            for kj in range(3):
                p = s_in[r, pl.ds(COL0 - 1 + kj, Wo, stride=2), :]   # (Wo, CP) f32
                acc = acc + jnp.dot(p.astype(jnp.bfloat16),
                                    w_ref[ki * 3 + kj],
                                    preferred_element_type=jnp.float32)
        s_out[1 + i, pl.ds(COL0, Wo), :] = acc        # raw conv output (pre-norm)
        return (s1 + jnp.sum(acc, axis=0, keepdims=True),
                sq + jnp.sum(acc * acc, axis=0, keepdims=True))

    zero = jnp.zeros((1, CP), jnp.float32)
    s1, sq = lax.fori_loop(0, Ho, row, (zero, zero))
    _norm_relu_inplace(s_out, Ho, Wo, s1, sq)


def _first_block_from_patches(p_ref, w_ref, s_out, Ho, Wo):
    """Layer 1: im2col patches (built in JAX, Cin=3 so K=27) -> one GEMM per row."""
    def row(i, carry):
        s1, sq = carry
        start = pl.multiple_of(i * Wo, Wo)
        lhs = p_ref[0, pl.ds(start, Wo), :]                           # (Wo, K) bf16
        acc = jnp.dot(lhs, w_ref[...], preferred_element_type=jnp.float32)
        s_out[1 + i, pl.ds(COL0, Wo), :] = acc
        return (s1 + jnp.sum(acc, axis=0, keepdims=True),
                sq + jnp.sum(acc * acc, axis=0, keepdims=True))

    zero = jnp.zeros((1, CP), jnp.float32)
    s1, sq = lax.fori_loop(0, Ho, row, (zero, zero))
    _norm_relu_inplace(s_out, Ho, Wo, s1, sq)


def _make_kernel(cfg):
    """cfg: tuple of per-layer output spatial sizes ((H1,W1), ..., (H5,W5))."""
    (H1, W1), (H2, W2), (H3, W3), (H4, W4), (H5, W5) = cfg

    def kernel(p_ref, w1_ref, w2_ref, w3_ref, w4_ref, w5_ref, o_ref,
               s2, s3, s4, s5, s6):
        # Zero the slabs. Only the top row / left pad column strictly need it
        # (interiors are fully overwritten every step), but a splat-zero is trivial
        # and keeps each (megacore-parallel) grid step self-contained.
        for s in (s2, s3, s4, s5, s6):
            s[...] = jnp.zeros(s.shape, s.dtype)

        _first_block_from_patches(p_ref, w1_ref, s2, H1, W1)
        _conv_block_from_slab(s2, s3, w2_ref, H2, W2)
        _conv_block_from_slab(s3, s4, w3_ref, H3, W3)
        _conv_block_from_slab(s4, s5, w4_ref, H4, W4)
        _conv_block_from_slab(s5, s6, w5_ref, H5, W5)

        # Emit the final activation lane-dense (128-padded channels, unmasked vst);
        # the single true channel is sliced out by the caller.
        for i in range(H5):
            o_ref[0, pl.ds(i * W5, W5), :] = s6[1 + i, pl.ds(COL0, W5), :]

    return kernel


# ----------------------------- JAX glue ---------------------------------------

def _im2col_s2_k3_p1(x_nhwc):
    """3x3/stride-2/pad-1 patches for the FIRST conv only (Cin=3 -> K=27, tiny)."""
    N, H, W, C = x_nhwc.shape
    Ho, Wo = H // 2, W // 2
    xp = jnp.pad(x_nhwc, ((0, 0), (1, 1), (1, 1), (0, 0)))
    cols = [xp[:, ki:ki + 2 * Ho:2, kj:kj + 2 * Wo:2, :]
            for ki in range(3) for kj in range(3)]
    patches = jnp.concatenate(cols, axis=-1)                  # (N, Ho, Wo, 9*C)
    return patches.reshape(N, Ho * Wo, 9 * C)


def pack_params(params):
    """Pack conv weights for the fused kernel (bf16, channel dims padded to CP).

    The conv biases are dropped: a constant per-channel offset is exactly cancelled
    by InstanceNorm2d(affine=False), so '+ b' never changes the forward output."""
    (w1, _b1) = params[0]
    _, _, cin1, cout1 = w1.shape
    assert cout1 <= CP
    w1p = jnp.pad(w1.reshape(9 * cin1, cout1),
                  ((0, 0), (0, CP - cout1))).astype(jnp.bfloat16)     # (9*Cin, CP)
    packed = [w1p]
    for (w, _b) in params[1:]:
        _, _, cin, cout = w.shape
        assert cin <= CP and cout <= CP
        wp = jnp.pad(w, ((0, 0), (0, 0), (0, CP - cin), (0, CP - cout)))
        packed.append(wp.reshape(9, CP, CP).astype(jnp.bfloat16))     # tap-major
    return packed


def discriminator_forward(x_nchw, packed_ws):
    """Discriminator.forward: input NCHW (PyTorch layout), output NCHW."""
    w1p, w2p, w3p, w4p, w5p = packed_ws
    N, C, H, W = x_nchw.shape
    assert H % 32 == 0 and W % 32 == 0, "need five even stride-2 halvings"
    assert w1p.shape[0] == 9 * C

    x = jnp.transpose(x_nchw, (0, 2, 3, 1)).astype(jnp.float32)       # -> NHWC
    patches = _im2col_s2_k3_p1(x).astype(jnp.bfloat16)                # (N, HW/4, 9C)
    K1 = patches.shape[-1]

    cfg = tuple((H >> k, W >> k) for k in range(1, 6))                # per-layer Ho,Wo
    (H1, W1), (H5, W5) = cfg[0], cfg[-1]
    # One VMEM slab per layer output: 1 top pad row, COL0 left pad cols, CP lanes.
    slab_shapes = [(h + 1, w + COL0, CP) for (h, w) in cfg]

    out = pl.pallas_call(
        _make_kernel(cfg),
        out_shape=jax.ShapeDtypeStruct((N, H5 * W5, CP), jnp.float32),
        grid_spec=pltpu.PrefetchScalarGridSpec(
            num_scalar_prefetch=0,
            grid=(N,),
            in_specs=[
                pl.BlockSpec((1, H1 * W1, K1), lambda n: (n, 0, 0)),   # layer-1 patches
                pl.BlockSpec((K1, CP), lambda n: (0, 0)),              # w1
                pl.BlockSpec((9, CP, CP), lambda n: (0, 0, 0)),        # w2
                pl.BlockSpec((9, CP, CP), lambda n: (0, 0, 0)),        # w3
                pl.BlockSpec((9, CP, CP), lambda n: (0, 0, 0)),        # w4
                pl.BlockSpec((9, CP, CP), lambda n: (0, 0, 0)),        # w5
            ],
            out_specs=pl.BlockSpec((1, H5 * W5, CP), lambda n: (n, 0, 0)),
            scratch_shapes=[pltpu.VMEM(s, jnp.float32) for s in slab_shapes],
        ),
        compiler_params=pltpu.CompilerParams(
            dimension_semantics=("parallel",),     # batch samples across TCs on v7x
        ),
    )(patches, w1p, w2p, w3p, w4p, w5p)

    # TODO(synk): at resolutions well beyond 64x64, tile HWo in the layer-1 spec and
    # set vmem_limit_bytes (only relevant for v7x's smaller VMEM).
    y = out[:, :, :1]                                  # true Cout of the last block = 1
    return jnp.transpose(y.reshape(N, H5, W5, 1), (0, 3, 1, 2))        # -> NCHW


def init_params(key, num_filter=8):
    """Deterministic synthetic params mirroring PyTorch Conv2d default init.
    Biases are created for parity with the torch module but are mathematically
    cancelled by InstanceNorm2d(affine=False) and therefore dropped in pack_params."""
    chans = [3, num_filter, num_filter * 2, num_filter * 4, num_filter * 8, 1]
    params = []
    for i in range(5):
        cin, cout = chans[i], chans[i + 1]
        key, kw, kb = jax.random.split(key, 3)
        bound = 1.0 / math.sqrt(9 * cin)
        w = jax.random.uniform(kw, (3, 3, cin, cout), jnp.float32, -bound, bound)
        b = jax.random.uniform(kb, (cout,), jnp.float32, -bound, bound)
        params.append((w, b))
    return params


# ----------------------------- main -------------------------------------------

if __name__ == "__main__":
    key = jax.random.PRNGKey(0)
    k_x, k_p = jax.random.split(key)

    N, C, H, W = 2, 3, 64, 64              # 5 stride-2 blocks: 64 -> 2
    x = jax.random.normal(k_x, (N, C, H, W), jnp.float32)
    params = init_params(k_p, num_filter=8)
    packed = pack_params(params)           # done once, outside the jitted forward

    fwd = jax.jit(lambda xx: discriminator_forward(xx, packed))
    y = fwd(x)
    jax.block_until_ready(y)

    assert y.shape == (N, 1, H // 32, W // 32), y.shape
    assert bool(jnp.all(jnp.isfinite(y))) and bool(jnp.all(y >= 0.0))  # post-ReLU
    print("KERNEL_OK")
</pallas_src>

<mosaic_0001>
module attributes {stable_mosaic.version = 11 : i64} {
  func.func @kernel(%arg0: i32, %arg1: memref<1x1024x27xbf16, #tpu.memory_space<vmem>>, %arg2: memref<27x128xbf16, #tpu.memory_space<vmem>>, %arg3: memref<9x128x128xbf16, #tpu.memory_space<vmem>>, %arg4: memref<9x128x128xbf16, #tpu.memory_space<vmem>>, %arg5: memref<9x128x128xbf16, #tpu.memory_space<vmem>>, %arg6: memref<9x128x128xbf16, #tpu.memory_space<vmem>>, %arg7: memref<1x4x128xf32, #tpu.memory_space<vmem>>, %arg8: memref<33x40x128xf32, #tpu.memory_space<vmem>>, %arg9: memref<17x24x128xf32, #tpu.memory_space<vmem>>, %arg10: memref<9x16x128xf32, #tpu.memory_space<vmem>>, %arg11: memref<5x12x128xf32, #tpu.memory_space<vmem>>, %arg12: memref<3x10x128xf32, #tpu.memory_space<vmem>>) attributes {dimension_semantics = [#tpu.dimension_semantics<parallel>], iteration_bounds = array<i64: 2>, scalar_prefetch = 0 : i64, scratch_operands = 5 : i64, tpu.core_type = #tpu.core_type<tc>, window_params = [{transform_indices = @transform_0, window_bounds = array<i64: 1, 1024, 27>}, {pipeline_mode = #tpu.pipeline_mode<synchronous>, transform_indices = @transform_1, window_bounds = array<i64: 27, 128>}, {pipeline_mode = #tpu.pipeline_mode<synchronous>, transform_indices = @transform_2, window_bounds = array<i64: 9, 128, 128>}, {pipeline_mode = #tpu.pipeline_mode<synchronous>, transform_indices = @transform_3, window_bounds = array<i64: 9, 128, 128>}, {pipeline_mode = #tpu.pipeline_mode<synchronous>, transform_indices = @transform_4, window_bounds = array<i64: 9, 128, 128>}, {pipeline_mode = #tpu.pipeline_mode<synchronous>, transform_indices = @transform_5, window_bounds = array<i64: 9, 128, 128>}, {transform_indices = @transform_6, window_bounds = array<i64: 1, 4, 128>}]} {
    %cst = arith.constant 0.000000e+00 : f32
    %0 = vector.broadcast %cst : f32 to vector<33x40x128xf32>
    %c0 = arith.constant 0 : index
    %c0_0 = arith.constant 0 : index
    %c0_1 = arith.constant 0 : index
    %1 = vector.load %arg8[%c0, %c0_0, %c0_1] : memref<33x40x128xf32, #tpu.memory_space<vmem>>, vector<33x40x128xf32>
    tpu.vector_store %arg8[%c0, %c0_0, %c0_1], %0 {strides = array<i32>} : memref<33x40x128xf32, #tpu.memory_space<vmem>>, vector<33x40x128xf32>,
    %cst_2 = arith.constant 0.000000e+00 : f32
    %2 = vector.broadcast %cst_2 : f32 to vector<17x24x128xf32>
    %c0_3 = arith.constant 0 : index
    %c0_4 = arith.constant 0 : index
    %c0_5 = arith.constant 0 : index
    %3 = vector.load %arg9[%c0_3, %c0_4, %c0_5] : memref<17x24x128xf32, #tpu.memory_space<vmem>>, vector<17x24x128xf32>
    tpu.vector_store %arg9[%c0_3, %c0_4, %c0_5], %2 {strides = array<i32>} : memref<17x24x128xf32, #tpu.memory_space<vmem>>, vector<17x24x128xf32>,
    %cst_6 = arith.constant 0.000000e+00 : f32
    %4 = vector.broadcast %cst_6 : f32 to vector<9x16x128xf32>
    %c0_7 = arith.constant 0 : index
    %c0_8 = arith.constant 0 : index
    %c0_9 = arith.constant 0 : index
    %5 = vector.load %arg10[%c0_7, %c0_8, %c0_9] : memref<9x16x128xf32, #tpu.memory_space<vmem>>, vector<9x16x128xf32>
    tpu.vector_store %arg10[%c0_7, %c0_8, %c0_9], %4 {strides = array<i32>} : memref<9x16x128xf32, #tpu.memory_space<vmem>>, vector<9x16x128xf32>,
    %cst_10 = arith.constant 0.000000e+00 : f32
    %6 = vector.broadcast %cst_10 : f32 to vector<5x12x128xf32>
    %c0_11 = arith.constant 0 : index
    %c0_12 = arith.constant 0 : index
    %c0_13 = arith.constant 0 : index
    %7 = vector.load %arg11[%c0_11, %c0_12, %c0_13] : memref<5x12x128xf32, #tpu.memory_space<vmem>>, vector<5x12x128xf32>
    tpu.vector_store %arg11[%c0_11, %c0_12, %c0_13], %6 {strides = array<i32>} : memref<5x12x128xf32, #tpu.memory_space<vmem>>, vector<5x12x128xf32>,
    %cst_14 = arith.constant 0.000000e+00 : f32
    %8 = vector.broadcast %cst_14 : f32 to vector<3x10x128xf32>
    %c0_15 = arith.constant 0 : index
    %c0_16 = arith.constant 0 : index
    %c0_17 = arith.constant 0 : index
    %9 = vector.load %arg12[%c0_15, %c0_16, %c0_17] : memref<3x10x128xf32, #tpu.memory_space<vmem>>, vector<3x10x128xf32>
    tpu.vector_store %arg12[%c0_15, %c0_16, %c0_17], %8 {strides = array<i32>} : memref<3x10x128xf32, #tpu.memory_space<vmem>>, vector<3x10x128xf32>,
    %cst_18 = arith.constant 0.000000e+00 : f32
    %10 = vector.broadcast %cst_18 : f32 to vector<1x128xf32>
    %c0_i32 = arith.constant 0 : i32
    %c32_i32 = arith.constant 32 : i32
    %11 = arith.addi %c0_i32, %c32_i32 : i32
    %c1_i32 = arith.constant 1 : i32
    %12:2 = scf.for %arg13 = %c0_i32 to %11 step %c1_i32 iter_args(%arg14 = %10, %arg15 = %10) -> (vector<1x128xf32>, vector<1x128xf32>)  : i32 {
      %c32_i32_85 = arith.constant 32 : i32
      %95 = arith.muli %arg13, %c32_i32_85 : i32
      %96 = tpu.assume_multiple %95, 32 : i32
      %c0_86 = arith.constant 0 : index
      %97 = arith.index_cast %96 : i32 to index
      %c0_87 = arith.constant 0 : index
      %98 = vector.load %arg1[%c0_86, %97, %c0_87] : memref<1x1024x27xbf16, #tpu.memory_space<vmem>>, vector<1x32x27xbf16>
      %99 = vector.shape_cast %98 : vector<1x32x27xbf16> to vector<32x27xbf16>
      %c0_88 = arith.constant 0 : index
      %c0_89 = arith.constant 0 : index
      %100 = vector.load %arg2[%c0_88, %c0_89] : memref<27x128xbf16, #tpu.memory_space<vmem>>, vector<27x128xbf16>
      %cst_90 = arith.constant dense<0.000000e+00> : vector<32x128xf32>
      %101 = tpu.matmul %99, %100, %cst_90 {dimension_numbers = #tpu.dot_dimension_numbers<[1], [0], [0], [1], [0, 0, 1, 1], [], []>} : vector<32x27xbf16>, vector<27x128xbf16>, vector<32x128xf32> -> vector<32x128xf32>
      %c1_i32_91 = arith.constant 1 : i32
      %102 = arith.addi %c1_i32_91, %arg13 : i32
      %103 = arith.index_cast %102 : i32 to index
      %c8_92 = arith.constant 8 : index
      %c0_93 = arith.constant 0 : index
      %104 = vector.load %arg8[%103, %c8_92, %c0_93] : memref<33x40x128xf32, #tpu.memory_space<vmem>>, vector<1x32x128xf32>
      %105 = vector.shape_cast %104 : vector<1x32x128xf32> to vector<32x128xf32>
      %106 = vector.shape_cast %101 : vector<32x128xf32> to vector<1x32x128xf32>
      tpu.vector_store %arg8[%103, %c8_92, %c0_93], %106 {strides = array<i32>} : memref<33x40x128xf32, #tpu.memory_space<vmem>>, vector<1x32x128xf32>,
      %cst_94 = arith.constant dense<0.000000e+00> : vector<128xf32>
      %107 = vector.multi_reduction <add>, %101, %cst_94 [0] : vector<32x128xf32> to vector<128xf32>
      %108 = vector.shape_cast %107 : vector<128xf32> to vector<1x128xf32>
      %109 = arith.addf %arg14, %108 : vector<1x128xf32>
      %110 = arith.mulf %101, %101 : vector<32x128xf32>
      %cst_95 = arith.constant dense<0.000000e+00> : vector<128xf32>
      %111 = vector.multi_reduction <add>, %110, %cst_95 [0] : vector<32x128xf32> to vector<128xf32>
      %112 = vector.shape_cast %111 : vector<128xf32> to vector<1x128xf32>
      %113 = arith.addf %arg15, %112 : vector<1x128xf32>
      scf.yield %109, %113 : vector<1x128xf32>, vector<1x128xf32>
    }
    %c32_i32_19 = arith.constant 32 : i32
    %cst_20 = arith.constant 9.765625E-4 : f32
    %13 = vector.broadcast %cst_20 : f32 to vector<1x128xf32>
    %14 = arith.mulf %12#0, %13 : vector<1x128xf32>
    %cst_21 = arith.constant 9.765625E-4 : f32
    %15 = vector.broadcast %cst_21 : f32 to vector<1x128xf32>
    %16 = arith.mulf %12#1, %15 : vector<1x128xf32>
    %17 = arith.mulf %14, %14 : vector<1x128xf32>
    %18 = arith.subf %16, %17 : vector<1x128xf32>
    %cst_22 = arith.constant 0.000000e+00 : f32
    %19 = vector.broadcast %cst_22 : f32 to vector<1x128xf32>
    %20 = arith.maximumf %18, %19 : vector<1x128xf32>
    %cst_23 = arith.constant 9.99999974E-6 : f32
    %21 = vector.broadcast %cst_23 : f32 to vector<1x128xf32>
    %22 = arith.addf %20, %21 : vector<1x128xf32>
    %23 = math.rsqrt %22 : vector<1x128xf32>
    %c0_i32_24 = arith.constant 0 : i32
    %c32_i32_25 = arith.constant 32 : i32
    %24 = arith.addi %c0_i32_24, %c32_i32_25 : i32
    %c1_i32_26 = arith.constant 1 : i32
    scf.for %arg13 = %c0_i32_24 to %24 step %c1_i32_26  : i32 {
      %c1_i32_85 = arith.constant 1 : i32
      %95 = arith.addi %c1_i32_85, %arg13 : i32
      %96 = arith.index_cast %95 : i32 to index
      %c8_86 = arith.constant 8 : index
      %c0_87 = arith.constant 0 : index
      %97 = vector.load %arg8[%96, %c8_86, %c0_87] : memref<33x40x128xf32, #tpu.memory_space<vmem>>, vector<1x32x128xf32>
      %98 = vector.shape_cast %97 : vector<1x32x128xf32> to vector<32x128xf32>
      %99 = vector.broadcast %14 : vector<1x128xf32> to vector<32x128xf32>
      %100 = arith.subf %98, %99 : vector<32x128xf32>
      %101 = vector.broadcast %23 : vector<1x128xf32> to vector<32x128xf32>
      %102 = arith.mulf %100, %101 : vector<32x128xf32>
      %cst_88 = arith.constant 0.000000e+00 : f32
      %103 = vector.broadcast %cst_88 : f32 to vector<32x128xf32>
      %104 = arith.maximumf %102, %103 : vector<32x128xf32>
      %c1_i32_89 = arith.constant 1 : i32
      %105 = arith.addi %c1_i32_89, %arg13 : i32
      %106 = arith.index_cast %105 : i32 to index
      %c8_90 = arith.constant 8 : index
      %c0_91 = arith.constant 0 : index
      %107 = vector.load %arg8[%106, %c8_90, %c0_91] : memref<33x40x128xf32, #tpu.memory_space<vmem>>, vector<1x32x128xf32>
      %108 = vector.shape_cast %107 : vector<1x32x128xf32> to vector<32x128xf32>
      %109 = vector.shape_cast %104 : vector<32x128xf32> to vector<1x32x128xf32>
      tpu.vector_store %arg8[%106, %c8_90, %c0_91], %109 {strides = array<i32>} : memref<33x40x128xf32, #tpu.memory_space<vmem>>, vector<1x32x128xf32>,
    }
    %c32_i32_27 = arith.constant 32 : i32
    %cst_28 = arith.constant 0.000000e+00 : f32
    %25 = vector.broadcast %cst_28 : f32 to vector<1x128xf32>
    %c0_i32_29 = arith.constant 0 : i32
    %c16_i32 = arith.constant 16 : i32
    %26 = arith.addi %c0_i32_29, %c16_i32 : i32
    %c1_i32_30 = arith.constant 1 : i32
    %27:2 = scf.for %arg13 = %c0_i32_29 to %26 step %c1_i32_30 iter_args(%arg14 = %25, %arg15 = %25) -> (vector<1x128xf32>, vector<1x128xf32>)  : i32 {
      %cst_85 = arith.constant 0.000000e+00 : f32
      %95 = vector.broadcast %cst_85 : f32 to vector<16x128xf32>
      %c2_i32_86 = arith.constant 2 : i32
      %96 = arith.muli %c2_i32_86, %arg13 : i32
      %c0_i32_87 = arith.constant 0 : i32
      %97 = arith.addi %96, %c0_i32_87 : i32
      %98 = arith.index_cast %97 : i32 to index
      %c7 = arith.constant 7 : index
      %c0_88 = arith.constant 0 : index
      %99 = tpu.strided_load %arg8[%98, %c7, %c0_88] {strides = array<i32: 1, 2, 1>} : memref<33x40x128xf32, #tpu.memory_space<vmem>>, vector<1x16x128xf32>
      %100 = vector.shape_cast %99 : vector<1x16x128xf32> to vector<16x128xf32>
      %101 = arith.truncf %100 : vector<16x128xf32> to vector<16x128xbf16>
      %c0_89 = arith.constant 0 : index
      %c0_90 = arith.constant 0 : index
      %c0_91 = arith.constant 0 : index
      %102 = vector.load %arg3[%c0_89, %c0_90, %c0_91] : memref<9x128x128xbf16, #tpu.memory_space<vmem>>, vector<1x128x128xbf16>
      %103 = vector.shape_cast %102 : vector<1x128x128xbf16> to vector<128x128xbf16>
      %cst_92 = arith.constant dense<0.000000e+00> : vector<16x128xf32>
      %104 = tpu.matmul %101, %103, %cst_92 {dimension_numbers = #tpu.dot_dimension_numbers<[1], [0], [0], [1], [0, 0, 1, 1], [], []>} : vector<16x128xbf16>, vector<128x128xbf16>, vector<16x128xf32> -> vector<16x128xf32>
      %105 = arith.addf %95, %104 : vector<16x128xf32>
      %106 = arith.index_cast %97 : i32 to index
      %c8_93 = arith.constant 8 : index
      %c0_94 = arith.constant 0 : index
      %107 = tpu.strided_load %arg8[%106, %c8_93, %c0_94] {strides = array<i32: 1, 2, 1>} : memref<33x40x128xf32, #tpu.memory_space<vmem>>, vector<1x16x128xf32>
      %108 = vector.shape_cast %107 : vector<1x16x128xf32> to vector<16x128xf32>
      %109 = arith.truncf %108 : vector<16x128xf32> to vector<16x128xbf16>
      %c1_95 = arith.constant 1 : index
      %c0_96 = arith.constant 0 : index
      %c0_97 = arith.constant 0 : index
      %110 = vector.load %arg3[%c1_95, %c0_96, %c0_97] : memref<9x128x128xbf16, #tpu.memory_space<vmem>>, vector<1x128x128xbf16>
      %111 = vector.shape_cast %110 : vector<1x128x128xbf16> to vector<128x128xbf16>
      %cst_98 = arith.constant dense<0.000000e+00> : vector<16x128xf32>
      %112 = tpu.matmul %109, %111, %cst_98 {dimension_numbers = #tpu.dot_dimension_numbers<[1], [0], [0], [1], [0, 0, 1, 1], [], []>} : vector<16x128xbf16>, vector<128x128xbf16>, vector<16x128xf32> -> vector<16x128xf32>
      %113 = arith.addf %105, %112 : vector<16x128xf32>
      %114 = arith.index_cast %97 : i32 to index
      %c9 = arith.constant 9 : index
      %c0_99 = arith.constant 0 : index
      %115 = tpu.strided_load %arg8[%114, %c9, %c0_99] {strides = array<i32: 1, 2, 1>} : memref<33x40x128xf32, #tpu.memory_space<vmem>>, vector<1x16x128xf32>
      %116 = vector.shape_cast %115 : vector<1x16x128xf32> to vector<16x128xf32>
      %117 = arith.truncf %116 : vector<16x128xf32> to vector<16x128xbf16>
      %c2_100 = arith.constant 2 : index
      %c0_101 = arith.constant 0 : index
      %c0_102 = arith.constant 0 : index
      %118 = vector.load %arg3[%c2_100, %c0_101, %c0_102] : memref<9x128x128xbf16, #tpu.memory_space<vmem>>, vector<1x128x128xbf16>
      %119 = vector.shape_cast %118 : vector<1x128x128xbf16> to vector<128x128xbf16>
      %cst_103 = arith.constant dense<0.000000e+00> : vector<16x128xf32>
      %120 = tpu.matmul %117, %119, %cst_103 {dimension_numbers = #tpu.dot_dimension_numbers<[1], [0], [0], [1], [0, 0, 1, 1], [], []>} : vector<16x128xbf16>, vector<128x128xbf16>, vector<16x128xf32> -> vector<16x128xf32>
      %121 = arith.addf %113, %120 : vector<16x128xf32>
      %c2_i32_104 = arith.constant 2 : i32
      %122 = arith.muli %c2_i32_104, %arg13 : i32
      %c1_i32_105 = arith.constant 1 : i32
      %123 = arith.addi %122, %c1_i32_105 : i32
      %124 = arith.index_cast %123 : i32 to index
      %c7_106 = arith.constant 7 : index
      %c0_107 = arith.constant 0 : index
      %125 = tpu.strided_load %arg8[%124, %c7_106, %c0_107] {strides = array<i32: 1, 2, 1>} : memref<33x40x128xf32, #tpu.memory_space<vmem>>, vector<1x16x128xf32>
      %126 = vector.shape_cast %125 : vector<1x16x128xf32> to vector<16x128xf32>
      %127 = arith.truncf %126 : vector<16x128xf32> to vector<16x128xbf16>
      %c3 = arith.constant 3 : index
      %c0_108 = arith.constant 0 : index
      %c0_109 = arith.constant 0 : index
      %128 = vector.load %arg3[%c3, %c0_108, %c0_109] : memref<9x128x128xbf16, #tpu.memory_space<vmem>>, vector<1x128x128xbf16>
      %129 = vector.shape_cast %128 : vector<1x128x128xbf16> to vector<128x128xbf16>
      %cst_110 = arith.constant dense<0.000000e+00> : vector<16x128xf32>
      %130 = tpu.matmul %127, %129, %cst_110 {dimension_numbers = #tpu.dot_dimension_numbers<[1], [0], [0], [1], [0, 0, 1, 1], [], []>} : vector<16x128xbf16>, vector<128x128xbf16>, vector<16x128xf32> -> vector<16x128xf32>
      %131 = arith.addf %121, %130 : vector<16x128xf32>
      %132 = arith.index_cast %123 : i32 to index
      %c8_111 = arith.constant 8 : index
      %c0_112 = arith.constant 0 : index
      %133 = tpu.strided_load %arg8[%132, %c8_111, %c0_112] {strides = array<i32: 1, 2, 1>} : memref<33x40x128xf32, #tpu.memory_space<vmem>>, vector<1x16x128xf32>
      %134 = vector.shape_cast %133 : vector<1x16x128xf32> to vector<16x128xf32>
      %135 = arith.truncf %134 : vector<16x128xf32> to vector<16x128xbf16>
      %c4 = arith.constant 4 : index
      %c0_113 = arith.constant 0 : index
      %c0_114 = arith.constant 0 : index
      %136 = vector.load %arg3[%c4, %c0_113, %c0_114] : memref<9x128x128xbf16, #tpu.memory_space<vmem>>, vector<1x128x128xbf16>
      %137 = vector.shape_cast %136 : vector<1x128x128xbf16> to vector<128x128xbf16>
      %cst_115 = arith.constant dense<0.000000e+00> : vector<16x128xf32>
      %138 = tpu.matmul %135, %137, %cst_115 {dimension_numbers = #tpu.dot_dimension_numbers<[1], [0], [0], [1], [0, 0, 1, 1], [], []>} : vector<16x128xbf16>, vector<128x128xbf16>, vector<16x128xf32> -> vector<16x128xf32>
      %139 = arith.addf %131, %138 : vector<16x128xf32>
      %140 = arith.index_cast %123 : i32 to index
      %c9_116 = arith.constant 9 : index
      %c0_117 = arith.constant 0 : index
      %141 = tpu.strided_load %arg8[%140, %c9_116, %c0_117] {strides = array<i32: 1, 2, 1>} : memref<33x40x128xf32, #tpu.memory_space<vmem>>, vector<1x16x128xf32>
      %142 = vector.shape_cast %141 : vector<1x16x128xf32> to vector<16x128xf32>
      %143 = arith.truncf %142 : vector<16x128xf32> to vector<16x128xbf16>
      %c5 = arith.constant 5 : index
      %c0_118 = arith.constant 0 : index
      %c0_119 = arith.constant 0 : index
      %144 = vector.load %arg3[%c5, %c0_118, %c0_119] : memref<9x128x128xbf16, #tpu.memory_space<vmem>>, vector<1x128x128xbf16>
      %145 = vector.shape_cast %144 : vector<1x128x128xbf16> to vector<128x128xbf16>
      %cst_120 = arith.constant dense<0.000000e+00> : vector<16x128xf32>
      %146 = tpu.matmul %143, %145, %cst_120 {dimension_numbers = #tpu.dot_dimension_numbers<[1], [0], [0], [1], [0, 0, 1, 1], [], []>} : vector<16x128xbf16>, vector<128x128xbf16>, vector<16x128xf32> -> vector<16x128xf32>
      %147 = arith.addf %139, %146 : vector<16x128xf32>
      %c2_i32_121 = arith.constant 2 : i32
      %148 = arith.muli %c2_i32_121, %arg13 : i32
      %c2_i32_122 = arith.constant 2 : i32
      %149 = arith.addi %148, %c2_i32_122 : i32
      %150 = arith.index_cast %149 : i32 to index
      %c7_123 = arith.constant 7 : index
      %c0_124 = arith.constant 0 : index
      %151 = tpu.strided_load %arg8[%150, %c7_123, %c0_124] {strides = array<i32: 1, 2, 1>} : memref<33x40x128xf32, #tpu.memory_space<vmem>>, vector<1x16x128xf32>
      %152 = vector.shape_cast %151 : vector<1x16x128xf32> to vector<16x128xf32>
      %153 = arith.truncf %152 : vector<16x128xf32> to vector<16x128xbf16>
      %c6 = arith.constant 6 : index
      %c0_125 = arith.constant 0 : index
      %c0_126 = arith.constant 0 : index
      %154 = vector.load %arg3[%c6, %c0_125, %c0_126] : memref<9x128x128xbf16, #tpu.memory_space<vmem>>, vector<1x128x128xbf16>
      %155 = vector.shape_cast %154 : vector<1x128x128xbf16> to vector<128x128xbf16>
      %cst_127 = arith.constant dense<0.000000e+00> : vector<16x128xf32>
      %156 = tpu.matmul %153, %155, %cst_127 {dimension_numbers = #tpu.dot_dimension_numbers<[1], [0], [0], [1], [0, 0, 1, 1], [], []>} : vector<16x128xbf16>, vector<128x128xbf16>, vector<16x128xf32> -> vector<16x128xf32>
      %157 = arith.addf %147, %156 : vector<16x128xf32>
      %158 = arith.index_cast %149 : i32 to index
      %c8_128 = arith.constant 8 : index
      %c0_129 = arith.constant 0 : index
      %159 = tpu.strided_load %arg8[%158, %c8_128, %c0_129] {strides = array<i32: 1, 2, 1>} : memref<33x40x128xf32, #tpu.memory_space<vmem>>, vector<1x16x128xf32>
      %160 = vector.shape_cast %159 : vector<1x16x128xf32> to vector<16x128xf32>
      %161 = arith.truncf %160 : vector<16x128xf32> to vector<16x128xbf16>
      %c7_130 = arith.constant 7 : index
      %c0_131 = arith.constant 0 : index
      %c0_132 = arith.constant 0 : index
      %162 = vector.load %arg3[%c7_130, %c0_131, %c0_132] : memref<9x128x128xbf16, #tpu.memory_space<vmem>>, vector<1x128x128xbf16>
      %163 = vector.shape_cast %162 : vector<1x128x128xbf16> to vector<128x128xbf16>
      %cst_133 = arith.constant dense<0.000000e+00> : vector<16x128xf32>
      %164 = tpu.matmul %161, %163, %cst_133 {dimension_numbers = #tpu.dot_dimension_numbers<[1], [0], [0], [1], [0, 0, 1, 1], [], []>} : vector<16x128xbf16>, vector<128x128xbf16>, vector<16x128xf32> -> vector<16x128xf32>
      %165 = arith.addf %157, %164 : vector<16x128xf32>
      %166 = arith.index_cast %149 : i32 to index
      %c9_134 = arith.constant 9 : index
      %c0_135 = arith.constant 0 : index
      %167 = tpu.strided_load %arg8[%166, %c9_134, %c0_135] {strides = array<i32: 1, 2, 1>} : memref<33x40x128xf32, #tpu.memory_space<vmem>>, vector<1x16x128xf32>
      %168 = vector.shape_cast %167 : vector<1x16x128xf32> to vector<16x128xf32>
      %169 = arith.truncf %168 : vector<16x128xf32> to vector<16x128xbf16>
      %c8_136 = arith.constant 8 : index
      %c0_137 = arith.constant 0 : index
      %c0_138 = arith.constant 0 : index
      %170 = vector.load %arg3[%c8_136, %c0_137, %c0_138] : memref<9x128x128xbf16, #tpu.memory_space<vmem>>, vector<1x128x128xbf16>
      %171 = vector.shape_cast %170 : vector<1x128x128xbf16> to vector<128x128xbf16>
      %cst_139 = arith.constant dense<0.000000e+00> : vector<16x128xf32>
      %172 = tpu.matmul %169, %171, %cst_139 {dimension_numbers = #tpu.dot_dimension_numbers<[1], [0], [0], [1], [0, 0, 1, 1], [], []>} : vector<16x128xbf16>, vector<128x128xbf16>, vector<16x128xf32> -> vector<16x128xf32>
      %173 = arith.addf %165, %172 : vector<16x128xf32>
      %c1_i32_140 = arith.constant 1 : i32
      %174 = arith.addi %c1_i32_140, %arg13 : i32
      %175 = arith.index_cast %174 : i32 to index
      %c8_141 = arith.constant 8 : index
      %c0_142 = arith.constant 0 : index
      %176 = vector.load %arg9[%175, %c8_141, %c0_142] : memref<17x24x128xf32, #tpu.memory_space<vmem>>, vector<1x16x128xf32>
      %177 = vector.shape_cast %176 : vector<1x16x128xf32> to vector<16x128xf32>
      %178 = vector.shape_cast %173 : vector<16x128xf32> to vector<1x16x128xf32>
      tpu.vector_store %arg9[%175, %c8_141, %c0_142], %178 {strides = array<i32>} : memref<17x24x128xf32, #tpu.memory_space<vmem>>, vector<1x16x128xf32>,
      %cst_143 = arith.constant dense<0.000000e+00> : vector<128xf32>
      %179 = vector.multi_reduction <add>, %173, %cst_143 [0] : vector<16x128xf32> to vector<128xf32>
      %180 = vector.shape_cast %179 : vector<128xf32> to vector<1x128xf32>
      %181 = arith.addf %arg14, %180 : vector<1x128xf32>
      %182 = arith.mulf %173, %173 : vector<16x128xf32>
      %cst_144 = arith.constant dense<0.000000e+00> : vector<128xf32>
      %183 = vector.multi_reduction <add>, %182, %cst_144 [0] : vector<16x128xf32> to vector<128xf32>
      %184 = vector.shape_cast %183 : vector<128xf32> to vector<1x128xf32>
      %185 = arith.addf %arg15, %184 : vector<1x128xf32>
      scf.yield %181, %185 : vector<1x128xf32>, vector<1x128xf32>
    }
    %c16_i32_31 = arith.constant 16 : i32
    %cst_32 = arith.constant 3.906250e-03 : f32
    %28 = vector.broadcast %cst_32 : f32 to vector<1x128xf32>
    %29 = arith.mulf %27#0, %28 : vector<1x128xf32>
    %cst_33 = arith.constant 3.906250e-03 : f32
    %30 = vector.broadcast %cst_33 : f32 to vector<1x128xf32>
    %31 = arith.mulf %27#1, %30 : vector<1x128xf32>
    %32 = arith.mulf %29, %29 : vector<1x128xf32>
    %33 = arith.subf %31, %32 : vector<1x128xf32>
    %cst_34 = arith.constant 0.000000e+00 : f32
    %34 = vector.broadcast %cst_34 : f32 to vector<1x128xf32>
    %35 = arith.maximumf %33, %34 : vector<1x128xf32>
    %cst_35 = arith.constant 9.99999974E-6 : f32
    %36 = vector.broadcast %cst_35 : f32 to vector<1x128xf32>
    %37 = arith.addf %35, %36 : vector<1x128xf32>
    %38 = math.rsqrt %37 : vector<1x128xf32>
    %c0_i32_36 = arith.constant 0 : i32
    %c16_i32_37 = arith.constant 16 : i32
    %39 = arith.addi %c0_i32_36, %c16_i32_37 : i32
    %c1_i32_38 = arith.constant 1 : i32
    scf.for %arg13 = %c0_i32_36 to %39 step %c1_i32_38  : i32 {
      %c1_i32_85 = arith.constant 1 : i32
      %95 = arith.addi %c1_i32_85, %arg13 : i32
      %96 = arith.index_cast %95 : i32 to index
      %c8_86 = arith.constant 8 : index
      %c0_87 = arith.constant 0 : index
      %97 = vector.load %arg9[%96, %c8_86, %c0_87] : memref<17x24x128xf32, #tpu.memory_space<vmem>>, vector<1x16x128xf32>
      %98 = vector.shape_cast %97 : vector<1x16x128xf32> to vector<16x128xf32>
      %99 = vector.broadcast %29 : vector<1x128xf32> to vector<16x128xf32>
      %100 = arith.subf %98, %99 : vector<16x128xf32>
      %101 = vector.broadcast %38 : vector<1x128xf32> to vector<16x128xf32>
      %102 = arith.mulf %100, %101 : vector<16x128xf32>
      %cst_88 = arith.constant 0.000000e+00 : f32
      %103 = vector.broadcast %cst_88 : f32 to vector<16x128xf32>
      %104 = arith.maximumf %102, %103 : vector<16x128xf32>
      %c1_i32_89 = arith.constant 1 : i32
      %105 = arith.addi %c1_i32_89, %arg13 : i32
      %106 = arith.index_cast %105 : i32 to index
      %c8_90 = arith.constant 8 : index
      %c0_91 = arith.constant 0 : index
      %107 = vector.load %arg9[%106, %c8_90, %c0_91] : memref<17x24x128xf32, #tpu.memory_space<vmem>>, vector<1x16x128xf32>
      %108 = vector.shape_cast %107 : vector<1x16x128xf32> to vector<16x128xf32>
      %109 = vector.shape_cast %104 : vector<16x128xf32> to vector<1x16x128xf32>
      tpu.vector_store %arg9[%106, %c8_90, %c0_91], %109 {strides = array<i32>} : memref<17x24x128xf32, #tpu.memory_space<vmem>>, vector<1x16x128xf32>,
    }
    %c16_i32_39 = arith.constant 16 : i32
    %cst_40 = arith.constant 0.000000e+00 : f32
    %40 = vector.broadcast %cst_40 : f32 to vector<1x128xf32>
    %c0_i32_41 = arith.constant 0 : i32
    %c8_i32 = arith.constant 8 : i32
    %41 = arith.addi %c0_i32_41, %c8_i32 : i32
    %c1_i32_42 = arith.constant 1 : i32
    %42:2 = scf.for %arg13 = %c0_i32_41 to %41 step %c1_i32_42 iter_args(%arg14 = %40, %arg15 = %40) -> (vector<1x128xf32>, vector<1x128xf32>)  : i32 {
      %cst_85 = arith.constant 0.000000e+00 : f32
      %95 = vector.broadcast %cst_85 : f32 to vector<8x128xf32>
      %c2_i32_86 = arith.constant 2 : i32
      %96 = arith.muli %c2_i32_86, %arg13 : i32
      %c0_i32_87 = arith.constant 0 : i32
      %97 = arith.addi %96, %c0_i32_87 : i32
      %98 = arith.index_cast %97 : i32 to index
      %c7 = arith.constant 7 : index
      %c0_88 = arith.constant 0 : index
      %99 = tpu.strided_load %arg9[%98, %c7, %c0_88] {strides = array<i32: 1, 2, 1>} : memref<17x24x128xf32, #tpu.memory_space<vmem>>, vector<1x8x128xf32>
      %100 = vector.shape_cast %99 : vector<1x8x128xf32> to vector<8x128xf32>
      %101 = arith.truncf %100 : vector<8x128xf32> to vector<8x128xbf16>
      %c0_89 = arith.constant 0 : index
      %c0_90 = arith.constant 0 : index
      %c0_91 = arith.constant 0 : index
      %102 = vector.load %arg4[%c0_89, %c0_90, %c0_91] : memref<9x128x128xbf16, #tpu.memory_space<vmem>>, vector<1x128x128xbf16>
      %103 = vector.shape_cast %102 : vector<1x128x128xbf16> to vector<128x128xbf16>
      %cst_92 = arith.constant dense<0.000000e+00> : vector<8x128xf32>
      %104 = tpu.matmul %101, %103, %cst_92 {dimension_numbers = #tpu.dot_dimension_numbers<[1], [0], [0], [1], [0, 0, 1, 1], [], []>} : vector<8x128xbf16>, vector<128x128xbf16>, vector<8x128xf32> -> vector<8x128xf32>
      %105 = arith.addf %95, %104 : vector<8x128xf32>
      %106 = arith.index_cast %97 : i32 to index
      %c8_93 = arith.constant 8 : index
      %c0_94 = arith.constant 0 : index
      %107 = tpu.strided_load %arg9[%106, %c8_93, %c0_94] {strides = array<i32: 1, 2, 1>} : memref<17x24x128xf32, #tpu.memory_space<vmem>>, vector<1x8x128xf32>
      %108 = vector.shape_cast %107 : vector<1x8x128xf32> to vector<8x128xf32>
      %109 = arith.truncf %108 : vector<8x128xf32> to vector<8x128xbf16>
      %c1_95 = arith.constant 1 : index
      %c0_96 = arith.constant 0 : index
      %c0_97 = arith.constant 0 : index
      %110 = vector.load %arg4[%c1_95, %c0_96, %c0_97] : memref<9x128x128xbf16, #tpu.memory_space<vmem>>, vector<1x128x128xbf16>
      %111 = vector.shape_cast %110 : vector<1x128x128xbf16> to vector<128x128xbf16>
      %cst_98 = arith.constant dense<0.000000e+00> : vector<8x128xf32>
      %112 = tpu.matmul %109, %111, %cst_98 {dimension_numbers = #tpu.dot_dimension_numbers<[1], [0], [0], [1], [0, 0, 1, 1], [], []>} : vector<8x128xbf16>, vector<128x128xbf16>, vector<8x128xf32> -> vector<8x128xf32>
      %113 = arith.addf %105, %112 : vector<8x128xf32>
      %114 = arith.index_cast %97 : i32 to index
      %c9 = arith.constant 9 : index
      %c0_99 = arith.constant 0 : index
      %115 = tpu.strided_load %arg9[%114, %c9, %c0_99] {strides = array<i32: 1, 2, 1>} : memref<17x24x128xf32, #tpu.memory_space<vmem>>, vector<1x8x128xf32>
      %116 = vector.shape_cast %115 : vector<1x8x128xf32> to vector<8x128xf32>
      %117 = arith.truncf %116 : vector<8x128xf32> to vector<8x128xbf16>
      %c2_100 = arith.constant 2 : index
      %c0_101 = arith.constant 0 : index
      %c0_102 = arith.constant 0 : index
      %118 = vector.load %arg4[%c2_100, %c0_101, %c0_102] : memref<9x128x128xbf16, #tpu.memory_space<vmem>>, vector<1x128x128xbf16>
      %119 = vector.shape_cast %118 : vector<1x128x128xbf16> to vector<128x128xbf16>
      %cst_103 = arith.constant dense<0.000000e+00> : vector<8x128xf32>
      %120 = tpu.matmul %117, %119, %cst_103 {dimension_numbers = #tpu.dot_dimension_numbers<[1], [0], [0], [1], [0, 0, 1, 1], [], []>} : vector<8x128xbf16>, vector<128x128xbf16>, vector<8x128xf32> -> vector<8x128xf32>
      %121 = arith.addf %113, %120 : vector<8x128xf32>
      %c2_i32_104 = arith.constant 2 : i32
      %122 = arith.muli %c2_i32_104, %arg13 : i32
      %c1_i32_105 = arith.constant 1 : i32
      %123 = arith.addi %122, %c1_i32_105 : i32
      %124 = arith.index_cast %123 : i32 to index
      %c7_106 = arith.constant 7 : index
      %c0_107 = arith.constant 0 : index
      %125 = tpu.strided_load %arg9[%124, %c7_106, %c0_107] {strides = array<i32: 1, 2, 1>} : memref<17x24x128xf32, #tpu.memory_space<vmem>>, vector<1x8x128xf32>
      %126 = vector.shape_cast %125 : vector<1x8x128xf32> to vector<8x128xf32>
      %127 = arith.truncf %126 : vector<8x128xf32> to vector<8x128xbf16>
      %c3 = arith.constant 3 : index
      %c0_108 = arith.constant 0 : index
      %c0_109 = arith.constant 0 : index
      %128 = vector.load %arg4[%c3, %c0_108, %c0_109] : memref<9x128x128xbf16, #tpu.memory_space<vmem>>, vector<1x128x128xbf16>
      %129 = vector.shape_cast %128 : vector<1x128x128xbf16> to vector<128x128xbf16>
      %cst_110 = arith.constant dense<0.000000e+00> : vector<8x128xf32>
      %130 = tpu.matmul %127, %129, %cst_110 {dimension_numbers = #tpu.dot_dimension_numbers<[1], [0], [0], [1], [0, 0, 1, 1], [], []>} : vector<8x128xbf16>, vector<128x128xbf16>, vector<8x128xf32> -> vector<8x128xf32>
      %131 = arith.addf %121, %130 : vector<8x128xf32>
      %132 = arith.index_cast %123 : i32 to index
      %c8_111 = arith.constant 8 : index
      %c0_112 = arith.constant 0 : index
      %133 = tpu.strided_load %arg9[%132, %c8_111, %c0_112] {strides = array<i32: 1, 2, 1>} : memref<17x24x128xf32, #tpu.memory_space<vmem>>, vector<1x8x128xf32>
      %134 = vector.shape_cast %133 : vector<1x8x128xf32> to vector<8x128xf32>
      %135 = arith.truncf %134 : vector<8x128xf32> to vector<8x128xbf16>
      %c4 = arith.constant 4 : index
      %c0_113 = arith.constant 0 : index
      %c0_114 = arith.constant 0 : index
      %136 = vector.load %arg4[%c4, %c0_113, %c0_114] : memref<9x128x128xbf16, #tpu.memory_space<vmem>>, vector<1x128x128xbf16>
      %137 = vector.shape_cast %136 : vector<1x128x128xbf16> to vector<128x128xbf16>
      %cst_115 = arith.constant dense<0.000000e+00> : vector<8x128xf32>
      %138 = tpu.matmul %135, %137, %cst_115 {dimension_numbers = #tpu.dot_dimension_numbers<[1], [0], [0], [1], [0, 0, 1, 1], [], []>} : vector<8x128xbf16>, vector<128x128xbf16>, vector<8x128xf32> -> vector<8x128xf32>
      %139 = arith.addf %131, %138 : vector<8x128xf32>
      %140 = arith.index_cast %123 : i32 to index
      %c9_116 = arith.constant 9 : index
      %c0_117 = arith.constant 0 : index
      %141 = tpu.strided_load %arg9[%140, %c9_116, %c0_117] {strides = array<i32: 1, 2, 1>} : memref<17x24x128xf32, #tpu.memory_space<vmem>>, vector<1x8x128xf32>
      %142 = vector.shape_cast %141 : vector<1x8x128xf32> to vector<8x128xf32>
      %143 = arith.truncf %142 : vector<8x128xf32> to vector<8x128xbf16>
      %c5 = arith.constant 5 : index
      %c0_118 = arith.constant 0 : index
      %c0_119 = arith.constant 0 : index
      %144 = vector.load %arg4[%c5, %c0_118, %c0_119] : memref<9x128x128xbf16, #tpu.memory_space<vmem>>, vector<1x128x128xbf16>
      %145 = vector.shape_cast %144 : vector<1x128x128xbf16> to vector<128x128xbf16>
      %cst_120 = arith.constant dense<0.000000e+00> : vector<8x128xf32>
      %146 = tpu.matmul %143, %145, %cst_120 {dimension_numbers = #tpu.dot_dimension_numbers<[1], [0], [0], [1], [0, 0, 1, 1], [], []>} : vector<8x128xbf16>, vector<128x128xbf16>, vector<8x128xf32> -> vector<8x128xf32>
      %147 = arith.addf %139, %146 : vector<8x128xf32>
      %c2_i32_121 = arith.constant 2 : i32
      %148 = arith.muli %c2_i32_121, %arg13 : i32
      %c2_i32_122 = arith.constant 2 : i32
      %149 = arith.addi %148, %c2_i32_122 : i32
      %150 = arith.index_cast %149 : i32 to index
      %c7_123 = arith.constant 7 : index
      %c0_124 = arith.constant 0 : index
      %151 = tpu.strided_load %arg9[%150, %c7_123, %c0_124] {strides = array<i32: 1, 2, 1>} : memref<17x24x128xf32, #tpu.memory_space<vmem>>, vector<1x8x128xf32>
      %152 = vector.shape_cast %151 : vector<1x8x128xf32> to vector<8x128xf32>
      %153 = arith.truncf %152 : vector<8x128xf32> to vector<8x128xbf16>
      %c6 = arith.constant 6 : index
      %c0_125 = arith.constant 0 : index
      %c0_126 = arith.constant 0 : index
      %154 = vector.load %arg4[%c6, %c0_125, %c0_126] : memref<9x128x128xbf16, #tpu.memory_space<vmem>>, vector<1x128x128xbf16>
      %155 = vector.shape_cast %154 : vector<1x128x128xbf16> to vector<128x128xbf16>
      %cst_127 = arith.constant dense<0.000000e+00> : vector<8x128xf32>
      %156 = tpu.matmul %153, %155, %cst_127 {dimension_numbers = #tpu.dot_dimension_numbers<[1], [0], [0], [1], [0, 0, 1, 1], [], []>} : vector<8x128xbf16>, vector<128x128xbf16>, vector<8x128xf32> -> vector<8x128xf32>
      %157 = arith.addf %147, %156 : vector<8x128xf32>
      %158 = arith.index_cast %149 : i32 to index
      %c8_128 = arith.constant 8 : index
      %c0_129 = arith.constant 0 : index
      %159 = tpu.strided_load %arg9[%158, %c8_128, %c0_129] {strides = array<i32: 1, 2, 1>} : memref<17x24x128xf32, #tpu.memory_space<vmem>>, vector<1x8x128xf32>
      %160 = vector.shape_cast %159 : vector<1x8x128xf32> to vector<8x128xf32>
      %161 = arith.truncf %160 : vector<8x128xf32> to vector<8x128xbf16>
      %c7_130 = arith.constant 7 : index
      %c0_131 = arith.constant 0 : index
      %c0_132 = arith.constant 0 : index
      %162 = vector.load %arg4[%c7_130, %c0_131, %c0_132] : memref<9x128x128xbf16, #tpu.memory_space<vmem>>, vector<1x128x128xbf16>
      %163 = vector.shape_cast %162 : vector<1x128x128xbf16> to vector<128x128xbf16>
      %cst_133 = arith.constant dense<0.000000e+00> : vector<8x128xf32>
      %164 = tpu.matmul %161, %163, %cst_133 {dimension_numbers = #tpu.dot_dimension_numbers<[1], [0], [0], [1], [0, 0, 1, 1], [], []>} : vector<8x128xbf16>, vector<128x128xbf16>, vector<8x128xf32> -> vector<8x128xf32>
      %165 = arith.addf %157, %164 : vector<8x128xf32>
      %166 = arith.index_cast %149 : i32 to index
      %c9_134 = arith.constant 9 : index
      %c0_135 = arith.constant 0 : index
      %167 = tpu.strided_load %arg9[%166, %c9_134, %c0_135] {strides = array<i32: 1, 2, 1>} : memref<17x24x128xf32, #tpu.memory_space<vmem>>, vector<1x8x128xf32>
      %168 = vector.shape_cast %167 : vector<1x8x128xf32> to vector<8x128xf32>
      %169 = arith.truncf %168 : vector<8x128xf32> to vector<8x128xbf16>
      %c8_136 = arith.constant 8 : index
      %c0_137 = arith.constant 0 : index
      %c0_138 = arith.constant 0 : index
      %170 = vector.load %arg4[%c8_136, %c0_137, %c0_138] : memref<9x128x128xbf16, #tpu.memory_space<vmem>>, vector<1x128x128xbf16>
      %171 = vector.shape_cast %170 : vector<1x128x128xbf16> to vector<128x128xbf16>
      %cst_139 = arith.constant dense<0.000000e+00> : vector<8x128xf32>
      %172 = tpu.matmul %169, %171, %cst_139 {dimension_numbers = #tpu.dot_dimension_numbers<[1], [0], [0], [1], [0, 0, 1, 1], [], []>} : vector<8x128xbf16>, vector<128x128xbf16>, vector<8x128xf32> -> vector<8x128xf32>
      %173 = arith.addf %165, %172 : vector<8x128xf32>
      %c1_i32_140 = arith.constant 1 : i32
      %174 = arith.addi %c1_i32_140, %arg13 : i32
      %175 = arith.index_cast %174 : i32 to index
      %c8_141 = arith.constant 8 : index
      %c0_142 = arith.constant 0 : index
      %176 = vector.load %arg10[%175, %c8_141, %c0_142] : memref<9x16x128xf32, #tpu.memory_space<vmem>>, vector<1x8x128xf32>
      %177 = vector.shape_cast %176 : vector<1x8x128xf32> to vector<8x128xf32>
      %178 = vector.shape_cast %173 : vector<8x128xf32> to vector<1x8x128xf32>
      tpu.vector_store %arg10[%175, %c8_141, %c0_142], %178 {strides = array<i32>} : memref<9x16x128xf32, #tpu.memory_space<vmem>>, vector<1x8x128xf32>,
      %cst_143 = arith.constant dense<0.000000e+00> : vector<128xf32>
      %179 = vector.multi_reduction <add>, %173, %cst_143 [0] : vector<8x128xf32> to vector<128xf32>
      %180 = vector.shape_cast %179 : vector<128xf32> to vector<1x128xf32>
      %181 = arith.addf %arg14, %180 : vector<1x128xf32>
      %182 = arith.mulf %173, %173 : vector<8x128xf32>
      %cst_144 = arith.constant dense<0.000000e+00> : vector<128xf32>
      %183 = vector.multi_reduction <add>, %182, %cst_144 [0] : vector<8x128xf32> to vector<128xf32>
      %184 = vector.shape_cast %183 : vector<128xf32> to vector<1x128xf32>
      %185 = arith.addf %arg15, %184 : vector<1x128xf32>
      scf.yield %181, %185 : vector<1x128xf32>, vector<1x128xf32>
    }
    %c8_i32_43 = arith.constant 8 : i32
    %cst_44 = arith.constant 1.562500e-02 : f32
    %43 = vector.broadcast %cst_44 : f32 to vector<1x128xf32>
    %44 = arith.mulf %42#0, %43 : vector<1x128xf32>
    %cst_45 = arith.constant 1.562500e-02 : f32
    %45 = vector.broadcast %cst_45 : f32 to vector<1x128xf32>
    %46 = arith.mulf %42#1, %45 : vector<1x128xf32>
    %47 = arith.mulf %44, %44 : vector<1x128xf32>
    %48 = arith.subf %46, %47 : vector<1x128xf32>
    %cst_46 = arith.constant 0.000000e+00 : f32
    %49 = vector.broadcast %cst_46 : f32 to vector<1x128xf32>
    %50 = arith.maximumf %48, %49 : vector<1x128xf32>
    %cst_47 = arith.constant 9.99999974E-6 : f32
    %51 = vector.broadcast %cst_47 : f32 to vector<1x128xf32>
    %52 = arith.addf %50, %51 : vector<1x128xf32>
    %53 = math.rsqrt %52 : vector<1x128xf32>
    %c0_i32_48 = arith.constant 0 : i32
    %c8_i32_49 = arith.constant 8 : i32
    %54 = arith.addi %c0_i32_48, %c8_i32_49 : i32
    %c1_i32_50 = arith.constant 1 : i32
    scf.for %arg13 = %c0_i32_48 to %54 step %c1_i32_50  : i32 {
      %c1_i32_85 = arith.constant 1 : i32
      %95 = arith.addi %c1_i32_85, %arg13 : i32
      %96 = arith.index_cast %95 : i32 to index
      %c8_86 = arith.constant 8 : index
      %c0_87 = arith.constant 0 : index
      %97 = vector.load %arg10[%96, %c8_86, %c0_87] : memref<9x16x128xf32, #tpu.memory_space<vmem>>, vector<1x8x128xf32>
      %98 = vector.shape_cast %97 : vector<1x8x128xf32> to vector<8x128xf32>
      %99 = vector.broadcast %44 : vector<1x128xf32> to vector<8x128xf32>
      %100 = arith.subf %98, %99 : vector<8x128xf32>
      %101 = vector.broadcast %53 : vector<1x128xf32> to vector<8x128xf32>
      %102 = arith.mulf %100, %101 : vector<8x128xf32>
      %cst_88 = arith.constant 0.000000e+00 : f32
      %103 = vector.broadcast %cst_88 : f32 to vector<8x128xf32>
      %104 = arith.maximumf %102, %103 : vector<8x128xf32>
      %c1_i32_89 = arith.constant 1 : i32
      %105 = arith.addi %c1_i32_89, %arg13 : i32
      %106 = arith.index_cast %105 : i32 to index
      %c8_90 = arith.constant 8 : index
      %c0_91 = arith.constant 0 : index
      %107 = vector.load %arg10[%106, %c8_90, %c0_91] : memref<9x16x128xf32, #tpu.memory_space<vmem>>, vector<1x8x128xf32>
      %108 = vector.shape_cast %107 : vector<1x8x128xf32> to vector<8x128xf32>
      %109 = vector.shape_cast %104 : vector<8x128xf32> to vector<1x8x128xf32>
      tpu.vector_store %arg10[%106, %c8_90, %c0_91], %109 {strides = array<i32>} : memref<9x16x128xf32, #tpu.memory_space<vmem>>, vector<1x8x128xf32>,
    }
    %c8_i32_51 = arith.constant 8 : i32
    %cst_52 = arith.constant 0.000000e+00 : f32
    %55 = vector.broadcast %cst_52 : f32 to vector<1x128xf32>
    %c0_i32_53 = arith.constant 0 : i32
    %c4_i32 = arith.constant 4 : i32
    %56 = arith.addi %c0_i32_53, %c4_i32 : i32
    %c1_i32_54 = arith.constant 1 : i32
    %57:2 = scf.for %arg13 = %c0_i32_53 to %56 step %c1_i32_54 iter_args(%arg14 = %55, %arg15 = %55) -> (vector<1x128xf32>, vector<1x128xf32>)  : i32 {
      %cst_85 = arith.constant 0.000000e+00 : f32
      %95 = vector.broadcast %cst_85 : f32 to vector<4x128xf32>
      %c2_i32_86 = arith.constant 2 : i32
      %96 = arith.muli %c2_i32_86, %arg13 : i32
      %c0_i32_87 = arith.constant 0 : i32
      %97 = arith.addi %96, %c0_i32_87 : i32
      %98 = arith.index_cast %97 : i32 to index
      %c7 = arith.constant 7 : index
      %c0_88 = arith.constant 0 : index
      %99 = tpu.strided_load %arg10[%98, %c7, %c0_88] {strides = array<i32: 1, 2, 1>} : memref<9x16x128xf32, #tpu.memory_space<vmem>>, vector<1x4x128xf32>
      %100 = vector.shape_cast %99 : vector<1x4x128xf32> to vector<4x128xf32>
      %101 = arith.truncf %100 : vector<4x128xf32> to vector<4x128xbf16>
      %c0_89 = arith.constant 0 : index
      %c0_90 = arith.constant 0 : index
      %c0_91 = arith.constant 0 : index
      %102 = vector.load %arg5[%c0_89, %c0_90, %c0_91] : memref<9x128x128xbf16, #tpu.memory_space<vmem>>, vector<1x128x128xbf16>
      %103 = vector.shape_cast %102 : vector<1x128x128xbf16> to vector<128x128xbf16>
      %cst_92 = arith.constant dense<0.000000e+00> : vector<4x128xf32>
      %104 = tpu.matmul %101, %103, %cst_92 {dimension_numbers = #tpu.dot_dimension_numbers<[1], [0], [0], [1], [0, 0, 1, 1], [], []>} : vector<4x128xbf16>, vector<128x128xbf16>, vector<4x128xf32> -> vector<4x128xf32>
      %105 = arith.addf %95, %104 : vector<4x128xf32>
      %106 = arith.index_cast %97 : i32 to index
      %c8_93 = arith.constant 8 : index
      %c0_94 = arith.constant 0 : index
      %107 = tpu.strided_load %arg10[%106, %c8_93, %c0_94] {strides = array<i32: 1, 2, 1>} : memref<9x16x128xf32, #tpu.memory_space<vmem>>, vector<1x4x128xf32>
      %108 = vector.shape_cast %107 : vector<1x4x128xf32> to vector<4x128xf32>
      %109 = arith.truncf %108 : vector<4x128xf32> to vector<4x128xbf16>
      %c1_95 = arith.constant 1 : index
      %c0_96 = arith.constant 0 : index
      %c0_97 = arith.constant 0 : index
      %110 = vector.load %arg5[%c1_95, %c0_96, %c0_97] : memref<9x128x128xbf16, #tpu.memory_space<vmem>>, vector<1x128x128xbf16>
      %111 = vector.shape_cast %110 : vector<1x128x128xbf16> to vector<128x128xbf16>
      %cst_98 = arith.constant dense<0.000000e+00> : vector<4x128xf32>
      %112 = tpu.matmul %109, %111, %cst_98 {dimension_numbers = #tpu.dot_dimension_numbers<[1], [0], [0], [1], [0, 0, 1, 1], [], []>} : vector<4x128xbf16>, vector<128x128xbf16>, vector<4x128xf32> -> vector<4x128xf32>
      %113 = arith.addf %105, %112 : vector<4x128xf32>
      %114 = arith.index_cast %97 : i32 to index
      %c9 = arith.constant 9 : index
      %c0_99 = arith.constant 0 : index
      %115 = tpu.strided_load %arg10[%114, %c9, %c0_99] {strides = array<i32: 1, 2, 1>} : memref<9x16x128xf32, #tpu.memory_space<vmem>>, vector<1x4x128xf32>
      %116 = vector.shape_cast %115 : vector<1x4x128xf32> to vector<4x128xf32>
      %117 = arith.truncf %116 : vector<4x128xf32> to vector<4x128xbf16>
      %c2_100 = arith.constant 2 : index
      %c0_101 = arith.constant 0 : index
      %c0_102 = arith.constant 0 : index
      %118 = vector.load %arg5[%c2_100, %c0_101, %c0_102] : memref<9x128x128xbf16, #tpu.memory_space<vmem>>, vector<1x128x128xbf16>
      %119 = vector.shape_cast %118 : vector<1x128x128xbf16> to vector<128x128xbf16>
      %cst_103 = arith.constant dense<0.000000e+00> : vector<4x128xf32>
      %120 = tpu.matmul %117, %119, %cst_103 {dimension_numbers = #tpu.dot_dimension_numbers<[1], [0], [0], [1], [0, 0, 1, 1], [], []>} : vector<4x128xbf16>, vector<128x128xbf16>, vector<4x128xf32> -> vector<4x128xf32>
      %121 = arith.addf %113, %120 : vector<4x128xf32>
      %c2_i32_104 = arith.constant 2 : i32
      %122 = arith.muli %c2_i32_104, %arg13 : i32
      %c1_i32_105 = arith.constant 1 : i32
      %123 = arith.addi %122, %c1_i32_105 : i32
      %124 = arith.index_cast %123 : i32 to index
      %c7_106 = arith.constant 7 : index
      %c0_107 = arith.constant 0 : index
      %125 = tpu.strided_load %arg10[%124, %c7_106, %c0_107] {strides = array<i32: 1, 2, 1>} : memref<9x16x128xf32, #tpu.memory_space<vmem>>, vector<1x4x128xf32>
      %126 = vector.shape_cast %125 : vector<1x4x128xf32> to vector<4x128xf32>
      %127 = arith.truncf %126 : vector<4x128xf32> to vector<4x128xbf16>
      %c3 = arith.constant 3 : index
      %c0_108 = arith.constant 0 : index
      %c0_109 = arith.constant 0 : index
      %128 = vector.load %arg5[%c3, %c0_108, %c0_109] : memref<9x128x128xbf16, #tpu.memory_space<vmem>>, vector<1x128x128xbf16>
      %129 = vector.shape_cast %128 : vector<1x128x128xbf16> to vector<128x128xbf16>
      %cst_110 = arith.constant dense<0.000000e+00> : vector<4x128xf32>
      %130 = tpu.matmul %127, %129, %cst_110 {dimension_numbers = #tpu.dot_dimension_numbers<[1], [0], [0], [1], [0, 0, 1, 1], [], []>} : vector<4x128xbf16>, vector<128x128xbf16>, vector<4x128xf32> -> vector<4x128xf32>
      %131 = arith.addf %121, %130 : vector<4x128xf32>
      %132 = arith.index_cast %123 : i32 to index
      %c8_111 = arith.constant 8 : index
      %c0_112 = arith.constant 0 : index
      %133 = tpu.strided_load %arg10[%132, %c8_111, %c0_112] {strides = array<i32: 1, 2, 1>} : memref<9x16x128xf32, #tpu.memory_space<vmem>>, vector<1x4x128xf32>
      %134 = vector.shape_cast %133 : vector<1x4x128xf32> to vector<4x128xf32>
      %135 = arith.truncf %134 : vector<4x128xf32> to vector<4x128xbf16>
      %c4 = arith.constant 4 : index
      %c0_113 = arith.constant 0 : index
      %c0_114 = arith.constant 0 : index
      %136 = vector.load %arg5[%c4, %c0_113, %c0_114] : memref<9x128x128xbf16, #tpu.memory_space<vmem>>, vector<1x128x128xbf16>
      %137 = vector.shape_cast %136 : vector<1x128x128xbf16> to vector<128x128xbf16>
      %cst_115 = arith.constant dense<0.000000e+00> : vector<4x128xf32>
      %138 = tpu.matmul %135, %137, %cst_115 {dimension_numbers = #tpu.dot_dimension_numbers<[1], [0], [0], [1], [0, 0, 1, 1], [], []>} : vector<4x128xbf16>, vector<128x128xbf16>, vector<4x128xf32> -> vector<4x128xf32>
      %139 = arith.addf %131, %138 : vector<4x128xf32>
      %140 = arith.index_cast %123 : i32 to index
      %c9_116 = arith.constant 9 : index
      %c0_117 = arith.constant 0 : index
      %141 = tpu.strided_load %arg10[%140, %c9_116, %c0_117] {strides = array<i32: 1, 2, 1>} : memref<9x16x128xf32, #tpu.memory_space<vmem>>, vector<1x4x128xf32>
      %142 = vector.shape_cast %141 : vector<1x4x128xf32> to vector<4x128xf32>
      %143 = arith.truncf %142 : vector<4x128xf32> to vector<4x128xbf16>
      %c5 = arith.constant 5 : index
      %c0_118 = arith.constant 0 : index
      %c0_119 = arith.constant 0 : index
      %144 = vector.load %arg5[%c5, %c0_118, %c0_119] : memref<9x128x128xbf16, #tpu.memory_space<vmem>>, vector<1x128x128xbf16>
      %145 = vector.shape_cast %144 : vector<1x128x128xbf16> to vector<128x128xbf16>
      %cst_120 = arith.constant dense<0.000000e+00> : vector<4x128xf32>
      %146 = tpu.matmul %143, %145, %cst_120 {dimension_numbers = #tpu.dot_dimension_numbers<[1], [0], [0], [1], [0, 0, 1, 1], [], []>} : vector<4x128xbf16>, vector<128x128xbf16>, vector<4x128xf32> -> vector<4x128xf32>
      %147 = arith.addf %139, %146 : vector<4x128xf32>
      %c2_i32_121 = arith.constant 2 : i32
      %148 = arith.muli %c2_i32_121, %arg13 : i32
      %c2_i32_122 = arith.constant 2 : i32
      %149 = arith.addi %148, %c2_i32_122 : i32
      %150 = arith.index_cast %149 : i32 to index
      %c7_123 = arith.constant 7 : index
      %c0_124 = arith.constant 0 : index
      %151 = tpu.strided_load %arg10[%150, %c7_123, %c0_124] {strides = array<i32: 1, 2, 1>} : memref<9x16x128xf32, #tpu.memory_space<vmem>>, vector<1x4x128xf32>
      %152 = vector.shape_cast %151 : vector<1x4x128xf32> to vector<4x128xf32>
      %153 = arith.truncf %152 : vector<4x128xf32> to vector<4x128xbf16>
      %c6 = arith.constant 6 : index
      %c0_125 = arith.constant 0 : index
      %c0_126 = arith.constant 0 : index
      %154 = vector.load %arg5[%c6, %c0_125, %c0_126] : memref<9x128x128xbf16, #tpu.memory_space<vmem>>, vector<1x128x128xbf16>
      %155 = vector.shape_cast %154 : vector<1x128x128xbf16> to vector<128x128xbf16>
      %cst_127 = arith.constant dense<0.000000e+00> : vector<4x128xf32>
      %156 = tpu.matmul %153, %155, %cst_127 {dimension_numbers = #tpu.dot_dimension_numbers<[1], [0], [0], [1], [0, 0, 1, 1], [], []>} : vector<4x128xbf16>, vector<128x128xbf16>, vector<4x128xf32> -> vector<4x128xf32>
      %157 = arith.addf %147, %156 : vector<4x128xf32>
      %158 = arith.index_cast %149 : i32 to index
      %c8_128 = arith.constant 8 : index
      %c0_129 = arith.constant 0 : index
      %159 = tpu.strided_load %arg10[%158, %c8_128, %c0_129] {strides = array<i32: 1, 2, 1>} : memref<9x16x128xf32, #tpu.memory_space<vmem>>, vector<1x4x128xf32>
      %160 = vector.shape_cast %159 : vector<1x4x128xf32> to vector<4x128xf32>
      %161 = arith.truncf %160 : vector<4x128xf32> to vector<4x128xbf16>
      %c7_130 = arith.constant 7 : index
      %c0_131 = arith.constant 0 : index
      %c0_132 = arith.constant 0 : index
      %162 = vector.load %arg5[%c7_130, %c0_131, %c0_132] : memref<9x128x128xbf16, #tpu.memory_space<vmem>>, vector<1x128x128xbf16>
      %163 = vector.shape_cast %162 : vector<1x128x128xbf16> to vector<128x128xbf16>
      %cst_133 = arith.constant dense<0.000000e+00> : vector<4x128xf32>
      %164 = tpu.matmul %161, %163, %cst_133 {dimension_numbers = #tpu.dot_dimension_numbers<[1], [0], [0], [1], [0, 0, 1, 1], [], []>} : vector<4x128xbf16>, vector<128x128xbf16>, vector<4x128xf32> -> vector<4x128xf32>
      %165 = arith.addf %157, %164 : vector<4x128xf32>
      %166 = arith.index_cast %149 : i32 to index
      %c9_134 = arith.constant 9 : index
      %c0_135 = arith.constant 0 : index
      %167 = tpu.strided_load %arg10[%166, %c9_134, %c0_135] {strides = array<i32: 1, 2, 1>} : memref<9x16x128xf32, #tpu.memory_space<vmem>>, vector<1x4x128xf32>
      %168 = vector.shape_cast %167 : vector<1x4x128xf32> to vector<4x128xf32>
      %169 = arith.truncf %168 : vector<4x128xf32> to vector<4x128xbf16>
      %c8_136 = arith.constant 8 : index
      %c0_137 = arith.constant 0 : index
      %c0_138 = arith.constant 0 : index
      %170 = vector.load %arg5[%c8_136, %c0_137, %c0_138] : memref<9x128x128xbf16, #tpu.memory_space<vmem>>, vector<1x128x128xbf16>
      %171 = vector.shape_cast %170 : vector<1x128x128xbf16> to vector<128x128xbf16>
      %cst_139 = arith.constant dense<0.000000e+00> : vector<4x128xf32>
      %172 = tpu.matmul %169, %171, %cst_139 {dimension_numbers = #tpu.dot_dimension_numbers<[1], [0], [0], [1], [0, 0, 1, 1], [], []>} : vector<4x128xbf16>, vector<128x128xbf16>, vector<4x128xf32> -> vector<4x128xf32>
      %173 = arith.addf %165, %172 : vector<4x128xf32>
      %c1_i32_140 = arith.constant 1 : i32
      %174 = arith.addi %c1_i32_140, %arg13 : i32
      %175 = arith.index_cast %174 : i32 to index
      %c8_141 = arith.constant 8 : index
      %c0_142 = arith.constant 0 : index
      %176 = vector.load %arg11[%175, %c8_141, %c0_142] : memref<5x12x128xf32, #tpu.memory_space<vmem>>, vector<1x4x128xf32>
      %177 = vector.shape_cast %176 : vector<1x4x128xf32> to vector<4x128xf32>
      %178 = vector.shape_cast %173 : vector<4x128xf32> to vector<1x4x128xf32>
      tpu.vector_store %arg11[%175, %c8_141, %c0_142], %178 {strides = array<i32>} : memref<5x12x128xf32, #tpu.memory_space<vmem>>, vector<1x4x128xf32>,
      %cst_143 = arith.constant dense<0.000000e+00> : vector<128xf32>
      %179 = vector.multi_reduction <add>, %173, %cst_143 [0] : vector<4x128xf32> to vector<128xf32>
      %180 = vector.shape_cast %179 : vector<128xf32> to vector<1x128xf32>
      %181 = arith.addf %arg14, %180 : vector<1x128xf32>
      %182 = arith.mulf %173, %173 : vector<4x128xf32>
      %cst_144 = arith.constant dense<0.000000e+00> : vector<128xf32>
      %183 = vector.multi_reduction <add>, %182, %cst_144 [0] : vector<4x128xf32> to vector<128xf32>
      %184 = vector.shape_cast %183 : vector<128xf32> to vector<1x128xf32>
      %185 = arith.addf %arg15, %184 : vector<1x128xf32>
      scf.yield %181, %185 : vector<1x128xf32>, vector<1x128xf32>
    }
    %c4_i32_55 = arith.constant 4 : i32
    %cst_56 = arith.constant 6.250000e-02 : f32
    %58 = vector.broadcast %cst_56 : f32 to vector<1x128xf32>
    %59 = arith.mulf %57#0, %58 : vector<1x128xf32>
    %cst_57 = arith.constant 6.250000e-02 : f32
    %60 = vector.broadcast %cst_57 : f32 to vector<1x128xf32>
    %61 = arith.mulf %57#1, %60 : vector<1x128xf32>
    %62 = arith.mulf %59, %59 : vector<1x128xf32>
    %63 = arith.subf %61, %62 : vector<1x128xf32>
    %cst_58 = arith.constant 0.000000e+00 : f32
    %64 = vector.broadcast %cst_58 : f32 to vector<1x128xf32>
    %65 = arith.maximumf %63, %64 : vector<1x128xf32>
    %cst_59 = arith.constant 9.99999974E-6 : f32
    %66 = vector.broadcast %cst_59 : f32 to vector<1x128xf32>
    %67 = arith.addf %65, %66 : vector<1x128xf32>
    %68 = math.rsqrt %67 : vector<1x128xf32>
    %c0_i32_60 = arith.constant 0 : i32
    %c4_i32_61 = arith.constant 4 : i32
    %69 = arith.addi %c0_i32_60, %c4_i32_61 : i32
    %c1_i32_62 = arith.constant 1 : i32
    scf.for %arg13 = %c0_i32_60 to %69 step %c1_i32_62  : i32 {
      %c1_i32_85 = arith.constant 1 : i32
      %95 = arith.addi %c1_i32_85, %arg13 : i32
      %96 = arith.index_cast %95 : i32 to index
      %c8_86 = arith.constant 8 : index
      %c0_87 = arith.constant 0 : index
      %97 = vector.load %arg11[%96, %c8_86, %c0_87] : memref<5x12x128xf32, #tpu.memory_space<vmem>>, vector<1x4x128xf32>
      %98 = vector.shape_cast %97 : vector<1x4x128xf32> to vector<4x128xf32>
      %99 = vector.broadcast %59 : vector<1x128xf32> to vector<4x128xf32>
      %100 = arith.subf %98, %99 : vector<4x128xf32>
      %101 = vector.broadcast %68 : vector<1x128xf32> to vector<4x128xf32>
      %102 = arith.mulf %100, %101 : vector<4x128xf32>
      %cst_88 = arith.constant 0.000000e+00 : f32
      %103 = vector.broadcast %cst_88 : f32 to vector<4x128xf32>
      %104 = arith.maximumf %102, %103 : vector<4x128xf32>
      %c1_i32_89 = arith.constant 1 : i32
      %105 = arith.addi %c1_i32_89, %arg13 : i32
      %106 = arith.index_cast %105 : i32 to index
      %c8_90 = arith.constant 8 : index
      %c0_91 = arith.constant 0 : index
      %107 = vector.load %arg11[%106, %c8_90, %c0_91] : memref<5x12x128xf32, #tpu.memory_space<vmem>>, vector<1x4x128xf32>
      %108 = vector.shape_cast %107 : vector<1x4x128xf32> to vector<4x128xf32>
      %109 = vector.shape_cast %104 : vector<4x128xf32> to vector<1x4x128xf32>
      tpu.vector_store %arg11[%106, %c8_90, %c0_91], %109 {strides = array<i32>} : memref<5x12x128xf32, #tpu.memory_space<vmem>>, vector<1x4x128xf32>,
    }
    %c4_i32_63 = arith.constant 4 : i32
    %cst_64 = arith.constant 0.000000e+00 : f32
    %70 = vector.broadcast %cst_64 : f32 to vector<1x128xf32>
    %c0_i32_65 = arith.constant 0 : i32
    %c2_i32 = arith.constant 2 : i32
    %71 = arith.addi %c0_i32_65, %c2_i32 : i32
    %c1_i32_66 = arith.constant 1 : i32
    %72:2 = scf.for %arg13 = %c0_i32_65 to %71 step %c1_i32_66 iter_args(%arg14 = %70, %arg15 = %70) -> (vector<1x128xf32>, vector<1x128xf32>)  : i32 {
      %cst_85 = arith.constant 0.000000e+00 : f32
      %95 = vector.broadcast %cst_85 : f32 to vector<2x128xf32>
      %c2_i32_86 = arith.constant 2 : i32
      %96 = arith.muli %c2_i32_86, %arg13 : i32
      %c0_i32_87 = arith.constant 0 : i32
      %97 = arith.addi %96, %c0_i32_87 : i32
      %98 = arith.index_cast %97 : i32 to index
      %c7 = arith.constant 7 : index
      %c0_88 = arith.constant 0 : index
      %99 = tpu.strided_load %arg11[%98, %c7, %c0_88] {strides = array<i32: 1, 2, 1>} : memref<5x12x128xf32, #tpu.memory_space<vmem>>, vector<1x2x128xf32>
      %100 = vector.shape_cast %99 : vector<1x2x128xf32> to vector<2x128xf32>
      %101 = arith.truncf %100 : vector<2x128xf32> to vector<2x128xbf16>
      %c0_89 = arith.constant 0 : index
      %c0_90 = arith.constant 0 : index
      %c0_91 = arith.constant 0 : index
      %102 = vector.load %arg6[%c0_89, %c0_90, %c0_91] : memref<9x128x128xbf16, #tpu.memory_space<vmem>>, vector<1x128x128xbf16>
      %103 = vector.shape_cast %102 : vector<1x128x128xbf16> to vector<128x128xbf16>
      %cst_92 = arith.constant dense<0.000000e+00> : vector<2x128xf32>
      %104 = tpu.matmul %101, %103, %cst_92 {dimension_numbers = #tpu.dot_dimension_numbers<[1], [0], [0], [1], [0, 0, 1, 1], [], []>} : vector<2x128xbf16>, vector<128x128xbf16>, vector<2x128xf32> -> vector<2x128xf32>
      %105 = arith.addf %95, %104 : vector<2x128xf32>
      %106 = arith.index_cast %97 : i32 to index
      %c8_93 = arith.constant 8 : index
      %c0_94 = arith.constant 0 : index
      %107 = tpu.strided_load %arg11[%106, %c8_93, %c0_94] {strides = array<i32: 1, 2, 1>} : memref<5x12x128xf32, #tpu.memory_space<vmem>>, vector<1x2x128xf32>
      %108 = vector.shape_cast %107 : vector<1x2x128xf32> to vector<2x128xf32>
      %109 = arith.truncf %108 : vector<2x128xf32> to vector<2x128xbf16>
      %c1_95 = arith.constant 1 : index
      %c0_96 = arith.constant 0 : index
      %c0_97 = arith.constant 0 : index
      %110 = vector.load %arg6[%c1_95, %c0_96, %c0_97] : memref<9x128x128xbf16, #tpu.memory_space<vmem>>, vector<1x128x128xbf16>
      %111 = vector.shape_cast %110 : vector<1x128x128xbf16> to vector<128x128xbf16>
      %cst_98 = arith.constant dense<0.000000e+00> : vector<2x128xf32>
      %112 = tpu.matmul %109, %111, %cst_98 {dimension_numbers = #tpu.dot_dimension_numbers<[1], [0], [0], [1], [0, 0, 1, 1], [], []>} : vector<2x128xbf16>, vector<128x128xbf16>, vector<2x128xf32> -> vector<2x128xf32>
      %113 = arith.addf %105, %112 : vector<2x128xf32>
      %114 = arith.index_cast %97 : i32 to index
      %c9 = arith.constant 9 : index
      %c0_99 = arith.constant 0 : index
      %115 = tpu.strided_load %arg11[%114, %c9, %c0_99] {strides = array<i32: 1, 2, 1>} : memref<5x12x128xf32, #tpu.memory_space<vmem>>, vector<1x2x128xf32>
      %116 = vector.shape_cast %115 : vector<1x2x128xf32> to vector<2x128xf32>
      %117 = arith.truncf %116 : vector<2x128xf32> to vector<2x128xbf16>
      %c2_100 = arith.constant 2 : index
      %c0_101 = arith.constant 0 : index
      %c0_102 = arith.constant 0 : index
      %118 = vector.load %arg6[%c2_100, %c0_101, %c0_102] : memref<9x128x128xbf16, #tpu.memory_space<vmem>>, vector<1x128x128xbf16>
      %119 = vector.shape_cast %118 : vector<1x128x128xbf16> to vector<128x128xbf16>
      %cst_103 = arith.constant dense<0.000000e+00> : vector<2x128xf32>
      %120 = tpu.matmul %117, %119, %cst_103 {dimension_numbers = #tpu.dot_dimension_numbers<[1], [0], [0], [1], [0, 0, 1, 1], [], []>} : vector<2x128xbf16>, vector<128x128xbf16>, vector<2x128xf32> -> vector<2x128xf32>
      %121 = arith.addf %113, %120 : vector<2x128xf32>
      %c2_i32_104 = arith.constant 2 : i32
      %122 = arith.muli %c2_i32_104, %arg13 : i32
      %c1_i32_105 = arith.constant 1 : i32
      %123 = arith.addi %122, %c1_i32_105 : i32
      %124 = arith.index_cast %123 : i32 to index
      %c7_106 = arith.constant 7 : index
      %c0_107 = arith.constant 0 : index
      %125 = tpu.strided_load %arg11[%124, %c7_106, %c0_107] {strides = array<i32: 1, 2, 1>} : memref<5x12x128xf32, #tpu.memory_space<vmem>>, vector<1x2x128xf32>
      %126 = vector.shape_cast %125 : vector<1x2x128xf32> to vector<2x128xf32>
      %127 = arith.truncf %126 : vector<2x128xf32> to vector<2x128xbf16>
      %c3 = arith.constant 3 : index
      %c0_108 = arith.constant 0 : index
      %c0_109 = arith.constant 0 : index
      %128 = vector.load %arg6[%c3, %c0_108, %c0_109] : memref<9x128x128xbf16, #tpu.memory_space<vmem>>, vector<1x128x128xbf16>
      %129 = vector.shape_cast %128 : vector<1x128x128xbf16> to vector<128x128xbf16>
      %cst_110 = arith.constant dense<0.000000e+00> : vector<2x128xf32>
      %130 = tpu.matmul %127, %129, %cst_110 {dimension_numbers = #tpu.dot_dimension_numbers<[1], [0], [0], [1], [0, 0, 1, 1], [], []>} : vector<2x128xbf16>, vector<128x128xbf16>, vector<2x128xf32> -> vector<2x128xf32>
      %131 = arith.addf %121, %130 : vector<2x128xf32>
      %132 = arith.index_cast %123 : i32 to index
      %c8_111 = arith.constant 8 : index
      %c0_112 = arith.constant 0 : index
      %133 = tpu.strided_load %arg11[%132, %c8_111, %c0_112] {strides = array<i32: 1, 2, 1>} : memref<5x12x128xf32, #tpu.memory_space<vmem>>, vector<1x2x128xf32>
      %134 = vector.shape_cast %133 : vector<1x2x128xf32> to vector<2x128xf32>
      %135 = arith.truncf %134 : vector<2x128xf32> to vector<2x128xbf16>
      %c4 = arith.constant 4 : index
      %c0_113 = arith.constant 0 : index
      %c0_114 = arith.constant 0 : index
      %136 = vector.load %arg6[%c4, %c0_113, %c0_114] : memref<9x128x128xbf16, #tpu.memory_space<vmem>>, vector<1x128x128xbf16>
      %137 = vector.shape_cast %136 : vector<1x128x128xbf16> to vector<128x128xbf16>
      %cst_115 = arith.constant dense<0.000000e+00> : vector<2x128xf32>
      %138 = tpu.matmul %135, %137, %cst_115 {dimension_numbers = #tpu.dot_dimension_numbers<[1], [0], [0], [1], [0, 0, 1, 1], [], []>} : vector<2x128xbf16>, vector<128x128xbf16>, vector<2x128xf32> -> vector<2x128xf32>
      %139 = arith.addf %131, %138 : vector<2x128xf32>
      %140 = arith.index_cast %123 : i32 to index
      %c9_116 = arith.constant 9 : index
      %c0_117 = arith.constant 0 : index
      %141 = tpu.strided_load %arg11[%140, %c9_116, %c0_117] {strides = array<i32: 1, 2, 1>} : memref<5x12x128xf32, #tpu.memory_space<vmem>>, vector<1x2x128xf32>
      %142 = vector.shape_cast %141 : vector<1x2x128xf32> to vector<2x128xf32>
      %143 = arith.truncf %142 : vector<2x128xf32> to vector<2x128xbf16>
      %c5 = arith.constant 5 : index
      %c0_118 = arith.constant 0 : index
      %c0_119 = arith.constant 0 : index
      %144 = vector.load %arg6[%c5, %c0_118, %c0_119] : memref<9x128x128xbf16, #tpu.memory_space<vmem>>, vector<1x128x128xbf16>
      %145 = vector.shape_cast %144 : vector<1x128x128xbf16> to vector<128x128xbf16>
      %cst_120 = arith.constant dense<0.000000e+00> : vector<2x128xf32>
      %146 = tpu.matmul %143, %145, %cst_120 {dimension_numbers = #tpu.dot_dimension_numbers<[1], [0], [0], [1], [0, 0, 1, 1], [], []>} : vector<2x128xbf16>, vector<128x128xbf16>, vector<2x128xf32> -> vector<2x128xf32>
      %147 = arith.addf %139, %146 : vector<2x128xf32>
      %c2_i32_121 = arith.constant 2 : i32
      %148 = arith.muli %c2_i32_121, %arg13 : i32
      %c2_i32_122 = arith.constant 2 : i32
      %149 = arith.addi %148, %c2_i32_122 : i32
      %150 = arith.index_cast %149 : i32 to index
      %c7_123 = arith.constant 7 : index
      %c0_124 = arith.constant 0 : index
      %151 = tpu.strided_load %arg11[%150, %c7_123, %c0_124] {strides = array<i32: 1, 2, 1>} : memref<5x12x128xf32, #tpu.memory_space<vmem>>, vector<1x2x128xf32>
      %152 = vector.shape_cast %151 : vector<1x2x128xf32> to vector<2x128xf32>
      %153 = arith.truncf %152 : vector<2x128xf32> to vector<2x128xbf16>
      %c6 = arith.constant 6 : index
      %c0_125 = arith.constant 0 : index
      %c0_126 = arith.constant 0 : index
      %154 = vector.load %arg6[%c6, %c0_125, %c0_126] : memref<9x128x128xbf16, #tpu.memory_space<vmem>>, vector<1x128x128xbf16>
      %155 = vector.shape_cast %154 : vector<1x128x128xbf16> to vector<128x128xbf16>
      %cst_127 = arith.constant dense<0.000000e+00> : vector<2x128xf32>
      %156 = tpu.matmul %153, %155, %cst_127 {dimension_numbers = #tpu.dot_dimension_numbers<[1], [0], [0], [1], [0, 0, 1, 1], [], []>} : vector<2x128xbf16>, vector<128x128xbf16>, vector<2x128xf32> -> vector<2x128xf32>
      %157 = arith.addf %147, %156 : vector<2x128xf32>
      %158 = arith.index_cast %149 : i32 to index
      %c8_128 = arith.constant 8 : index
      %c0_129 = arith.constant 0 : index
      %159 = tpu.strided_load %arg11[%158, %c8_128, %c0_129] {strides = array<i32: 1, 2, 1>} : memref<5x12x128xf32, #tpu.memory_space<vmem>>, vector<1x2x128xf32>
      %160 = vector.shape_cast %159 : vector<1x2x128xf32> to vector<2x128xf32>
      %161 = arith.truncf %160 : vector<2x128xf32> to vector<2x128xbf16>
      %c7_130 = arith.constant 7 : index
      %c0_131 = arith.constant 0 : index
      %c0_132 = arith.constant 0 : index
      %162 = vector.load %arg6[%c7_130, %c0_131, %c0_132] : memref<9x128x128xbf16, #tpu.memory_space<vmem>>, vector<1x128x128xbf16>
      %163 = vector.shape_cast %162 : vector<1x128x128xbf16> to vector<128x128xbf16>
      %cst_133 = arith.constant dense<0.000000e+00> : vector<2x128xf32>
      %164 = tpu.matmul %161, %163, %cst_133 {dimension_numbers = #tpu.dot_dimension_numbers<[1], [0], [0], [1], [0, 0, 1, 1], [], []>} : vector<2x128xbf16>, vector<128x128xbf16>, vector<2x128xf32> -> vector<2x128xf32>
      %165 = arith.addf %157, %164 : vector<2x128xf32>
      %166 = arith.index_cast %149 : i32 to index
      %c9_134 = arith.constant 9 : index
      %c0_135 = arith.constant 0 : index
      %167 = tpu.strided_load %arg11[%166, %c9_134, %c0_135] {strides = array<i32: 1, 2, 1>} : memref<5x12x128xf32, #tpu.memory_space<vmem>>, vector<1x2x128xf32>
      %168 = vector.shape_cast %167 : vector<1x2x128xf32> to vector<2x128xf32>
      %169 = arith.truncf %168 : vector<2x128xf32> to vector<2x128xbf16>
      %c8_136 = arith.constant 8 : index
      %c0_137 = arith.constant 0 : index
      %c0_138 = arith.constant 0 : index
      %170 = vector.load %arg6[%c8_136, %c0_137, %c0_138] : memref<9x128x128xbf16, #tpu.memory_space<vmem>>, vector<1x128x128xbf16>
      %171 = vector.shape_cast %170 : vector<1x128x128xbf16> to vector<128x128xbf16>
      %cst_139 = arith.constant dense<0.000000e+00> : vector<2x128xf32>
      %172 = tpu.matmul %169, %171, %cst_139 {dimension_numbers = #tpu.dot_dimension_numbers<[1], [0], [0], [1], [0, 0, 1, 1], [], []>} : vector<2x128xbf16>, vector<128x128xbf16>, vector<2x128xf32> -> vector<2x128xf32>
      %173 = arith.addf %165, %172 : vector<2x128xf32>
      %c1_i32_140 = arith.constant 1 : i32
      %174 = arith.addi %c1_i32_140, %arg13 : i32
      %175 = arith.index_cast %174 : i32 to index
      %c8_141 = arith.constant 8 : index
      %c0_142 = arith.constant 0 : index
      %176 = vector.load %arg12[%175, %c8_141, %c0_142] : memref<3x10x128xf32, #tpu.memory_space<vmem>>, vector<1x2x128xf32>
      %177 = vector.shape_cast %176 : vector<1x2x128xf32> to vector<2x128xf32>
      %178 = vector.shape_cast %173 : vector<2x128xf32> to vector<1x2x128xf32>
      tpu.vector_store %arg12[%175, %c8_141, %c0_142], %178 {strides = array<i32>} : memref<3x10x128xf32, #tpu.memory_space<vmem>>, vector<1x2x128xf32>,
      %cst_143 = arith.constant dense<0.000000e+00> : vector<128xf32>
      %179 = vector.multi_reduction <add>, %173, %cst_143 [0] : vector<2x128xf32> to vector<128xf32>
      %180 = vector.shape_cast %179 : vector<128xf32> to vector<1x128xf32>
      %181 = arith.addf %arg14, %180 : vector<1x128xf32>
      %182 = arith.mulf %173, %173 : vector<2x128xf32>
      %cst_144 = arith.constant dense<0.000000e+00> : vector<128xf32>
      %183 = vector.multi_reduction <add>, %182, %cst_144 [0] : vector<2x128xf32> to vector<128xf32>
      %184 = vector.shape_cast %183 : vector<128xf32> to vector<1x128xf32>
      %185 = arith.addf %arg15, %184 : vector<1x128xf32>
      scf.yield %181, %185 : vector<1x128xf32>, vector<1x128xf32>
    }
    %c2_i32_67 = arith.constant 2 : i32
    %cst_68 = arith.constant 2.500000e-01 : f32
    %73 = vector.broadcast %cst_68 : f32 to vector<1x128xf32>
    %74 = arith.mulf %72#0, %73 : vector<1x128xf32>
    %cst_69 = arith.constant 2.500000e-01 : f32
    %75 = vector.broadcast %cst_69 : f32 to vector<1x128xf32>
    %76 = arith.mulf %72#1, %75 : vector<1x128xf32>
    %77 = arith.mulf %74, %74 : vector<1x128xf32>
    %78 = arith.subf %76, %77 : vector<1x128xf32>
    %cst_70 = arith.constant 0.000000e+00 : f32
    %79 = vector.broadcast %cst_70 : f32 to vector<1x128xf32>
    %80 = arith.maximumf %78, %79 : vector<1x128xf32>
    %cst_71 = arith.constant 9.99999974E-6 : f32
    %81 = vector.broadcast %cst_71 : f32 to vector<1x128xf32>
    %82 = arith.addf %80, %81 : vector<1x128xf32>
    %83 = math.rsqrt %82 : vector<1x128xf32>
    %c0_i32_72 = arith.constant 0 : i32
    %c2_i32_73 = arith.constant 2 : i32
    %84 = arith.addi %c0_i32_72, %c2_i32_73 : i32
    %c1_i32_74 = arith.constant 1 : i32
    scf.for %arg13 = %c0_i32_72 to %84 step %c1_i32_74  : i32 {
      %c1_i32_85 = arith.constant 1 : i32
      %95 = arith.addi %c1_i32_85, %arg13 : i32
      %96 = arith.index_cast %95 : i32 to index
      %c8_86 = arith.constant 8 : index
      %c0_87 = arith.constant 0 : index
      %97 = vector.load %arg12[%96, %c8_86, %c0_87] : memref<3x10x128xf32, #tpu.memory_space<vmem>>, vector<1x2x128xf32>
      %98 = vector.shape_cast %97 : vector<1x2x128xf32> to vector<2x128xf32>
      %99 = vector.broadcast %74 : vector<1x128xf32> to vector<2x128xf32>
      %100 = arith.subf %98, %99 : vector<2x128xf32>
      %101 = vector.broadcast %83 : vector<1x128xf32> to vector<2x128xf32>
      %102 = arith.mulf %100, %101 : vector<2x128xf32>
      %cst_88 = arith.constant 0.000000e+00 : f32
      %103 = vector.broadcast %cst_88 : f32 to vector<2x128xf32>
      %104 = arith.maximumf %102, %103 : vector<2x128xf32>
      %c1_i32_89 = arith.constant 1 : i32
      %105 = arith.addi %c1_i32_89, %arg13 : i32
      %106 = arith.index_cast %105 : i32 to index
      %c8_90 = arith.constant 8 : index
      %c0_91 = arith.constant 0 : index
      %107 = vector.load %arg12[%106, %c8_90, %c0_91] : memref<3x10x128xf32, #tpu.memory_space<vmem>>, vector<1x2x128xf32>
      %108 = vector.shape_cast %107 : vector<1x2x128xf32> to vector<2x128xf32>
      %109 = vector.shape_cast %104 : vector<2x128xf32> to vector<1x2x128xf32>
      tpu.vector_store %arg12[%106, %c8_90, %c0_91], %109 {strides = array<i32>} : memref<3x10x128xf32, #tpu.memory_space<vmem>>, vector<1x2x128xf32>,
    }
    %c2_i32_75 = arith.constant 2 : i32
    %c1 = arith.constant 1 : index
    %c8 = arith.constant 8 : index
    %c0_76 = arith.constant 0 : index
    %85 = vector.load %arg12[%c1, %c8, %c0_76] : memref<3x10x128xf32, #tpu.memory_space<vmem>>, vector<1x2x128xf32>
    %86 = vector.shape_cast %85 : vector<1x2x128xf32> to vector<2x128xf32>
    %c0_77 = arith.constant 0 : index
    %c0_78 = arith.constant 0 : index
    %c0_79 = arith.constant 0 : index
    %87 = vector.load %arg7[%c0_77, %c0_78, %c0_79] : memref<1x4x128xf32, #tpu.memory_space<vmem>>, vector<1x2x128xf32>
    %88 = vector.shape_cast %87 : vector<1x2x128xf32> to vector<2x128xf32>
    %89 = vector.shape_cast %86 : vector<2x128xf32> to vector<1x2x128xf32>
    tpu.vector_store %arg7[%c0_77, %c0_78, %c0_79], %89 {strides = array<i32>} : memref<1x4x128xf32, #tpu.memory_space<vmem>>, vector<1x2x128xf32>,
    %c2 = arith.constant 2 : index
    %c8_80 = arith.constant 8 : index
    %c0_81 = arith.constant 0 : index
    %90 = vector.load %arg12[%c2, %c8_80, %c0_81] : memref<3x10x128xf32, #tpu.memory_space<vmem>>, vector<1x2x128xf32>
    %91 = vector.shape_cast %90 : vector<1x2x128xf32> to vector<2x128xf32>
    %c0_82 = arith.constant 0 : index
    %c2_83 = arith.constant 2 : index
    %c0_84 = arith.constant 0 : index
    %92 = vector.load %arg7[%c0_82, %c2_83, %c0_84] : memref<1x4x128xf32, #tpu.memory_space<vmem>>, vector<1x2x128xf32>
    %93 = vector.shape_cast %92 : vector<1x2x128xf32> to vector<2x128xf32>
    %94 = vector.shape_cast %91 : vector<2x128xf32> to vector<1x2x128xf32>
    tpu.vector_store %arg7[%c0_82, %c2_83, %c0_84], %94 {strides = array<i32>} : memref<1x4x128xf32, #tpu.memory_space<vmem>>, vector<1x2x128xf32>,
    return
  }
  func.func @transform_0(%arg0: i32) -> (i32, i32, i32) {
    %c0_i32 = arith.constant 0 : i32
    %c0_i32_0 = arith.constant 0 : i32
    %c0_i32_1 = arith.constant 0 : i32
    return %arg0, %c0_i32, %c0_i32_0 : i32, i32, i32
  }
  func.func @transform_1(%arg0: i32) -> (i32, i32) {
    %c0_i32 = arith.constant 0 : i32
    %c0_i32_0 = arith.constant 0 : i32
    %c0_i32_1 = arith.constant 0 : i32
    return %c0_i32, %c0_i32_0 : i32, i32
  }
  func.func @transform_2(%arg0: i32) -> (i32, i32, i32) {
    %c0_i32 = arith.constant 0 : i32
    %c0_i32_0 = arith.constant 0 : i32
    %c0_i32_1 = arith.constant 0 : i32
    %c0_i32_2 = arith.constant 0 : i32
    return %c0_i32, %c0_i32_0, %c0_i32_1 : i32, i32, i32
  }
  func.func @transform_3(%arg0: i32) -> (i32, i32, i32) {
    %c0_i32 = arith.constant 0 : i32
    %c0_i32_0 = arith.constant 0 : i32
    %c0_i32_1 = arith.constant 0 : i32
    %c0_i32_2 = arith.constant 0 : i32
    return %c0_i32, %c0_i32_0, %c0_i32_1 : i32, i32, i32
  }
  func.func @transform_4(%arg0: i32) -> (i32, i32, i32) {
    %c0_i32 = arith.constant 0 : i32
    %c0_i32_0 = arith.constant 0 : i32
    %c0_i32_1 = arith.constant 0 : i32
    %c0_i32_2 = arith.constant 0 : i32
    return %c0_i32, %c0_i32_0, %c0_i32_1 : i32, i32, i32
  }
  func.func @transform_5(%arg0: i32) -> (i32, i32, i32) {
    %c0_i32 = arith.constant 0 : i32
    %c0_i32_0 = arith.constant 0 : i32
    %c0_i32_1 = arith.constant 0 : i32
    %c0_i32_2 = arith.constant 0 : i32
    return %c0_i32, %c0_i32_0, %c0_i32_1 : i32, i32, i32
  }
  func.func @transform_6(%arg0: i32) -> (i32, i32, i32) {
    %c0_i32 = arith.constant 0 : i32
    %c0_i32_0 = arith.constant 0 : i32
    %c0_i32_1 = arith.constant 0 : i32
    return %arg0, %c0_i32, %c0_i32_0 : i32, i32, i32
  }
}

</mosaic_0001>

<llo_original>
// kernel: _lambda_.1
$region0: #{_lambda_.1}
  #allocation0 [shape = 'u32[]', space=smem, size = 0x4, offset = 0x4, fixed_abs, tag = 'smem constant byte address 0x4 - core index']
  #allocation1 [shape = 'u32[72,128]{1,0:T(1,128)}', space=vmem, size = 0x9000, scoped, tag = 'internal scratch']
  #allocation2 [shape = 'f32[33,40,128]{2,1,0:T(8,128)}', space=vmem, size = 0xa5000, scoped, tag = 'scratch operand']
  #allocation3 [shape = 'f32[17,24,128]{2,1,0:T(8,128)}', space=vmem, size = 0x33000, scoped, tag = 'scratch operand']
  #allocation4 [shape = 'f32[9,16,128]{2,1,0:T(8,128)}', space=vmem, size = 0x12000, scoped, tag = 'scratch operand']
  #allocation5 [shape = 'f32[5,12,128]{2,1,0:T(8,128)}', space=vmem, size = 0xa000, scoped, tag = 'scratch operand']
  #allocation6 [shape = 'f32[3,10,128]{2,1,0:T(8,128)}', space=vmem, size = 0x6000, scoped, tag = 'scratch operand']
  %s0 = inlined_call_operand.vmem [shape: bf16[2,1024,27], index: 0, kind: input, shape index: {}]
  %s1 = inlined_call_operand.vmem [shape: bf16[27,128], index: 1, kind: input, shape index: {}]
  %s2 = inlined_call_operand.vmem [shape: bf16[9,128,128], index: 2, kind: input, shape index: {}]
  %s3 = inlined_call_operand.vmem [shape: bf16[9,128,128], index: 3, kind: input, shape index: {}]
  %s4 = inlined_call_operand.vmem [shape: bf16[9,128,128], index: 4, kind: input, shape index: {}]
  %s5 = inlined_call_operand.vmem [shape: bf16[9,128,128], index: 5, kind: input, shape index: {}]
  %s6 = inlined_call_operand.vmem [shape: f32[2,4,128], index: 6, kind: output, shape index: {}]
  %s7 = sld [smem:[#allocation0]]
  $region127: #{_lambda_.1} parent=0
    _
  %s9 = ssub.s32 1, %s7
  %s10 = scalar_select 0, %s9, %s7
  loop: start=0, step=1, limit=4
  $region2: #{_lambda_.1} parent=0 // loop_pre_header
    _
  $region3: #{_lambda_.1} parent=0 // loop_header
    %s12 = sphi 0, %s16
    %p13 = scmp.ge.s32.totalorder %s12, 4
    %s22 = sphi 0, %s24
    %s25 = sphi 0, %s22
    %s26 = sphi 0, %s25
    %s42 = sphi 0, %s26
    %s46 = sphi 0, %s46
    %s48 = sphi 0, %s46
    %s49 = sphi 0, %s48
    %s63 = sphi 0, %s49
    %s67 = sphi 0, %s67
    %s69 = sphi 0, %s67
    %s70 = sphi 0, %s69
    %s84 = sphi 0, %s70
    %s88 = sphi 0, %s88
    %s90 = sphi 0, %s88
    %s91 = sphi 0, %s90
    %s105 = sphi 0, %s91
    %s109 = sphi 0, %s109
    %s111 = sphi 0, %s109
    %s112 = sphi 0, %s111
    %s126 = sphi 0, %s112
    %s130 = sphi 0, %s130
    %s132 = sphi 0, %s130
    %s133 = sphi 0, %s132
    %s147 = sphi 0, %s133
    %s153 = sphi 0, %s155
    %s156 = sphi 0, %s153
    %s157 = sphi 0, %s156
    %s173 = sphi 0, %s157
  $region4: #{_lambda_.1} parent=0 // loop_header_branch
    %15 = sbr.rel (%p13) target = $region8
  $region5: #{_lambda_.1} parent=0 // loop_body
    %s17 = ssub.s32 %s12, 1
    %s18 = ssub.s32 %s12, 2
    %s19 = sadd.s32 %s12, 1
    %s20 = ssub.s32 %s12, %s19
    %p21 = scmp.eq.s32.totalorder %s20, 0
    %s23 = sadd.s32 %s22, 1
    %s24 = scalar_select %p21, %s22, %s23
    %p27 = pneg %p21
    %p28 = scmp.eq.s32.totalorder %s12, 1
    %p29 = por %p27, %p28
    %p30 = scmp.ne.s32.totalorder %s22, %s25
    %p31 = scmp.eq.s32.totalorder %s12, 0
    %p32 = por %p30, %p31
    %p33 = scmp.ne.s32.totalorder %s22, %s25
    %p34 = scmp.eq.s32.totalorder %s17, 1
    %p35 = por %p33, %p34
    %p36 = scmp.ne.s32.totalorder %s25, %s26
    %p37 = scmp.eq.s32.totalorder %s17, 0
    %p38 = por %p36, %p37
    %p39 = scmp.ne.s32.totalorder %s25, %s26
    %p40 = scmp.eq.s32.totalorder %s18, 1
    %p41 = por %p39, %p40
    %p43 = scmp.ne.s32.totalorder %s26, %s42
    %p44 = scmp.eq.s32.totalorder %s18, 0
    %p45 = por %p43, %p44
    %s47 = sadd.s32 %s46, 1
    %p50 = scmp.eq.s32.totalorder %s12, 1
    %p51 = scmp.ne.s32.totalorder %s46, %s48
    %p52 = scmp.eq.s32.totalorder %s12, 0
    %p53 = por %p51, %p52
    %p54 = scmp.ne.s32.totalorder %s46, %s48
    %p55 = scmp.eq.s32.totalorder %s17, 1
    %p56 = por %p54, %p55
    %p57 = scmp.ne.s32.totalorder %s48, %s49
    %p58 = scmp.eq.s32.totalorder %s17, 0
    %p59 = por %p57, %p58
    %p60 = scmp.ne.s32.totalorder %s48, %s49
    %p61 = scmp.eq.s32.totalorder %s18, 1
    %p62 = por %p60, %p61
    %p64 = scmp.ne.s32.totalorder %s49, %s63
    %p65 = scmp.eq.s32.totalorder %s18, 0
    %p66 = por %p64, %p65
    %s68 = sadd.s32 %s67, 1
    %p71 = scmp.eq.s32.totalorder %s12, 1
    %p72 = scmp.ne.s32.totalorder %s67, %s69
    %p73 = scmp.eq.s32.totalorder %s12, 0
    %p74 = por %p72, %p73
    %p75 = scmp.ne.s32.totalorder %s67, %s69
    %p76 = scmp.eq.s32.totalorder %s17, 1
    %p77 = por %p75, %p76
    %p78 = scmp.ne.s32.totalorder %s69, %s70
    %p79 = scmp.eq.s32.totalorder %s17, 0
    %p80 = por %p78, %p79
    %p81 = scmp.ne.s32.totalorder %s69, %s70
    %p82 = scmp.eq.s32.totalorder %s18, 1
    %p83 = por %p81, %p82
    %p85 = scmp.ne.s32.totalorder %s70, %s84
    %p86 = scmp.eq.s32.totalorder %s18, 0
    %p87 = por %p85, %p86
    %s89 = sadd.s32 %s88, 1
    %p92 = scmp.eq.s32.totalorder %s12, 1
    %p93 = scmp.ne.s32.totalorder %s88, %s90
    %p94 = scmp.eq.s32.totalorder %s12, 0
    %p95 = por %p93, %p94
    %p96 = scmp.ne.s32.totalorder %s88, %s90
    %p97 = scmp.eq.s32.totalorder %s17, 1
    %p98 = por %p96, %p97
    %p99 = scmp.ne.s32.totalorder %s90, %s91
    %p100 = scmp.eq.s32.totalorder %s17, 0
    %p101 = por %p99, %p100
    %p102 = scmp.ne.s32.totalorder %s90, %s91
    %p103 = scmp.eq.s32.totalorder %s18, 1
    %p104 = por %p102, %p103
    %p106 = scmp.ne.s32.totalorder %s91, %s105
    %p107 = scmp.eq.s32.totalorder %s18, 0
    %p108 = por %p106, %p107
    %s110 = sadd.s32 %s109, 1
    %p113 = scmp.eq.s32.totalorder %s12, 1
    %p114 = scmp.ne.s32.totalorder %s109, %s111
    %p115 = scmp.eq.s32.totalorder %s12, 0
    %p116 = por %p114, %p115
    %p117 = scmp.ne.s32.totalorder %s109, %s111
    %p118 = scmp.eq.s32.totalorder %s17, 1
    %p119 = por %p117, %p118
    %p120 = scmp.ne.s32.totalorder %s111, %s112
    %p121 = scmp.eq.s32.totalorder %s17, 0
    %p122 = por %p120, %p121
    %p123 = scmp.ne.s32.totalorder %s111, %s112
    %p124 = scmp.eq.s32.totalorder %s18, 1
    %p125 = por %p123, %p124
    %p127 = scmp.ne.s32.totalorder %s112, %s126
    %p128 = scmp.eq.s32.totalorder %s18, 0
    %p129 = por %p127, %p128
    %s131 = sadd.s32 %s130, 1
    %p134 = scmp.eq.s32.totalorder %s12, 1
    %p135 = scmp.ne.s32.totalorder %s130, %s132
    %p136 = scmp.eq.s32.totalorder %s12, 0
    %p137 = por %p135, %p136
    %p138 = scmp.ne.s32.totalorder %s130, %s132
    %p139 = scmp.eq.s32.totalorder %s17, 1
    %p140 = por %p138, %p139
    %p141 = scmp.ne.s32.totalorder %s132, %s133
    %p142 = scmp.eq.s32.totalorder %s17, 0
    %p143 = por %p141, %p142
    %p144 = scmp.ne.s32.totalorder %s132, %s133
    %p145 = scmp.eq.s32.totalorder %s18, 1
    %p146 = por %p144, %p145
    %p148 = scmp.ne.s32.totalorder %s133, %s147
    %p149 = scmp.eq.s32.totalorder %s18, 0
    %p150 = por %p148, %p149
    %s151 = ssub.s32 %s12, %s19
    %p152 = scmp.eq.s32.totalorder %s151, 0
    %s154 = sadd.s32 %s153, 1
    %s155 = scalar_select %p152, %s153, %s154
    %p158 = pneg %p152
    %p159 = scmp.eq.s32.totalorder %s12, 1
    %p160 = por %p158, %p159
    %p161 = scmp.ne.s32.totalorder %s153, %s156
    %p162 = scmp.eq.s32.totalorder %s12, 0
    %p163 = por %p161, %p162
    %p164 = scmp.ne.s32.totalorder %s153, %s156
    %p165 = scmp.eq.s32.totalorder %s17, 1
    %p166 = por %p164, %p165
    %p167 = scmp.ne.s32.totalorder %s156, %s157
    %p168 = scmp.eq.s32.totalorder %s17, 0
    %p169 = por %p167, %p168
    %p170 = scmp.ne.s32.totalorder %s156, %s157
    %p171 = scmp.eq.s32.totalorder %s18, 1
    %p172 = por %p170, %p171
    %p174 = scmp.ne.s32.totalorder %s157, %s173
    %p175 = scmp.eq.s32.totalorder %s18, 0
    %p176 = por %p174, %p175
    %p177 = scmp.le.s32.totalorder 1, %s12
    %p178 = scmp.lt.s32.totalorder %s12, 3
    %p179 = pnand %p177, %p178
    %p180 = pneg %p179
    // Predicated region
    $region9: #{_lambda_.1} parent=5 // pred_check
      _
    $region10: #{_lambda_.1} parent=5 // pred_check_branch
      %182 = sbr.rel (%p179) target = $region12
    $region11: #{_lambda_.1} parent=5 // pred_region
      %s183 = ssub.s32 %s12, 1
      // Predicated region
      $region13: #{_lambda_.1} parent=11 // pred_check
        %p184 = pneg %p59
      $region14: #{_lambda_.1} parent=11 // pred_check_branch
        %186 = sbr.rel (%p184) target = $region16
      $region15: #{_lambda_.1} parent=11 // pred_region
        _
      $region16: #{_lambda_.1} parent=11 // pred_fallthru
        _
      // Predicated region
      $region17: #{_lambda_.1} parent=11 // pred_check
        %p187 = pneg %p80
      $region18: #{_lambda_.1} parent=11 // pred_check_branch
        %189 = sbr.rel (%p187) target = $region20
      $region19: #{_lambda_.1} parent=11 // pred_region
        _
      $region20: #{_lambda_.1} parent=11 // pred_fallthru
        _
      // Predicated region
      $region21: #{_lambda_.1} parent=11 // pred_check
        %p190 = pneg %p101
      $region22: #{_lambda_.1} parent=11 // pred_check_branch
        %192 = sbr.rel (%p190) target = $region24
      $region23: #{_lambda_.1} parent=11 // pred_region
        _
      $region24: #{_lambda_.1} parent=11 // pred_fallthru
        _
      // Predicated region
      $region25: #{_lambda_.1} parent=11 // pred_check
        %p193 = pneg %p122
      $region26: #{_lambda_.1} parent=11 // pred_check_branch
        %195 = sbr.rel (%p193) target = $region28
      $region27: #{_lambda_.1} parent=11 // pred_region
        _
      $region28: #{_lambda_.1} parent=11 // pred_fallthru
        _
      // Predicated region
      $region29: #{_lambda_.1} parent=11 // pred_check
        %p196 = pneg %p143
      $region30: #{_lambda_.1} parent=11 // pred_check_branch
        %198 = sbr.rel (%p196) target = $region32
      $region31: #{_lambda_.1} parent=11 // pred_region
        _
      $region32: #{_lambda_.1} parent=11 // pred_fallthru
        _
    $region12: #{_lambda_.1} parent=5 // pred_fallthru
      _
    %p199 = scmp.lt.s32.totalorder %s12, 2
    // Predicated region
    $region33: #{_lambda_.1} parent=5 // pred_check
      %p200 = pneg %p199
    $region34: #{_lambda_.1} parent=5 // pred_check_branch
      %202 = sbr.rel (%p200) target = $region36
    $region35: #{_lambda_.1} parent=5 // pred_region
      // Predicated region
      $region37: #{_lambda_.1} parent=35 // pred_check
        %p203 = pneg %p32
      $region38: #{_lambda_.1} parent=35 // pred_check_branch
        %205 = sbr.rel (%p203) target = $region40
      $region39: #{_lambda_.1} parent=35 // pred_region
        %p206 = scmp.lt.s32.totalorder %s12, 1
        %s207 = scalar_select %p206, %s12, 1
        %s208 = smul.addr %s207, 128
        %s209 = smul.addr %s208, 4
        %s210 = scalar_lea.vmem %s0, %s209
      $region40: #{_lambda_.1} parent=35 // pred_fallthru
        _
    $region36: #{_lambda_.1} parent=5 // pred_fallthru
      _
    %p211 = scmp.le.s32.totalorder 1, %s12
    %p212 = scmp.lt.s32.totalorder %s12, 3
    %p213 = pnand %p211, %p212
    %p214 = pneg %p213
    // Predicated region
    $region41: #{_lambda_.1} parent=5 // pred_check
      _
    $region42: #{_lambda_.1} parent=5 // pred_check_branch
      %216 = sbr.rel (%p213) target = $region44
    $region43: #{_lambda_.1} parent=5 // pred_region
      %s217 = ssub.s32 %s12, 1
      %p218 = scmp.lt.s32.totalorder %s17, 1
      %s219 = scalar_select %p218, %s17, 1
      %s220 = smul.addr %s219, 128
      %s221 = smul.addr %s220, 4
      %s222 = scalar_lea.vmem %s0, %s221
      %p223 = pneg %p38
      %p224 = pneg %p35
      %p225 = pneg %p59
      %p226 = pneg %p56
      %p227 = pneg %p80
      %p228 = pneg %p77
      %p229 = pneg %p101
      %p230 = pneg %p98
      %p231 = pneg %p122
      %p232 = pneg %p119
      %p233 = pneg %p143
      %p234 = pneg %p140
      %p235 = pneg %p169
      %p236 = pneg %p166
      %p237 = scmp.lt.s32.totalorder %s17, 1
      %s238 = scalar_select %p237, %s17, 1
      %s239 = smul.addr %s238, 4
      %s240 = scalar_lea.vmem %s6, %s239
      %p241 = scmp.lt.s32.totalorder %s17, 1
      %s242 = scalar_select %p241, %s17, 1
      %s243 = smul.addr %s242, 128
      %s244 = smul.addr %s243, 4
      %s245 = scalar_lea.vmem %s0, %s244
      %p246 = scmp.lt.s32.totalorder %s17, 1
      %s247 = scalar_select %p246, %s17, 1
      %s248 = smul.addr %s247, 4
      %s249 = scalar_lea.vmem %s6, %s248
      %251 = vst [vmem:[#allocation2] sm:$0xff] 0.0
      %252 = vst [vmem:[#allocation2 + $0x8] sm:$0xff] 0.0
      %253 = vst [vmem:[#allocation2 + $0x10] sm:$0xff] 0.0
      %254 = vst [vmem:[#allocation2 + $0x18] sm:$0xff] 0.0
      %255 = vst [vmem:[#allocation2 + $0x20] sm:$0xff] 0.0
      %256 = vst [vmem:[#allocation2 + $0x28] sm:$0xff] 0.0
      %257 = vst [vmem:[#allocation2 + $0x30] sm:$0xff] 0.0
      %258 = vst [vmem:[#allocation2 + $0x38] sm:$0xff] 0.0
      %259 = vst [vmem:[#allocation2 + $0x40] sm:$0xff] 0.0
      %260 = vst [vmem:[#allocation2 + $0x48] sm:$0xff] 0.0
      %261 = vst [vmem:[#allocation2 + $0x50] sm:$0xff] 0.0
      %262 = vst [vmem:[#allocation2 + $0x58] sm:$0xff] 0.0
      %263 = vst [vmem:[#allocation2 + $0x60] sm:$0xff] 0.0
      %264 = vst [vmem:[#allocation2 + $0x68] sm:$0xff] 0.0
      %265 = vst [vmem:[#allocation2 + $0x70] sm:$0xff] 0.0
      %266 = vst [vmem:[#allocation2 + $0x78] sm:$0xff] 0.0
      %267 = vst [vmem:[#allocation2 + $0x80] sm:$0xff] 0.0
      %268 = vst [vmem:[#allocation2 + $0x88] sm:$0xff] 0.0
      %269 = vst [vmem:[#allocation2 + $0x90] sm:$0xff] 0.0
      %270 = vst [vmem:[#allocation2 + $0x98] sm:$0xff] 0.0
      %271 = vst [vmem:[#allocation2 + $0xa0] sm:$0xff] 0.0
      %272 = vst [vmem:[#allocation2 + $0xa8] sm:$0xff] 0.0
      %273 = vst [vmem:[#allocation2 + $0xb0] sm:$0xff] 0.0
      %274 = vst [vmem:[#allocation2 + $0xb8] sm:$0xff] 0.0
      %275 = vst [vmem:[#allocation2 + $0xc0] sm:$0xff] 0.0
      %276 = vst [vmem:[#allocation2 + $0xc8] sm:$0xff] 0.0
      %277 = vst [vmem:[#allocation2 + $0xd0] sm:$0xff] 0.0
      %278 = vst [vmem:[#allocation2 + $0xd8] sm:$0xff] 0.0
      %279 = vst [vmem:[#allocation2 + $0xe0] sm:$0xff] 0.0
      %280 = vst [vmem:[#allocation2 + $0xe8] sm:$0xff] 0.0
      %281 = vst [vmem:[#allocation2 + $0xf0] sm:$0xff] 0.0
      %282 = vst [vmem:[#allocation2 + $0xf8] sm:$0xff] 0.0
      %283 = vst [vmem:[#allocation2 + $0x100] sm:$0xff] 0.0
      %284 = vst [vmem:[#allocation2 + $0x108] sm:$0xff] 0.0
      %285 = vst [vmem:[#allocation2 + $0x110] sm:$0xff] 0.0
      %286 = vst [vmem:[#allocation2 + $0x118] sm:$0xff] 0.0
      %287 = vst [vmem:[#allocation2 + $0x120] sm:$0xff] 0.0
      %288 = vst [vmem:[#allocation2 + $0x128] sm:$0xff] 0.0
      %289 = vst [vmem:[#allocation2 + $0x130] sm:$0xff] 0.0
      %290 = vst [vmem:[#allocation2 + $0x138] sm:$0xff] 0.0
      %291 = vst [vmem:[#allocation2 + $0x140] sm:$0xff] 0.0
      %292 = vst [vmem:[#allocation2 + $0x148] sm:$0xff] 0.0
      %293 = vst [vmem:[#allocation2 + $0x150] sm:$0xff] 0.0
      %294 = vst [vmem:[#allocation2 + $0x158] sm:$0xff] 0.0
      %295 = vst [vmem:[#allocation2 + $0x160] sm:$0xff] 0.0
      %296 = vst [vmem:[#allocation2 + $0x168] sm:$0xff] 0.0
      %297 = vst [vmem:[#allocation2 + $0x170] sm:$0xff] 0.0
      %298 = vst [vmem:[#allocation2 + $0x178] sm:$0xff] 0.0
      %299 = vst [vmem:[#allocation2 + $0x180] sm:$0xff] 0.0
      %300 = vst [vmem:[#allocation2 + $0x188] sm:$0xff] 0.0
      %301 = vst [vmem:[#allocation2 + $0x190] sm:$0xff] 0.0
      %302 = vst [vmem:[#allocation2 + $0x198] sm:$0xff] 0.0
      %303 = vst [vmem:[#allocation2 + $0x1a0] sm:$0xff] 0.0
      %304 = vst [vmem:[#allocation2 + $0x1a8] sm:$0xff] 0.0
      %305 = vst [vmem:[#allocation2 + $0x1b0] sm:$0xff] 0.0
      %306 = vst [vmem:[#allocation2 + $0x1b8] sm:$0xff] 0.0
      %307 = vst [vmem:[#allocation2 + $0x1c0] sm:$0xff] 0.0
      %308 = vst [vmem:[#allocation2 + $0x1c8] sm:$0xff] 0.0
      %309 = vst [vmem:[#allocation2 + $0x1d0] sm:$0xff] 0.0
      %310 = vst [vmem:[#allocation2 + $0x1d8] sm:$0xff] 0.0
      %311 = vst [vmem:[#allocation2 + $0x1e0] sm:$0xff] 0.0
      %312 = vst [vmem:[#allocation2 + $0x1e8] sm:$0xff] 0.0
      %313 = vst [vmem:[#allocation2 + $0x1f0] sm:$0xff] 0.0
      %314 = vst [vmem:[#allocation2 + $0x1f8] sm:$0xff] 0.0
      %315 = vst [vmem:[#allocation2 + $0x200] sm:$0xff] 0.0
      %316 = vst [vmem:[#allocation2 + $0x208] sm:$0xff] 0.0
      %317 = vst [vmem:[#allocation2 + $0x210] sm:$0xff] 0.0
      %318 = vst [vmem:[#allocation2 + $0x218] sm:$0xff] 0.0
      %319 = vst [vmem:[#allocation2 + $0x220] sm:$0xff] 0.0
      %320 = vst [vmem:[#allocation2 + $0x228] sm:$0xff] 0.0
      %321 = vst [vmem:[#allocation2 + $0x230] sm:$0xff] 0.0
      %322 = vst [vmem:[#allocation2 + $0x238] sm:$0xff] 0.0
      %323 = vst [vmem:[#allocation2 + $0x240] sm:$0xff] 0.0
      %324 = vst [vmem:[#allocation2 + $0x248] sm:$0xff] 0.0
      %325 = vst [vmem:[#allocation2 + $0x250] sm:$0xff] 0.0
      %326 = vst [vmem:[#allocation2 + $0x258] sm:$0xff] 0.0
      %327 = vst [vmem:[#allocation2 + $0x260] sm:$0xff] 0.0
      %328 = vst [vmem:[#allocation2 + $0x268] sm:$0xff] 0.0
      %329 = vst [vmem:[#allocation2 + $0x270] sm:$0xff] 0.0
      %330 = vst [vmem:[#allocation2 + $0x278] sm:$0xff] 0.0
      %331 = vst [vmem:[#allocation2 + $0x280] sm:$0xff] 0.0
      %332 = vst [vmem:[#allocation2 + $0x288] sm:$0xff] 0.0
      %333 = vst [vmem:[#allocation2 + $0x290] sm:$0xff] 0.0
      %334 = vst [vmem:[#allocation2 + $0x298] sm:$0xff] 0.0
      %335 = vst [vmem:[#allocation2 + $0x2a0] sm:$0xff] 0.0
      %336 = vst [vmem:[#allocation2 + $0x2a8] sm:$0xff] 0.0
      %337 = vst [vmem:[#allocation2 + $0x2b0] sm:$0xff] 0.0
      %338 = vst [vmem:[#allocation2 + $0x2b8] sm:$0xff] 0.0
      %339 = vst [vmem:[#allocation2 + $0x2c0] sm:$0xff] 0.0
      %340 = vst [vmem:[#allocation2 + $0x2c8] sm:$0xff] 0.0
      %341 = vst [vmem:[#allocation2 + $0x2d0] sm:$0xff] 0.0
      %342 = vst [vmem:[#allocation2 + $0x2d8] sm:$0xff] 0.0
      %343 = vst [vmem:[#allocation2 + $0x2e0] sm:$0xff] 0.0
      %344 = vst [vmem:[#allocation2 + $0x2e8] sm:$0xff] 0.0
      %345 = vst [vmem:[#allocation2 + $0x2f0] sm:$0xff] 0.0
      %346 = vst [vmem:[#allocation2 + $0x2f8] sm:$0xff] 0.0
      %347 = vst [vmem:[#allocation2 + $0x300] sm:$0xff] 0.0
      %348 = vst [vmem:[#allocation2 + $0x308] sm:$0xff] 0.0
      %349 = vst [vmem:[#allocation2 + $0x310] sm:$0xff] 0.0
      %350 = vst [vmem:[#allocation2 + $0x318] sm:$0xff] 0.0
      %351 = vst [vmem:[#allocation2 + $0x320] sm:$0xff] 0.0
      %352 = vst [vmem:[#allocation2 + $0x328] sm:$0xff] 0.0
      %353 = vst [vmem:[#allocation2 + $0x330] sm:$0xff] 0.0
      %354 = vst [vmem:[#allocation2 + $0x338] sm:$0xff] 0.0
      %355 = vst [vmem:[#allocation2 + $0x340] sm:$0xff] 0.0
      %356 = vst [vmem:[#allocation2 + $0x348] sm:$0xff] 0.0
      %357 = vst [vmem:[#allocation2 + $0x350] sm:$0xff] 0.0
      %358 = vst [vmem:[#allocation2 + $0x358] sm:$0xff] 0.0
      %359 = vst [vmem:[#allocation2 + $0x360] sm:$0xff] 0.0
      %360 = vst [vmem:[#allocation2 + $0x368] sm:$0xff] 0.0
      %361 = vst [vmem:[#allocation2 + $0x370] sm:$0xff] 0.0
      %362 = vst [vmem:[#allocation2 + $0x378] sm:$0xff] 0.0
      %363 = vst [vmem:[#allocation2 + $0x380] sm:$0xff] 0.0
      %364 = vst [vmem:[#allocation2 + $0x388] sm:$0xff] 0.0
      %365 = vst [vmem:[#allocation2 + $0x390] sm:$0xff] 0.0
      %366 = vst [vmem:[#allocation2 + $0x398] sm:$0xff] 0.0
      %367 = vst [vmem:[#allocation2 + $0x3a0] sm:$0xff] 0.0
      %368 = vst [vmem:[#allocation2 + $0x3a8] sm:$0xff] 0.0
      %369 = vst [vmem:[#allocation2 + $0x3b0] sm:$0xff] 0.0
      %370 = vst [vmem:[#allocation2 + $0x3b8] sm:$0xff] 0.0
      %371 = vst [vmem:[#allocation2 + $0x3c0] sm:$0xff] 0.0
      %372 = vst [vmem:[#allocation2 + $0x3c8] sm:$0xff] 0.0
      %373 = vst [vmem:[#allocation2 + $0x3d0] sm:$0xff] 0.0
      %374 = vst [vmem:[#allocation2 + $0x3d8] sm:$0xff] 0.0
      %375 = vst [vmem:[#allocation2 + $0x3e0] sm:$0xff] 0.0
      %376 = vst [vmem:[#allocation2 + $0x3e8] sm:$0xff] 0.0
      %377 = vst [vmem:[#allocation2 + $0x3f0] sm:$0xff] 0.0
      %378 = vst [vmem:[#allocation2 + $0x3f8] sm:$0xff] 0.0
      %379 = vst [vmem:[#allocation2 + $0x400] sm:$0xff] 0.0
      %380 = vst [vmem:[#allocation2 + $0x408] sm:$0xff] 0.0
      %381 = vst [vmem:[#allocation2 + $0x410] sm:$0xff] 0.0
      %382 = vst [vmem:[#allocation2 + $0x418] sm:$0xff] 0.0
      %383 = vst [vmem:[#allocation2 + $0x420] sm:$0xff] 0.0
      %384 = vst [vmem:[#allocation2 + $0x428] sm:$0xff] 0.0
      %385 = vst [vmem:[#allocation2 + $0x430] sm:$0xff] 0.0
      %386 = vst [vmem:[#allocation2 + $0x438] sm:$0xff] 0.0
      %387 = vst [vmem:[#allocation2 + $0x440] sm:$0xff] 0.0
      %388 = vst [vmem:[#allocation2 + $0x448] sm:$0xff] 0.0
      %389 = vst [vmem:[#allocation2 + $0x450] sm:$0xff] 0.0
      %390 = vst [vmem:[#allocation2 + $0x458] sm:$0xff] 0.0
      %391 = vst [vmem:[#allocation2 + $0x460] sm:$0xff] 0.0
      %392 = vst [vmem:[#allocation2 + $0x468] sm:$0xff] 0.0
      %393 = vst [vmem:[#allocation2 + $0x470] sm:$0xff] 0.0
      %394 = vst [vmem:[#allocation2 + $0x478] sm:$0xff] 0.0
      %395 = vst [vmem:[#allocation2 + $0x480] sm:$0xff] 0.0
      %396 = vst [vmem:[#allocation2 + $0x488] sm:$0xff] 0.0
      %397 = vst [vmem:[#allocation2 + $0x490] sm:$0xff] 0.0
      %398 = vst [vmem:[#allocation2 + $0x498] sm:$0xff] 0.0
      %399 = vst [vmem:[#allocation2 + $0x4a0] sm:$0xff] 0.0
      %400 = vst [vmem:[#allocation2 + $0x4a8] sm:$0xff] 0.0
      %401 = vst [vmem:[#allocation2 + $0x4b0] sm:$0xff] 0.0
      %402 = vst [vmem:[#allocation2 + $0x4b8] sm:$0xff] 0.0
      %403 = vst [vmem:[#allocation2 + $0x4c0] sm:$0xff] 0.0
      %404 = vst [vmem:[#allocation2 + $0x4c8] sm:$0xff] 0.0
      %405 = vst [vmem:[#allocation2 + $0x4d0] sm:$0xff] 0.0
      %406 = vst [vmem:[#allocation2 + $0x4d8] sm:$0xff] 0.0
      %407 = vst [vmem:[#allocation2 + $0x4e0] sm:$0xff] 0.0
      %408 = vst [vmem:[#allocation2 + $0x4e8] sm:$0xff] 0.0
      %409 = vst [vmem:[#allocation2 + $0x4f0] sm:$0xff] 0.0
      %410 = vst [vmem:[#allocation2 + $0x4f8] sm:$0xff] 0.0
      %411 = vst [vmem:[#allocation2 + $0x500] sm:$0xff] 0.0
      %412 = vst [vmem:[#allocation2 + $0x508] sm:$0xff] 0.0
      %413 = vst [vmem:[#allocation2 + $0x510] sm:$0xff] 0.0
      %414 = vst [vmem:[#allocation2 + $0x518] sm:$0xff] 0.0
      %415 = vst [vmem:[#allocation2 + $0x520] sm:$0xff] 0.0
      %416 = vst [vmem:[#allocation3] sm:$0xff] 0.0
      %417 = vst [vmem:[#allocation3 + $0x8] sm:$0xff] 0.0
      %418 = vst [vmem:[#allocation3 + $0x10] sm:$0xff] 0.0
      %419 = vst [vmem:[#allocation3 + $0x18] sm:$0xff] 0.0
      %420 = vst [vmem:[#allocation3 + $0x20] sm:$0xff] 0.0
      %421 = vst [vmem:[#allocation3 + $0x28] sm:$0xff] 0.0
      %422 = vst [vmem:[#allocation3 + $0x30] sm:$0xff] 0.0
      %423 = vst [vmem:[#allocation3 + $0x38] sm:$0xff] 0.0
      %424 = vst [vmem:[#allocation3 + $0x40] sm:$0xff] 0.0
      %425 = vst [vmem:[#allocation3 + $0x48] sm:$0xff] 0.0
      %426 = vst [vmem:[#allocation3 + $0x50] sm:$0xff] 0.0
      %427 = vst [vmem:[#allocation3 + $0x58] sm:$0xff] 0.0
      %428 = vst [vmem:[#allocation3 + $0x60] sm:$0xff] 0.0
      %429 = vst [vmem:[#allocation3 + $0x68] sm:$0xff] 0.0
      %430 = vst [vmem:[#allocation3 + $0x70] sm:$0xff] 0.0
      %431 = vst [vmem:[#allocation3 + $0x78] sm:$0xff] 0.0
      %432 = vst [vmem:[#allocation3 + $0x80] sm:$0xff] 0.0
      %433 = vst [vmem:[#allocation3 + $0x88] sm:$0xff] 0.0
      %434 = vst [vmem:[#allocation3 + $0x90] sm:$0xff] 0.0
      %435 = vst [vmem:[#allocation3 + $0x98] sm:$0xff] 0.0
      %436 = vst [vmem:[#allocation3 + $0xa0] sm:$0xff] 0.0
      %437 = vst [vmem:[#allocation3 + $0xa8] sm:$0xff] 0.0
      %438 = vst [vmem:[#allocation3 + $0xb0] sm:$0xff] 0.0
      %439 = vst [vmem:[#allocation3 + $0xb8] sm:$0xff] 0.0
      %440 = vst [vmem:[#allocation3 + $0xc0] sm:$0xff] 0.0
      %441 = vst [vmem:[#allocation3 + $0xc8] sm:$0xff] 0.0
      %442 = vst [vmem:[#allocation3 + $0xd0] sm:$0xff] 0.0
      %443 = vst [vmem:[#allocation3 + $0xd8] sm:$0xff] 0.0
      %444 = vst [vmem:[#allocation3 + $0xe0] sm:$0xff] 0.0
      %445 = vst [vmem:[#allocation3 + $0xe8] sm:$0xff] 0.0
      %446 = vst [vmem:[#allocation3 + $0xf0] sm:$0xff] 0.0
      %447 = vst [vmem:[#allocation3 + $0xf8] sm:$0xff] 0.0
      %448 = vst [vmem:[#allocation3 + $0x100] sm:$0xff] 0.0
      %449 = vst [vmem:[#allocation3 + $0x108] sm:$0xff] 0.0
      %450 = vst [vmem:[#allocation3 + $0x110] sm:$0xff] 0.0
      %451 = vst [vmem:[#allocation3 + $0x118] sm:$0xff] 0.0
      %452 = vst [vmem:[#allocation3 + $0x120] sm:$0xff] 0.0
      %453 = vst [vmem:[#allocation3 + $0x128] sm:$0xff] 0.0
      %454 = vst [vmem:[#allocation3 + $0x130] sm:$0xff] 0.0
      %455 = vst [vmem:[#allocation3 + $0x138] sm:$0xff] 0.0
      %456 = vst [vmem:[#allocation3 + $0x140] sm:$0xff] 0.0
      %457 = vst [vmem:[#allocation3 + $0x148] sm:$0xff] 0.0
      %458 = vst [vmem:[#allocation3 + $0x150] sm:$0xff] 0.0
      %459 = vst [vmem:[#allocation3 + $0x158] sm:$0xff] 0.0
      %460 = vst [vmem:[#allocation3 + $0x160] sm:$0xff] 0.0
      %461 = vst [vmem:[#allocation3 + $0x168] sm:$0xff] 0.0
      %462 = vst [vmem:[#allocation3 + $0x170] sm:$0xff] 0.0
      %463 = vst [vmem:[#allocation3 + $0x178] sm:$0xff] 0.0
      %464 = vst [vmem:[#allocation3 + $0x180] sm:$0xff] 0.0
      %465 = vst [vmem:[#allocation3 + $0x188] sm:$0xff] 0.0
      %466 = vst [vmem:[#allocation3 + $0x190] sm:$0xff] 0.0
      %467 = vst [vmem:[#allocation4] sm:$0xff] 0.0
      %468 = vst [vmem:[#allocation4 + $0x8] sm:$0xff] 0.0
      %469 = vst [vmem:[#allocation4 + $0x10] sm:$0xff] 0.0
      %470 = vst [vmem:[#allocation4 + $0x18] sm:$0xff] 0.0
      %471 = vst [vmem:[#allocation4 + $0x20] sm:$0xff] 0.0
      %472 = vst [vmem:[#allocation4 + $0x28] sm:$0xff] 0.0
      %473 = vst [vmem:[#allocation4 + $0x30] sm:$0xff] 0.0
      %474 = vst [vmem:[#allocation4 + $0x38] sm:$0xff] 0.0
      %475 = vst [vmem:[#allocation4 + $0x40] sm:$0xff] 0.0
      %476 = vst [vmem:[#allocation4 + $0x48] sm:$0xff] 0.0
      %477 = vst [vmem:[#allocation4 + $0x50] sm:$0xff] 0.0
      %478 = vst [vmem:[#allocation4 + $0x58] sm:$0xff] 0.0
      %479 = vst [vmem:[#allocation4 + $0x60] sm:$0xff] 0.0
      %480 = vst [vmem:[#allocation4 + $0x68] sm:$0xff] 0.0
      %481 = vst [vmem:[#allocation4 + $0x70] sm:$0xff] 0.0
      %482 = vst [vmem:[#allocation4 + $0x78] sm:$0xff] 0.0
      %483 = vst [vmem:[#allocation4 + $0x80] sm:$0xff] 0.0
      %484 = vst [vmem:[#allocation4 + $0x88] sm:$0xff] 0.0
      %485 = vst [vmem:[#allocation5] sm:$0xff] 0.0
      %486 = vst [vmem:[#allocation5 + $0x8] sm:$0xf] 0.0
      %487 = vst [vmem:[#allocation5 + $0x10] sm:$0xff] 0.0
      %488 = vst [vmem:[#allocation5 + $0x18] sm:$0xf] 0.0
      %489 = vst [vmem:[#allocation5 + $0x20] sm:$0xff] 0.0
      %490 = vst [vmem:[#allocation5 + $0x28] sm:$0xf] 0.0
      %491 = vst [vmem:[#allocation5 + $0x30] sm:$0xff] 0.0
      %492 = vst [vmem:[#allocation5 + $0x38] sm:$0xf] 0.0
      %493 = vst [vmem:[#allocation5 + $0x40] sm:$0xff] 0.0
      %494 = vst [vmem:[#allocation5 + $0x48] sm:$0xf] 0.0
      %495 = vst [vmem:[#allocation6] sm:$0xff] 0.0
      %496 = vst [vmem:[#allocation6 + $0x8] sm:$0x3] 0.0
      %497 = vst [vmem:[#allocation6 + $0x10] sm:$0xff] 0.0
      %498 = vst [vmem:[#allocation6 + $0x18] sm:$0x3] 0.0
      %499 = vst [vmem:[#allocation6 + $0x20] sm:$0xff] 0.0
      %500 = vst [vmem:[#allocation6 + $0x28] sm:$0x3] 0.0
      loop: start=0, step=1, limit=32
      $region45: #{_lambda_.1} parent=43 // loop_pre_header
        _
      $region46: #{_lambda_.1} parent=43 // loop_header
        %s502 = sphi 0, %s506
        %p503 = scmp.ge.s32.totalorder %s502, 32
        %v507 = vphi 0.0, %v592
        %v508 = vphi 0.0, %v606
      $region47: #{_lambda_.1} parent=43 // loop_header_branch
        %505 = sbr.rel (%p503) target = $region51
      $region48: #{_lambda_.1} parent=43 // loop_body
        %s509 = smul.u32 %s502, 32
        %s510 = sshra.s32 %s509, 3
        %s511 = sand.u32 %s509, 7
        %s512 = smul.addr %s510, 4
        %s513 = scalar_lea.vmem %s245, %s512
        %v514 = vld [vmem:[%s513] sm:$0xf]
        %v515 = vld [vmem:[%s513 + $0x4] sm:$0xf]
        %v516 = vld [vmem:[%s513 + $0x8] sm:$0xf]
        %v517 = vld [vmem:[%s513 + $0xc] sm:$0xf]
        %v518 = vld [vmem:[%s1] sm:$0xf]
        %v519 = vld [vmem:[%s1 + $0x4] sm:$0xf]
        %v520 = vld [vmem:[%s1 + $0x8] sm:$0xf]
        %v521 = vld [vmem:[%s1 + $0xc] sm:$0x3]
        %v526 = vunpack.c.l.b16 %v514
        %v527 = vunpack.c.l.b16 %v515
        %v528 = vunpack.c.l.b16 %v516
        %v529 = vunpack.c.l.b16 %v517
        %v530 = vpack.c.b16 %v527, %v526
        %v531 = vpack.c.b16 %v529, %v528
        %v536 = vunpack.c.l.b16 %v518
        %v537 = vunpack.c.l.b16 %v519
        %v538 = vunpack.c.l.b16 %v520
        %v539 = vunpack.c.l.b16 %v521
        %v540 = vpack.c.b16 %v537, %v536
        %v541 = vpack.c.b16 %v539, %v538
        %vm543 = vcmask 220160
        %v545 = vsel %vm543, %v530, 0
        %v548 = vsel %vm543, %v531, 0
        %vm550 = vcmask 1044480
        %vm551 = vcmask 1045504
        %v552 = vsel %vm550, 4294967295, 65535
        %v553 = vsel %vm551, %v552, 0
        %v555 = vand.u32 %v541, %v553
        %557 = vmatpush.bf16.msra.mxu0 0
        %558 = vmatpush.bf16.msra.mxu0 0
        %559 = vmatpush.bf16.msra.mxu0 0
        %560 = vmatpush.bf16.msra.mxu0 0
        %561 = vmatpush.bf16.msra.mxu0 0
        %562 = vmatpush.bf16.msra.mxu0 0
        %563 = vmatpush.bf16.msra.mxu0 %v555
        %564 = vmatpush.bf16.msra.mxu0 %v540
        %565 = vmatmul.bf16.gmra.mxu0 %v545
        %v566 = vpop.f32.mrf.mxu0
        %v567 = vadd.f32 0.0, %v566
        %v568 = vpop.f32.mrf.mxu0
        %v569 = vadd.f32 0.0, %v568
        %570 = vmatmul.bf16.gmra.mxu0 %v548
        %v571 = vpop.f32.mrf.mxu0
        %v572 = vadd.f32 0.0, %v571
        %v573 = vpop.f32.mrf.mxu0
        %v574 = vadd.f32 0.0, %v573
        %575 = vdwg.mxu0
        %s576 = sadd.s32 %s502, 1
        %s577 = smul.u32 %s576, 40
        %s578 = scalar_lea.vmem [#allocation2], %s577
        %579 = vst [vmem:[%s578 + $0x8] sm:$0xff] %v567
        %580 = vst [vmem:[%s578 + $0x10] sm:$0xff] %v569
        %581 = vst [vmem:[%s578 + $0x18] sm:$0xff] %v572
        %582 = vst [vmem:[%s578 + $0x20] sm:$0xff] %v574
        %v583 = vadd.f32 %v567, %v569
        %v584 = vadd.f32 %v583, %v572
        %v585 = vadd.f32 %v584, %v574
        %v586 = vrot.slane %v585, 4
        %v587 = vadd.f32 %v585, %v586
        %v588 = vrot.slane %v587, 2
        %v589 = vadd.f32 %v587, %v588
        %v590 = vrot.slane %v589, 1
        %v591 = vadd.f32 %v589, %v590
        %v592 = vadd.f32 %v507, %v591
        %v593 = vmul.f32 %v567, %v567
        %v594 = vmul.f32 %v569, %v569
        %v595 = vmul.f32 %v572, %v572
        %v596 = vmul.f32 %v574, %v574
        %v597 = vadd.f32 %v593, %v594
        %v598 = vadd.f32 %v597, %v595
        %v599 = vadd.f32 %v598, %v596
        %v600 = vrot.slane %v599, 4
        %v601 = vadd.f32 %v599, %v600
        %v602 = vrot.slane %v601, 2
        %v603 = vadd.f32 %v601, %v602
        %v604 = vrot.slane %v603, 1
        %v605 = vadd.f32 %v603, %v604
        %v606 = vadd.f32 %v508, %v605
      $region49: #{_lambda_.1} parent=43 // loop_footer
        %s506 = sadd.s32 1, %s502
      $region50: #{_lambda_.1} parent=43 // loop_footer_branch
        %501 = sbr.rel target = $region46
      $region51: #{_lambda_.1} parent=43 // loop_exit
        _
      %v607 = vmul.f32 %v507, 0.0009765625
      %v608 = vmul.f32 %v508, 0.0009765625
      %v609 = vmul.f32 %v607, %v607
      %v610 = vsub.f32 %v608, %v609
      %v611 = vmax.f32 %v610, 0.0
      %v612 = vadd.f32 %v611, 1e-05
      %v613 = vrsqrt.pop %v612
      %v614 = vmul.f32 %v613, %v612
      %v615 = vmul.f32 %v614, %v613
      %v616 = vmul.f32 0.5, %v615
      %v617 = vsub.f32 1.5, %v616
      %v618 = vmul.f32 %v613, %v617
      %vm619 = vweird.f32 %v612
      %vm620 = vweird.f32 %v613
      %vm621 = vmor %vm619, %vm620
      %v622 = vsel %vm621, %v613, %v618
      loop: start=0, step=1, limit=32
      $region52: #{_lambda_.1} parent=43 // loop_pre_header
        _
      $region53: #{_lambda_.1} parent=43 // loop_header
        %s624 = sphi 0, %s628
        %p625 = scmp.ge.s32.totalorder %s624, 32
      $region54: #{_lambda_.1} parent=43 // loop_header_branch
        %627 = sbr.rel (%p625) target = $region58
      $region55: #{_lambda_.1} parent=43 // loop_body
        %s629 = sadd.s32 %s624, 1
        %s630 = smul.u32 %s629, 40
        %s631 = scalar_lea.vmem [#allocation2], %s630
        %v632 = vld [vmem:[%s631 + $0x8] sm:$0xff]
        %v633 = vld [vmem:[%s631 + $0x10] sm:$0xff]
        %v634 = vld [vmem:[%s631 + $0x18] sm:$0xff]
        %v635 = vld [vmem:[%s631 + $0x20] sm:$0xff]
        %v636 = vsub.f32 %v632, %v607
        %v637 = vsub.f32 %v633, %v607
        %v638 = vsub.f32 %v634, %v607
        %v639 = vsub.f32 %v635, %v607
        %v640 = vmul.f32 %v636, %v622
        %v641 = vmul.f32 %v637, %v622
        %v642 = vmul.f32 %v638, %v622
        %v643 = vmul.f32 %v639, %v622
        %v644 = vmax.f32 %v640, 0.0
        %v645 = vmax.f32 %v641, 0.0
        %v646 = vmax.f32 %v642, 0.0
        %v647 = vmax.f32 %v643, 0.0
        %648 = vst [vmem:[%s631 + $0x8] sm:$0xff] %v644
        %649 = vst [vmem:[%s631 + $0x10] sm:$0xff] %v645
        %650 = vst [vmem:[%s631 + $0x18] sm:$0xff] %v646
        %651 = vst [vmem:[%s631 + $0x20] sm:$0xff] %v647
      $region56: #{_lambda_.1} parent=43 // loop_footer
        %s628 = sadd.s32 1, %s624
      $region57: #{_lambda_.1} parent=43 // loop_footer_branch
        %623 = sbr.rel target = $region53
      $region58: #{_lambda_.1} parent=43 // loop_exit
        _
      loop: start=0, step=1, limit=16
      $region59: #{_lambda_.1} parent=43 // loop_pre_header
        _
      $region60: #{_lambda_.1} parent=43 // loop_header
        %s653 = sphi 0, %s657
        %p654 = scmp.ge.s32.totalorder %s653, 16
        %v658 = vphi 0.0, %v1450
        %v659 = vphi 0.0, %v1460
      $region61: #{_lambda_.1} parent=43 // loop_header_branch
        %656 = sbr.rel (%p654) target = $region65
      $region62: #{_lambda_.1} parent=43 // loop_body
        %s660 = smul.u32 %s653, 2
        %s661 = smul.u32 %s660, 40
        %s662 = scalar_lea.vmem [#allocation2], %s661
        %s663 = scalar_lea.vmem %s662, 7 [#allocation2]
        %v664 = vld [vmem:[%s663] ss:$2 sm:$0xff]
        %s665 = scalar_lea.vmem %s662, 23 [#allocation2]
        %v666 = vld [vmem:[%s665] ss:$2 sm:$0xff]
        %v667 = vpack.c.bf16 %v666, %v664
        %v668 = vld [vmem:[%s2] sm:$0xf]
        %v669 = vld [vmem:[%s2 + $0x4] sm:$0xf]
        %v670 = vld [vmem:[%s2 + $0x8] sm:$0xf]
        %v671 = vld [vmem:[%s2 + $0xc] sm:$0xf]
        %v672 = vld [vmem:[%s2 + $0x10] sm:$0xf]
        %v673 = vld [vmem:[%s2 + $0x14] sm:$0xf]
        %v674 = vld [vmem:[%s2 + $0x18] sm:$0xf]
        %v675 = vld [vmem:[%s2 + $0x1c] sm:$0xf]
        %v676 = vld [vmem:[%s2 + $0x20] sm:$0xf]
        %v677 = vld [vmem:[%s2 + $0x24] sm:$0xf]
        %v678 = vld [vmem:[%s2 + $0x28] sm:$0xf]
        %v679 = vld [vmem:[%s2 + $0x2c] sm:$0xf]
        %v680 = vld [vmem:[%s2 + $0x30] sm:$0xf]
        %v681 = vld [vmem:[%s2 + $0x34] sm:$0xf]
        %v682 = vld [vmem:[%s2 + $0x38] sm:$0xf]
        %v683 = vld [vmem:[%s2 + $0x3c] sm:$0xf]
        %s684 = scalar_lea.vmem %s662, 8 [#allocation2]
        %v685 = vld [vmem:[%s684] ss:$2 sm:$0xff]
        %s686 = scalar_lea.vmem %s662, 24 [#allocation2]
        %v687 = vld [vmem:[%s686] ss:$2 sm:$0xff]
        %v688 = vpack.c.bf16 %v687, %v685
        %s689 = scalar_lea.vmem %s2, 64
        %v690 = vld [vmem:[%s689] sm:$0xf]
        %v691 = vld [vmem:[%s689 + $0x4] sm:$0xf]
        %v692 = vld [vmem:[%s689 + $0x8] sm:$0xf]
        %v693 = vld [vmem:[%s689 + $0xc] sm:$0xf]
        %v694 = vld [vmem:[%s689 + $0x10] sm:$0xf]
        %v695 = vld [vmem:[%s689 + $0x14] sm:$0xf]
        %v696 = vld [vmem:[%s689 + $0x18] sm:$0xf]
        %v697 = vld [vmem:[%s689 + $0x1c] sm:$0xf]
        %v698 = vld [vmem:[%s689 + $0x20] sm:$0xf]
        %v699 = vld [vmem:[%s689 + $0x24] sm:$0xf]
        %v700 = vld [vmem:[%s689 + $0x28] sm:$0xf]
        %v701 = vld [vmem:[%s689 + $0x2c] sm:$0xf]
        %v702 = vld [vmem:[%s689 + $0x30] sm:$0xf]
        %v703 = vld [vmem:[%s689 + $0x34] sm:$0xf]
        %v704 = vld [vmem:[%s689 + $0x38] sm:$0xf]
        %v705 = vld [vmem:[%s689 + $0x3c] sm:$0xf]
        %v722 = vunpack.c.l.b16 %v690
        %v723 = vunpack.c.l.b16 %v691
        %v724 = vunpack.c.l.b16 %v692
        %v725 = vunpack.c.l.b16 %v693
        %v726 = vunpack.c.l.b16 %v694
        %v727 = vunpack.c.l.b16 %v695
        %v728 = vunpack.c.l.b16 %v696
        %v729 = vunpack.c.l.b16 %v697
        %v730 = vunpack.c.l.b16 %v698
        %v731 = vunpack.c.l.b16 %v699
        %v732 = vunpack.c.l.b16 %v700
        %v733 = vunpack.c.l.b16 %v701
        %v734 = vunpack.c.l.b16 %v702
        %v735 = vunpack.c.l.b16 %v703
        %v736 = vunpack.c.l.b16 %v704
        %v737 = vunpack.c.l.b16 %v705
        %v738 = vpack.c.b16 %v723, %v722
        %v739 = vpack.c.b16 %v725, %v724
        %v740 = vpack.c.b16 %v727, %v726
        %v741 = vpack.c.b16 %v729, %v728
        %v742 = vpack.c.b16 %v731, %v730
        %v743 = vpack.c.b16 %v733, %v732
        %v744 = vpack.c.b16 %v735, %v734
        %v745 = vpack.c.b16 %v737, %v736
        %754 = vmatpush.bf16.msra.mxu0 %v745
        %755 = vmatpush.bf16.msra.mxu0 %v744
        %756 = vmatpush.bf16.msra.mxu0 %v743
        %757 = vmatpush.bf16.msra.mxu0 %v742
        %758 = vmatpush.bf16.msra.mxu0 %v741
        %759 = vmatpush.bf16.msra.mxu0 %v740
        %760 = vmatpush.bf16.msra.mxu0 %v739
        %761 = vmatpush.bf16.msra.mxu0 %v738
        %762 = vmatmul.bf16.gmra.mxu0 %v688
        %v763 = vpop.f32.mrf.mxu0
        %v764 = vadd.f32 0.0, %v763
        %v765 = vpop.f32.mrf.mxu0
        %v766 = vadd.f32 0.0, %v765
        %767 = vdwg.mxu0
        %v784 = vunpack.c.l.b16 %v668
        %v785 = vunpack.c.l.b16 %v669
        %v786 = vunpack.c.l.b16 %v670
        %v787 = vunpack.c.l.b16 %v671
        %v788 = vunpack.c.l.b16 %v672
        %v789 = vunpack.c.l.b16 %v673
        %v790 = vunpack.c.l.b16 %v674
        %v791 = vunpack.c.l.b16 %v675
        %v792 = vunpack.c.l.b16 %v676
        %v793 = vunpack.c.l.b16 %v677
        %v794 = vunpack.c.l.b16 %v678
        %v795 = vunpack.c.l.b16 %v679
        %v796 = vunpack.c.l.b16 %v680
        %v797 = vunpack.c.l.b16 %v681
        %v798 = vunpack.c.l.b16 %v682
        %v799 = vunpack.c.l.b16 %v683
        %v800 = vpack.c.b16 %v785, %v784
        %v801 = vpack.c.b16 %v787, %v786
        %v802 = vpack.c.b16 %v789, %v788
        %v803 = vpack.c.b16 %v791, %v790
        %v804 = vpack.c.b16 %v793, %v792
        %v805 = vpack.c.b16 %v795, %v794
        %v806 = vpack.c.b16 %v797, %v796
        %v807 = vpack.c.b16 %v799, %v798
        %816 = vmatpush.bf16.msra.mxu0 %v807
        %817 = vmatpush.bf16.msra.mxu0 %v806
        %818 = vmatpush.bf16.msra.mxu0 %v805
        %819 = vmatpush.bf16.msra.mxu0 %v804
        %820 = vmatpush.bf16.msra.mxu0 %v803
        %821 = vmatpush.bf16.msra.mxu0 %v802
        %822 = vmatpush.bf16.msra.mxu0 %v801
        %823 = vmatpush.bf16.msra.mxu0 %v800
        %824 = vmatmul.bf16.gmra.mxu0 %v667
        %v825 = vpop.f32.mrf.mxu0
        %v826 = vadd.f32 %v764, %v825
        %v827 = vpop.f32.mrf.mxu0
        %v828 = vadd.f32 %v766, %v827
        %829 = vdwg.mxu0
        %s830 = scalar_lea.vmem %s662, 9 [#allocation2]
        %v831 = vld [vmem:[%s830] ss:$2 sm:$0xff]
        %s832 = scalar_lea.vmem %s662, 25 [#allocation2]
        %v833 = vld [vmem:[%s832] ss:$2 sm:$0xff]
        %v834 = vpack.c.bf16 %v833, %v831
        %s835 = scalar_lea.vmem %s2, 128
        %v836 = vld [vmem:[%s835] sm:$0xf]
        %v837 = vld [vmem:[%s835 + $0x4] sm:$0xf]
        %v838 = vld [vmem:[%s835 + $0x8] sm:$0xf]
        %v839 = vld [vmem:[%s835 + $0xc] sm:$0xf]
        %v840 = vld [vmem:[%s835 + $0x10] sm:$0xf]
        %v841 = vld [vmem:[%s835 + $0x14] sm:$0xf]
        %v842 = vld [vmem:[%s835 + $0x18] sm:$0xf]
        %v843 = vld [vmem:[%s835 + $0x1c] sm:$0xf]
        %v844 = vld [vmem:[%s835 + $0x20] sm:$0xf]
        %v845 = vld [vmem:[%s835 + $0x24] sm:$0xf]
        %v846 = vld [vmem:[%s835 + $0x28] sm:$0xf]
        %v847 = vld [vmem:[%s835 + $0x2c] sm:$0xf]
        %v848 = vld [vmem:[%s835 + $0x30] sm:$0xf]
        %v849 = vld [vmem:[%s835 + $0x34] sm:$0xf]
        %v850 = vld [vmem:[%s835 + $0x38] sm:$0xf]
        %v851 = vld [vmem:[%s835 + $0x3c] sm:$0xf]
        %v868 = vunpack.c.l.b16 %v836
        %v869 = vunpack.c.l.b16 %v837
        %v870 = vunpack.c.l.b16 %v838
        %v871 = vunpack.c.l.b16 %v839
        %v872 = vunpack.c.l.b16 %v840
        %v873 = vunpack.c.l.b16 %v841
        %v874 = vunpack.c.l.b16 %v842
        %v875 = vunpack.c.l.b16 %v843
        %v876 = vunpack.c.l.b16 %v844
        %v877 = vunpack.c.l.b16 %v845
        %v878 = vunpack.c.l.b16 %v846
        %v879 = vunpack.c.l.b16 %v847
        %v880 = vunpack.c.l.b16 %v848
        %v881 = vunpack.c.l.b16 %v849
        %v882 = vunpack.c.l.b16 %v850
        %v883 = vunpack.c.l.b16 %v851
        %v884 = vpack.c.b16 %v869, %v868
        %v885 = vpack.c.b16 %v871, %v870
        %v886 = vpack.c.b16 %v873, %v872
        %v887 = vpack.c.b16 %v875, %v874
        %v888 = vpack.c.b16 %v877, %v876
        %v889 = vpack.c.b16 %v879, %v878
        %v890 = vpack.c.b16 %v881, %v880
        %v891 = vpack.c.b16 %v883, %v882
        %900 = vmatpush.bf16.msra.mxu0 %v891
        %901 = vmatpush.bf16.msra.mxu0 %v890
        %902 = vmatpush.bf16.msra.mxu0 %v889
        %903 = vmatpush.bf16.msra.mxu0 %v888
        %904 = vmatpush.bf16.msra.mxu0 %v887
        %905 = vmatpush.bf16.msra.mxu0 %v886
        %906 = vmatpush.bf16.msra.mxu0 %v885
        %907 = vmatpush.bf16.msra.mxu0 %v884
        %908 = vmatmul.bf16.gmra.mxu0 %v834
        %v909 = vpop.f32.mrf.mxu0
        %v910 = vadd.f32 0.0, %v909
        %v911 = vpop.f32.mrf.mxu0
        %v912 = vadd.f32 0.0, %v911
        %913 = vdwg.mxu0
        %v914 = vadd.f32 %v826, %v910
        %v915 = vadd.f32 %v828, %v912
        %s916 = sadd.s32 %s660, 1
        %s917 = smul.u32 %s916, 40
        %s918 = scalar_lea.vmem [#allocation2], %s917
        %s919 = scalar_lea.vmem %s918, 7 [#allocation2]
        %v920 = vld [vmem:[%s919] ss:$2 sm:$0xff]
        %s921 = scalar_lea.vmem %s918, 23 [#allocation2]
        %v922 = vld [vmem:[%s921] ss:$2 sm:$0xff]
        %v923 = vpack.c.bf16 %v922, %v920
        %s924 = scalar_lea.vmem %s2, 192
        %v925 = vld [vmem:[%s924] sm:$0xf]
        %v926 = vld [vmem:[%s924 + $0x4] sm:$0xf]
        %v927 = vld [vmem:[%s924 + $0x8] sm:$0xf]
        %v928 = vld [vmem:[%s924 + $0xc] sm:$0xf]
        %v929 = vld [vmem:[%s924 + $0x10] sm:$0xf]
        %v930 = vld [vmem:[%s924 + $0x14] sm:$0xf]
        %v931 = vld [vmem:[%s924 + $0x18] sm:$0xf]
        %v932 = vld [vmem:[%s924 + $0x1c] sm:$0xf]
        %v933 = vld [vmem:[%s924 + $0x20] sm:$0xf]
        %v934 = vld [vmem:[%s924 + $0x24] sm:$0xf]
        %v935 = vld [vmem:[%s924 + $0x28] sm:$0xf]
        %v936 = vld [vmem:[%s924 + $0x2c] sm:$0xf]
        %v937 = vld [vmem:[%s924 + $0x30] sm:$0xf]
        %v938 = vld [vmem:[%s924 + $0x34] sm:$0xf]
        %v939 = vld [vmem:[%s924 + $0x38] sm:$0xf]
        %v940 = vld [vmem:[%s924 + $0x3c] sm:$0xf]
        %v957 = vunpack.c.l.b16 %v925
        %v958 = vunpack.c.l.b16 %v926
        %v959 = vunpack.c.l.b16 %v927
        %v960 = vunpack.c.l.b16 %v928
        %v961 = vunpack.c.l.b16 %v929
        %v962 = vunpack.c.l.b16 %v930
        %v963 = vunpack.c.l.b16 %v931
        %v964 = vunpack.c.l.b16 %v932
        %v965 = vunpack.c.l.b16 %v933
        %v966 = vunpack.c.l.b16 %v934
        %v967 = vunpack.c.l.b16 %v935
        %v968 = vunpack.c.l.b16 %v936
        %v969 = vunpack.c.l.b16 %v937
        %v970 = vunpack.c.l.b16 %v938
        %v971 = vunpack.c.l.b16 %v939
        %v972 = vunpack.c.l.b16 %v940
        %v973 = vpack.c.b16 %v958, %v957
        %v974 = vpack.c.b16 %v960, %v959
        %v975 = vpack.c.b16 %v962, %v961
        %v976 = vpack.c.b16 %v964, %v963
        %v977 = vpack.c.b16 %v966, %v965
        %v978 = vpack.c.b16 %v968, %v967
        %v979 = vpack.c.b16 %v970, %v969
        %v980 = vpack.c.b16 %v972, %v971
        %989 = vmatpush.bf16.msra.mxu0 %v980
        %990 = vmatpush.bf16.msra.mxu0 %v979
        %991 = vmatpush.bf16.msra.mxu0 %v978
        %992 = vmatpush.bf16.msra.mxu0 %v977
        %993 = vmatpush.bf16.msra.mxu0 %v976
        %994 = vmatpush.bf16.msra.mxu0 %v975
        %995 = vmatpush.bf16.msra.mxu0 %v974
        %996 = vmatpush.bf16.msra.mxu0 %v973
        %997 = vmatmul.bf16.gmra.mxu0 %v923
        %v998 = vpop.f32.mrf.mxu0
        %v999 = vadd.f32 0.0, %v998
        %v1000 = vpop.f32.mrf.mxu0
        %v1001 = vadd.f32 0.0, %v1000
        %1002 = vdwg.mxu0
        %v1003 = vadd.f32 %v914, %v999
        %v1004 = vadd.f32 %v915, %v1001
        %s1005 = scalar_lea.vmem %s918, 8 [#allocation2]
        %v1006 = vld [vmem:[%s1005] ss:$2 sm:$0xff]
        %s1007 = scalar_lea.vmem %s918, 24 [#allocation2]
        %v1008 = vld [vmem:[%s1007] ss:$2 sm:$0xff]
        %v1009 = vpack.c.bf16 %v1008, %v1006
        %s1010 = scalar_lea.vmem %s2, 256
        %v1011 = vld [vmem:[%s1010] sm:$0xf]
        %v1012 = vld [vmem:[%s1010 + $0x4] sm:$0xf]
        %v1013 = vld [vmem:[%s1010 + $0x8] sm:$0xf]
        %v1014 = vld [vmem:[%s1010 + $0xc] sm:$0xf]
        %v1015 = vld [vmem:[%s1010 + $0x10] sm:$0xf]
        %v1016 = vld [vmem:[%s1010 + $0x14] sm:$0xf]
        %v1017 = vld [vmem:[%s1010 + $0x18] sm:$0xf]
        %v1018 = vld [vmem:[%s1010 + $0x1c] sm:$0xf]
        %v1019 = vld [vmem:[%s1010 + $0x20] sm:$0xf]
        %v1020 = vld [vmem:[%s1010 + $0x24] sm:$0xf]
        %v1021 = vld [vmem:[%s1010 + $0x28] sm:$0xf]
        %v1022 = vld [vmem:[%s1010 + $0x2c] sm:$0xf]
        %v1023 = vld [vmem:[%s1010 + $0x30] sm:$0xf]
        %v1024 = vld [vmem:[%s1010 + $0x34] sm:$0xf]
        %v1025 = vld [vmem:[%s1010 + $0x38] sm:$0xf]
        %v1026 = vld [vmem:[%s1010 + $0x3c] sm:$0xf]
        %v1043 = vunpack.c.l.b16 %v1011
        %v1044 = vunpack.c.l.b16 %v1012
        %v1045 = vunpack.c.l.b16 %v1013
        %v1046 = vunpack.c.l.b16 %v1014
        %v1047 = vunpack.c.l.b16 %v1015
        %v1048 = vunpack.c.l.b16 %v1016
        %v1049 = vunpack.c.l.b16 %v1017
        %v1050 = vunpack.c.l.b16 %v1018
        %v1051 = vunpack.c.l.b16 %v1019
        %v1052 = vunpack.c.l.b16 %v1020
        %v1053 = vunpack.c.l.b16 %v1021
        %v1054 = vunpack.c.l.b16 %v1022
        %v1055 = vunpack.c.l.b16 %v1023
        %v1056 = vunpack.c.l.b16 %v1024
        %v1057 = vunpack.c.l.b16 %v1025
        %v1058 = vunpack.c.l.b16 %v1026
        %v1059 = vpack.c.b16 %v1044, %v1043
        %v1060 = vpack.c.b16 %v1046, %v1045
        %v1061 = vpack.c.b16 %v1048, %v1047
        %v1062 = vpack.c.b16 %v1050, %v1049
        %v1063 = vpack.c.b16 %v1052, %v1051
        %v1064 = vpack.c.b16 %v1054, %v1053
        %v1065 = vpack.c.b16 %v1056, %v1055
        %v1066 = vpack.c.b16 %v1058, %v1057
        %1075 = vmatpush.bf16.msra.mxu0 %v1066
        %1076 = vmatpush.bf16.msra.mxu0 %v1065
        %1077 = vmatpush.bf16.msra.mxu0 %v1064
        %1078 = vmatpush.bf16.msra.mxu0 %v1063
        %1079 = vmatpush.bf16.msra.mxu0 %v1062
        %1080 = vmatpush.bf16.msra.mxu0 %v1061
        %1081 = vmatpush.bf16.msra.mxu0 %v1060
        %1082 = vmatpush.bf16.msra.mxu0 %v1059
        %1083 = vmatmul.bf16.gmra.mxu0 %v1009
        %v1084 = vpop.f32.mrf.mxu0
        %v1085 = vadd.f32 0.0, %v1084
        %v1086 = vpop.f32.mrf.mxu0
        %v1087 = vadd.f32 0.0, %v1086
        %1088 = vdwg.mxu0
        %v1089 = vadd.f32 %v1003, %v1085
        %v1090 = vadd.f32 %v1004, %v1087
        %s1091 = scalar_lea.vmem %s918, 9 [#allocation2]
        %v1092 = vld [vmem:[%s1091] ss:$2 sm:$0xff]
        %s1093 = scalar_lea.vmem %s918, 25 [#allocation2]
        %v1094 = vld [vmem:[%s1093] ss:$2 sm:$0xff]
        %v1095 = vpack.c.bf16 %v1094, %v1092
        %s1096 = scalar_lea.vmem %s2, 320
        %v1097 = vld [vmem:[%s1096] sm:$0xf]
        %v1098 = vld [vmem:[%s1096 + $0x4] sm:$0xf]
        %v1099 = vld [vmem:[%s1096 + $0x8] sm:$0xf]
        %v1100 = vld [vmem:[%s1096 + $0xc] sm:$0xf]
        %v1101 = vld [vmem:[%s1096 + $0x10] sm:$0xf]
        %v1102 = vld [vmem:[%s1096 + $0x14] sm:$0xf]
        %v1103 = vld [vmem:[%s1096 + $0x18] sm:$0xf]
        %v1104 = vld [vmem:[%s1096 + $0x1c] sm:$0xf]
        %v1105 = vld [vmem:[%s1096 + $0x20] sm:$0xf]
        %v1106 = vld [vmem:[%s1096 + $0x24] sm:$0xf]
        %v1107 = vld [vmem:[%s1096 + $0x28] sm:$0xf]
        %v1108 = vld [vmem:[%s1096 + $0x2c] sm:$0xf]
        %v1109 = vld [vmem:[%s1096 + $0x30] sm:$0xf]
        %v1110 = vld [vmem:[%s1096 + $0x34] sm:$0xf]
        %v1111 = vld [vmem:[%s1096 + $0x38] sm:$0xf]
        %v1112 = vld [vmem:[%s1096 + $0x3c] sm:$0xf]
        %v1129 = vunpack.c.l.b16 %v1097
        %v1130 = vunpack.c.l.b16 %v1098
        %v1131 = vunpack.c.l.b16 %v1099
        %v1132 = vunpack.c.l.b16 %v1100
        %v1133 = vunpack.c.l.b16 %v1101
        %v1134 = vunpack.c.l.b16 %v1102
        %v1135 = vunpack.c.l.b16 %v1103
        %v1136 = vunpack.c.l.b16 %v1104
        %v1137 = vunpack.c.l.b16 %v1105
        %v1138 = vunpack.c.l.b16 %v1106
        %v1139 = vunpack.c.l.b16 %v1107
        %v1140 = vunpack.c.l.b16 %v1108
        %v1141 = vunpack.c.l.b16 %v1109
        %v1142 = vunpack.c.l.b16 %v1110
        %v1143 = vunpack.c.l.b16 %v1111
        %v1144 = vunpack.c.l.b16 %v1112
        %v1145 = vpack.c.b16 %v1130, %v1129
        %v1146 = vpack.c.b16 %v1132, %v1131
        %v1147 = vpack.c.b16 %v1134, %v1133
        %v1148 = vpack.c.b16 %v1136, %v1135
        %v1149 = vpack.c.b16 %v1138, %v1137
        %v1150 = vpack.c.b16 %v1140, %v1139
        %v1151 = vpack.c.b16 %v1142, %v1141
        %v1152 = vpack.c.b16 %v1144, %v1143
        %1161 = vmatpush.bf16.msra.mxu0 %v1152
        %1162 = vmatpush.bf16.msra.mxu0 %v1151
        %1163 = vmatpush.bf16.msra.mxu0 %v1150
        %1164 = vmatpush.bf16.msra.mxu0 %v1149
        %1165 = vmatpush.bf16.msra.mxu0 %v1148
        %1166 = vmatpush.bf16.msra.mxu0 %v1147
        %1167 = vmatpush.bf16.msra.mxu0 %v1146
        %1168 = vmatpush.bf16.msra.mxu0 %v1145
        %1169 = vmatmul.bf16.gmra.mxu0 %v1095
        %v1170 = vpop.f32.mrf.mxu0
        %v1171 = vadd.f32 0.0, %v1170
        %v1172 = vpop.f32.mrf.mxu0
        %v1173 = vadd.f32 0.0, %v1172
        %1174 = vdwg.mxu0
        %v1175 = vadd.f32 %v1089, %v1171
        %v1176 = vadd.f32 %v1090, %v1173
        %s1177 = sadd.s32 %s660, 2
        %s1178 = smul.u32 %s1177, 40
        %s1179 = scalar_lea.vmem [#allocation2], %s1178
        %s1180 = scalar_lea.vmem %s1179, 7 [#allocation2]
        %v1181 = vld [vmem:[%s1180] ss:$2 sm:$0xff]
        %s1182 = scalar_lea.vmem %s1179, 23 [#allocation2]
        %v1183 = vld [vmem:[%s1182] ss:$2 sm:$0xff]
        %v1184 = vpack.c.bf16 %v1183, %v1181
        %s1185 = scalar_lea.vmem %s2, 384
        %v1186 = vld [vmem:[%s1185] sm:$0xf]
        %v1187 = vld [vmem:[%s1185 + $0x4] sm:$0xf]
        %v1188 = vld [vmem:[%s1185 + $0x8] sm:$0xf]
        %v1189 = vld [vmem:[%s1185 + $0xc] sm:$0xf]
        %v1190 = vld [vmem:[%s1185 + $0x10] sm:$0xf]
        %v1191 = vld [vmem:[%s1185 + $0x14] sm:$0xf]
        %v1192 = vld [vmem:[%s1185 + $0x18] sm:$0xf]
        %v1193 = vld [vmem:[%s1185 + $0x1c] sm:$0xf]
        %v1194 = vld [vmem:[%s1185 + $0x20] sm:$0xf]
        %v1195 = vld [vmem:[%s1185 + $0x24] sm:$0xf]
        %v1196 = vld [vmem:[%s1185 + $0x28] sm:$0xf]
        %v1197 = vld [vmem:[%s1185 + $0x2c] sm:$0xf]
        %v1198 = vld [vmem:[%s1185 + $0x30] sm:$0xf]
        %v1199 = vld [vmem:[%s1185 + $0x34] sm:$0xf]
        %v1200 = vld [vmem:[%s1185 + $0x38] sm:$0xf]
        %v1201 = vld [vmem:[%s1185 + $0x3c] sm:$0xf]
        %v1218 = vunpack.c.l.b16 %v1186
        %v1219 = vunpack.c.l.b16 %v1187
        %v1220 = vunpack.c.l.b16 %v1188
        %v1221 = vunpack.c.l.b16 %v1189
        %v1222 = vunpack.c.l.b16 %v1190
        %v1223 = vunpack.c.l.b16 %v1191
        %v1224 = vunpack.c.l.b16 %v1192
        %v1225 = vunpack.c.l.b16 %v1193
        %v1226 = vunpack.c.l.b16 %v1194
        %v1227 = vunpack.c.l.b16 %v1195
        %v1228 = vunpack.c.l.b16 %v1196
        %v1229 = vunpack.c.l.b16 %v1197
        %v1230 = vunpack.c.l.b16 %v1198
        %v1231 = vunpack.c.l.b16 %v1199
        %v1232 = vunpack.c.l.b16 %v1200
        %v1233 = vunpack.c.l.b16 %v1201
        %v1234 = vpack.c.b16 %v1219, %v1218
        %v1235 = vpack.c.b16 %v1221, %v1220
        %v1236 = vpack.c.b16 %v1223, %v1222
        %v1237 = vpack.c.b16 %v1225, %v1224
        %v1238 = vpack.c.b16 %v1227, %v1226
        %v1239 = vpack.c.b16 %v1229, %v1228
        %v1240 = vpack.c.b16 %v1231, %v1230
        %v1241 = vpack.c.b16 %v1233, %v1232
        %1250 = vmatpush.bf16.msra.mxu0 %v1241
        %1251 = vmatpush.bf16.msra.mxu0 %v1240
        %1252 = vmatpush.bf16.msra.mxu0 %v1239
        %1253 = vmatpush.bf16.msra.mxu0 %v1238
        %1254 = vmatpush.bf16.msra.mxu0 %v1237
        %1255 = vmatpush.bf16.msra.mxu0 %v1236
        %1256 = vmatpush.bf16.msra.mxu0 %v1235
        %1257 = vmatpush.bf16.msra.mxu0 %v1234
        %1258 = vmatmul.bf16.gmra.mxu0 %v1184
        %v1259 = vpop.f32.mrf.mxu0
        %v1260 = vadd.f32 0.0, %v1259
        %v1261 = vpop.f32.mrf.mxu0
        %v1262 = vadd.f32 0.0, %v1261
        %1263 = vdwg.mxu0
        %v1264 = vadd.f32 %v1175, %v1260
        %v1265 = vadd.f32 %v1176, %v1262
        %s1266 = scalar_lea.vmem %s1179, 8 [#allocation2]
        %v1267 = vld [vmem:[%s1266] ss:$2 sm:$0xff]
        %s1268 = scalar_lea.vmem %s1179, 24 [#allocation2]
        %v1269 = vld [vmem:[%s1268] ss:$2 sm:$0xff]
        %v1270 = vpack.c.bf16 %v1269, %v1267
        %s1271 = scalar_lea.vmem %s2, 448
        %v1272 = vld [vmem:[%s1271] sm:$0xf]
        %v1273 = vld [vmem:[%s1271 + $0x4] sm:$0xf]
        %v1274 = vld [vmem:[%s1271 + $0x8] sm:$0xf]
        %v1275 = vld [vmem:[%s1271 + $0xc] sm:$0xf]
        %v1276 = vld [vmem:[%s1271 + $0x10] sm:$0xf]
        %v1277 = vld [vmem:[%s1271 + $0x14] sm:$0xf]
        %v1278 = vld [vmem:[%s1271 + $0x18] sm:$0xf]
        %v1279 = vld [vmem:[%s1271 + $0x1c] sm:$0xf]
        %v1280 = vld [vmem:[%s1271 + $0x20] sm:$0xf]
        %v1281 = vld [vmem:[%s1271 + $0x24] sm:$0xf]
        %v1282 = vld [vmem:[%s1271 + $0x28] sm:$0xf]
        %v1283 = vld [vmem:[%s1271 + $0x2c] sm:$0xf]
        %v1284 = vld [vmem:[%s1271 + $0x30] sm:$0xf]
        %v1285 = vld [vmem:[%s1271 + $0x34] sm:$0xf]
        %v1286 = vld [vmem:[%s1271 + $0x38] sm:$0xf]
        %v1287 = vld [vmem:[%s1271 + $0x3c] sm:$0xf]
        %v1304 = vunpack.c.l.b16 %v1272
        %v1305 = vunpack.c.l.b16 %v1273
        %v1306 = vunpack.c.l.b16 %v1274
        %v1307 = vunpack.c.l.b16 %v1275
        %v1308 = vunpack.c.l.b16 %v1276
        %v1309 = vunpack.c.l.b16 %v1277
        %v1310 = vunpack.c.l.b16 %v1278
        %v1311 = vunpack.c.l.b16 %v1279
        %v1312 = vunpack.c.l.b16 %v1280
        %v1313 = vunpack.c.l.b16 %v1281
        %v1314 = vunpack.c.l.b16 %v1282
        %v1315 = vunpack.c.l.b16 %v1283
        %v1316 = vunpack.c.l.b16 %v1284
        %v1317 = vunpack.c.l.b16 %v1285
        %v1318 = vunpack.c.l.b16 %v1286
        %v1319 = vunpack.c.l.b16 %v1287
        %v1320 = vpack.c.b16 %v1305, %v1304
        %v1321 = vpack.c.b16 %v1307, %v1306
        %v1322 = vpack.c.b16 %v1309, %v1308
        %v1323 = vpack.c.b16 %v1311, %v1310
        %v1324 = vpack.c.b16 %v1313, %v1312
        %v1325 = vpack.c.b16 %v1315, %v1314
        %v1326 = vpack.c.b16 %v1317, %v1316
        %v1327 = vpack.c.b16 %v1319, %v1318
        %1336 = vmatpush.bf16.msra.mxu0 %v1327
        %1337 = vmatpush.bf16.msra.mxu0 %v1326
        %1338 = vmatpush.bf16.msra.mxu0 %v1325
        %1339 = vmatpush.bf16.msra.mxu0 %v1324
        %1340 = vmatpush.bf16.msra.mxu0 %v1323
        %1341 = vmatpush.bf16.msra.mxu0 %v1322
        %1342 = vmatpush.bf16.msra.mxu0 %v1321
        %1343 = vmatpush.bf16.msra.mxu0 %v1320
        %1344 = vmatmul.bf16.gmra.mxu0 %v1270
        %v1345 = vpop.f32.mrf.mxu0
        %v1346 = vadd.f32 0.0, %v1345
        %v1347 = vpop.f32.mrf.mxu0
        %v1348 = vadd.f32 0.0, %v1347
        %1349 = vdwg.mxu0
        %v1350 = vadd.f32 %v1264, %v1346
        %v1351 = vadd.f32 %v1265, %v1348
        %s1352 = scalar_lea.vmem %s1179, 9 [#allocation2]
        %v1353 = vld [vmem:[%s1352] ss:$2 sm:$0xff]
        %s1354 = scalar_lea.vmem %s1179, 25 [#allocation2]
        %v1355 = vld [vmem:[%s1354] ss:$2 sm:$0xff]
        %v1356 = vpack.c.bf16 %v1355, %v1353
        %s1357 = scalar_lea.vmem %s2, 512
        %v1358 = vld [vmem:[%s1357] sm:$0xf]
        %v1359 = vld [vmem:[%s1357 + $0x4] sm:$0xf]
        %v1360 = vld [vmem:[%s1357 + $0x8] sm:$0xf]
        %v1361 = vld [vmem:[%s1357 + $0xc] sm:$0xf]
        %v1362 = vld [vmem:[%s1357 + $0x10] sm:$0xf]
        %v1363 = vld [vmem:[%s1357 + $0x14] sm:$0xf]
        %v1364 = vld [vmem:[%s1357 + $0x18] sm:$0xf]
        %v1365 = vld [vmem:[%s1357 + $0x1c] sm:$0xf]
        %v1366 = vld [vmem:[%s1357 + $0x20] sm:$0xf]
        %v1367 = vld [vmem:[%s1357 + $0x24] sm:$0xf]
        %v1368 = vld [vmem:[%s1357 + $0x28] sm:$0xf]
        %v1369 = vld [vmem:[%s1357 + $0x2c] sm:$0xf]
        %v1370 = vld [vmem:[%s1357 + $0x30] sm:$0xf]
        %v1371 = vld [vmem:[%s1357 + $0x34] sm:$0xf]
        %v1372 = vld [vmem:[%s1357 + $0x38] sm:$0xf]
        %v1373 = vld [vmem:[%s1357 + $0x3c] sm:$0xf]
        %v1390 = vunpack.c.l.b16 %v1358
        %v1391 = vunpack.c.l.b16 %v1359
        %v1392 = vunpack.c.l.b16 %v1360
        %v1393 = vunpack.c.l.b16 %v1361
        %v1394 = vunpack.c.l.b16 %v1362
        %v1395 = vunpack.c.l.b16 %v1363
        %v1396 = vunpack.c.l.b16 %v1364
        %v1397 = vunpack.c.l.b16 %v1365
        %v1398 = vunpack.c.l.b16 %v1366
        %v1399 = vunpack.c.l.b16 %v1367
        %v1400 = vunpack.c.l.b16 %v1368
        %v1401 = vunpack.c.l.b16 %v1369
        %v1402 = vunpack.c.l.b16 %v1370
        %v1403 = vunpack.c.l.b16 %v1371
        %v1404 = vunpack.c.l.b16 %v1372
        %v1405 = vunpack.c.l.b16 %v1373
        %v1406 = vpack.c.b16 %v1391, %v1390
        %v1407 = vpack.c.b16 %v1393, %v1392
        %v1408 = vpack.c.b16 %v1395, %v1394
        %v1409 = vpack.c.b16 %v1397, %v1396
        %v1410 = vpack.c.b16 %v1399, %v1398
        %v1411 = vpack.c.b16 %v1401, %v1400
        %v1412 = vpack.c.b16 %v1403, %v1402
        %v1413 = vpack.c.b16 %v1405, %v1404
        %1422 = vmatpush.bf16.msra.mxu0 %v1413
        %1423 = vmatpush.bf16.msra.mxu0 %v1412
        %1424 = vmatpush.bf16.msra.mxu0 %v1411
        %1425 = vmatpush.bf16.msra.mxu0 %v1410
        %1426 = vmatpush.bf16.msra.mxu0 %v1409
        %1427 = vmatpush.bf16.msra.mxu0 %v1408
        %1428 = vmatpush.bf16.msra.mxu0 %v1407
        %1429 = vmatpush.bf16.msra.mxu0 %v1406
        %1430 = vmatmul.bf16.gmra.mxu0 %v1356
        %v1431 = vpop.f32.mrf.mxu0
        %v1432 = vadd.f32 0.0, %v1431
        %v1433 = vpop.f32.mrf.mxu0
        %v1434 = vadd.f32 0.0, %v1433
        %1435 = vdwg.mxu0
        %v1436 = vadd.f32 %v1350, %v1432
        %v1437 = vadd.f32 %v1351, %v1434
        %s1438 = sadd.s32 %s653, 1
        %s1439 = smul.u32 %s1438, 24
        %s1440 = scalar_lea.vmem [#allocation3], %s1439
        %1441 = vst [vmem:[%s1440 + $0x8] sm:$0xff] %v1436
        %1442 = vst [vmem:[%s1440 + $0x10] sm:$0xff] %v1437
        %v1443 = vadd.f32 %v1436, %v1437
        %v1444 = vrot.slane %v1443, 4
        %v1445 = vadd.f32 %v1443, %v1444
        %v1446 = vrot.slane %v1445, 2
        %v1447 = vadd.f32 %v1445, %v1446
        %v1448 = vrot.slane %v1447, 1
        %v1449 = vadd.f32 %v1447, %v1448
        %v1450 = vadd.f32 %v658, %v1449
        %v1451 = vmul.f32 %v1436, %v1436
        %v1452 = vmul.f32 %v1437, %v1437
        %v1453 = vadd.f32 %v1451, %v1452
        %v1454 = vrot.slane %v1453, 4
        %v1455 = vadd.f32 %v1453, %v1454
        %v1456 = vrot.slane %v1455, 2
        %v1457 = vadd.f32 %v1455, %v1456
        %v1458 = vrot.slane %v1457, 1
        %v1459 = vadd.f32 %v1457, %v1458
        %v1460 = vadd.f32 %v659, %v1459
      $region63: #{_lambda_.1} parent=43 // loop_footer
        %s657 = sadd.s32 1, %s653
      $region64: #{_lambda_.1} parent=43 // loop_footer_branch
        %652 = sbr.rel target = $region60
      $region65: #{_lambda_.1} parent=43 // loop_exit
        _
      %v1461 = vmul.f32 %v658, 0.00390625
      %v1462 = vmul.f32 %v659, 0.00390625
      %v1463 = vmul.f32 %v1461, %v1461
      %v1464 = vsub.f32 %v1462, %v1463
      %v1465 = vmax.f32 %v1464, 0.0
      %v1466 = vadd.f32 %v1465, 1e-05
      %v1467 = vrsqrt.pop %v1466
      %v1468 = vmul.f32 %v1467, %v1466
      %v1469 = vmul.f32 %v1468, %v1467
      %v1470 = vmul.f32 0.5, %v1469
      %v1471 = vsub.f32 1.5, %v1470
      %v1472 = vmul.f32 %v1467, %v1471
      %vm1473 = vweird.f32 %v1466
      %vm1474 = vweird.f32 %v1467
      %vm1475 = vmor %vm1473, %vm1474
      %v1476 = vsel %vm1475, %v1467, %v1472
      loop: start=0, step=1, limit=16
      $region66: #{_lambda_.1} parent=43 // loop_pre_header
        _
      $region67: #{_lambda_.1} parent=43 // loop_header
        %s1478 = sphi 0, %s1482
        %p1479 = scmp.ge.s32.totalorder %s1478, 16
      $region68: #{_lambda_.1} parent=43 // loop_header_branch
        %1481 = sbr.rel (%p1479) target = $region72
      $region69: #{_lambda_.1} parent=43 // loop_body
        %s1483 = sadd.s32 %s1478, 1
        %s1484 = smul.u32 %s1483, 24
        %s1485 = scalar_lea.vmem [#allocation3], %s1484
        %v1486 = vld [vmem:[%s1485 + $0x8] sm:$0xff]
        %v1487 = vld [vmem:[%s1485 + $0x10] sm:$0xff]
        %v1488 = vsub.f32 %v1486, %v1461
        %v1489 = vsub.f32 %v1487, %v1461
        %v1490 = vmul.f32 %v1488, %v1476
        %v1491 = vmul.f32 %v1489, %v1476
        %v1492 = vmax.f32 %v1490, 0.0
        %v1493 = vmax.f32 %v1491, 0.0
        %1494 = vst [vmem:[%s1485 + $0x8] sm:$0xff] %v1492
        %1495 = vst [vmem:[%s1485 + $0x10] sm:$0xff] %v1493
      $region70: #{_lambda_.1} parent=43 // loop_footer
        %s1482 = sadd.s32 1, %s1478
      $region71: #{_lambda_.1} parent=43 // loop_footer_branch
        %1477 = sbr.rel target = $region67
      $region72: #{_lambda_.1} parent=43 // loop_exit
        _
      loop: start=0, step=1, limit=8
      $region73: #{_lambda_.1} parent=43 // loop_pre_header
        _
      $region74: #{_lambda_.1} parent=43 // loop_header
        %s1497 = sphi 0, %s1501
        %p1498 = scmp.ge.s32.totalorder %s1497, 8
        %v1502 = vphi 0.0, %v2258
        %v1503 = vphi 0.0, %v2266
      $region75: #{_lambda_.1} parent=43 // loop_header_branch
        %1500 = sbr.rel (%p1498) target = $region79
      $region76: #{_lambda_.1} parent=43 // loop_body
        %s1504 = smul.u32 %s1497, 2
        %s1505 = smul.u32 %s1504, 24
        %s1506 = scalar_lea.vmem [#allocation3], %s1505
        %s1507 = scalar_lea.vmem %s1506, 7 [#allocation3]
        %v1508 = vld [vmem:[%s1507] ss:$2 sm:$0xff]
        %v1509 = vpack.c.bf16 %v1508, %v1508
        %v1510 = vld [vmem:[%s3] sm:$0xf]
        %v1511 = vld [vmem:[%s3 + $0x4] sm:$0xf]
        %v1512 = vld [vmem:[%s3 + $0x8] sm:$0xf]
        %v1513 = vld [vmem:[%s3 + $0xc] sm:$0xf]
        %v1514 = vld [vmem:[%s3 + $0x10] sm:$0xf]
        %v1515 = vld [vmem:[%s3 + $0x14] sm:$0xf]
        %v1516 = vld [vmem:[%s3 + $0x18] sm:$0xf]
        %v1517 = vld [vmem:[%s3 + $0x1c] sm:$0xf]
        %v1518 = vld [vmem:[%s3 + $0x20] sm:$0xf]
        %v1519 = vld [vmem:[%s3 + $0x24] sm:$0xf]
        %v1520 = vld [vmem:[%s3 + $0x28] sm:$0xf]
        %v1521 = vld [vmem:[%s3 + $0x2c] sm:$0xf]
        %v1522 = vld [vmem:[%s3 + $0x30] sm:$0xf]
        %v1523 = vld [vmem:[%s3 + $0x34] sm:$0xf]
        %v1524 = vld [vmem:[%s3 + $0x38] sm:$0xf]
        %v1525 = vld [vmem:[%s3 + $0x3c] sm:$0xf]
        %s1526 = scalar_lea.vmem %s1506, 8 [#allocation3]
        %v1527 = vld [vmem:[%s1526] ss:$2 sm:$0xff]
        %v1528 = vpack.c.bf16 %v1527, %v1527
        %s1529 = scalar_lea.vmem %s3, 64
        %v1530 = vld [vmem:[%s1529] sm:$0xf]
        %v1531 = vld [vmem:[%s1529 + $0x4] sm:$0xf]
        %v1532 = vld [vmem:[%s1529 + $0x8] sm:$0xf]
        %v1533 = vld [vmem:[%s1529 + $0xc] sm:$0xf]
        %v1534 = vld [vmem:[%s1529 + $0x10] sm:$0xf]
        %v1535 = vld [vmem:[%s1529 + $0x14] sm:$0xf]
        %v1536 = vld [vmem:[%s1529 + $0x18] sm:$0xf]
        %v1537 = vld [vmem:[%s1529 + $0x1c] sm:$0xf]
        %v1538 = vld [vmem:[%s1529 + $0x20] sm:$0xf]
        %v1539 = vld [vmem:[%s1529 + $0x24] sm:$0xf]
        %v1540 = vld [vmem:[%s1529 + $0x28] sm:$0xf]
        %v1541 = vld [vmem:[%s1529 + $0x2c] sm:$0xf]
        %v1542 = vld [vmem:[%s1529 + $0x30] sm:$0xf]
        %v1543 = vld [vmem:[%s1529 + $0x34] sm:$0xf]
        %v1544 = vld [vmem:[%s1529 + $0x38] sm:$0xf]
        %v1545 = vld [vmem:[%s1529 + $0x3c] sm:$0xf]
        %v1562 = vunpack.c.l.b16 %v1530
        %v1563 = vunpack.c.l.b16 %v1531
        %v1564 = vunpack.c.l.b16 %v1532
        %v1565 = vunpack.c.l.b16 %v1533
        %v1566 = vunpack.c.l.b16 %v1534
        %v1567 = vunpack.c.l.b16 %v1535
        %v1568 = vunpack.c.l.b16 %v1536
        %v1569 = vunpack.c.l.b16 %v1537
        %v1570 = vunpack.c.l.b16 %v1538
        %v1571 = vunpack.c.l.b16 %v1539
        %v1572 = vunpack.c.l.b16 %v1540
        %v1573 = vunpack.c.l.b16 %v1541
        %v1574 = vunpack.c.l.b16 %v1542
        %v1575 = vunpack.c.l.b16 %v1543
        %v1576 = vunpack.c.l.b16 %v1544
        %v1577 = vunpack.c.l.b16 %v1545
        %v1578 = vpack.c.b16 %v1563, %v1562
        %v1579 = vpack.c.b16 %v1565, %v1564
        %v1580 = vpack.c.b16 %v1567, %v1566
        %v1581 = vpack.c.b16 %v1569, %v1568
        %v1582 = vpack.c.b16 %v1571, %v1570
        %v1583 = vpack.c.b16 %v1573, %v1572
        %v1584 = vpack.c.b16 %v1575, %v1574
        %v1585 = vpack.c.b16 %v1577, %v1576
        %1594 = vmatpush.bf16.msra.mxu0 %v1585
        %1595 = vmatpush.bf16.msra.mxu0 %v1584
        %1596 = vmatpush.bf16.msra.mxu0 %v1583
        %1597 = vmatpush.bf16.msra.mxu0 %v1582
        %1598 = vmatpush.bf16.msra.mxu0 %v1581
        %1599 = vmatpush.bf16.msra.mxu0 %v1580
        %1600 = vmatpush.bf16.msra.mxu0 %v1579
        %1601 = vmatpush.bf16.msra.mxu0 %v1578
        %1602 = vmatmul.bf16.gmra.mxu0 %v1528
        %v1603 = vpop.f32.mrf.mxu0
        %v1604 = vadd.f32 0.0, %v1603
        %v1605 = vpop.f32.mrf.mxu0
        %1606 = vdwg.mxu0
        %v1623 = vunpack.c.l.b16 %v1510
        %v1624 = vunpack.c.l.b16 %v1511
        %v1625 = vunpack.c.l.b16 %v1512
        %v1626 = vunpack.c.l.b16 %v1513
        %v1627 = vunpack.c.l.b16 %v1514
        %v1628 = vunpack.c.l.b16 %v1515
        %v1629 = vunpack.c.l.b16 %v1516
        %v1630 = vunpack.c.l.b16 %v1517
        %v1631 = vunpack.c.l.b16 %v1518
        %v1632 = vunpack.c.l.b16 %v1519
        %v1633 = vunpack.c.l.b16 %v1520
        %v1634 = vunpack.c.l.b16 %v1521
        %v1635 = vunpack.c.l.b16 %v1522
        %v1636 = vunpack.c.l.b16 %v1523
        %v1637 = vunpack.c.l.b16 %v1524
        %v1638 = vunpack.c.l.b16 %v1525
        %v1639 = vpack.c.b16 %v1624, %v1623
        %v1640 = vpack.c.b16 %v1626, %v1625
        %v1641 = vpack.c.b16 %v1628, %v1627
        %v1642 = vpack.c.b16 %v1630, %v1629
        %v1643 = vpack.c.b16 %v1632, %v1631
        %v1644 = vpack.c.b16 %v1634, %v1633
        %v1645 = vpack.c.b16 %v1636, %v1635
        %v1646 = vpack.c.b16 %v1638, %v1637
        %1655 = vmatpush.bf16.msra.mxu0 %v1646
        %1656 = vmatpush.bf16.msra.mxu0 %v1645
        %1657 = vmatpush.bf16.msra.mxu0 %v1644
        %1658 = vmatpush.bf16.msra.mxu0 %v1643
        %1659 = vmatpush.bf16.msra.mxu0 %v1642
        %1660 = vmatpush.bf16.msra.mxu0 %v1641
        %1661 = vmatpush.bf16.msra.mxu0 %v1640
        %1662 = vmatpush.bf16.msra.mxu0 %v1639
        %1663 = vmatmul.bf16.gmra.mxu0 %v1509
        %v1664 = vpop.f32.mrf.mxu0
        %v1665 = vadd.f32 %v1604, %v1664
        %v1666 = vpop.f32.mrf.mxu0
        %1667 = vdwg.mxu0
        %s1668 = scalar_lea.vmem %s1506, 9 [#allocation3]
        %v1669 = vld [vmem:[%s1668] ss:$2 sm:$0xff]
        %v1670 = vpack.c.bf16 %v1669, %v1669
        %s1671 = scalar_lea.vmem %s3, 128
        %v1672 = vld [vmem:[%s1671] sm:$0xf]
        %v1673 = vld [vmem:[%s1671 + $0x4] sm:$0xf]
        %v1674 = vld [vmem:[%s1671 + $0x8] sm:$0xf]
        %v1675 = vld [vmem:[%s1671 + $0xc] sm:$0xf]
        %v1676 = vld [vmem:[%s1671 + $0x10] sm:$0xf]
        %v1677 = vld [vmem:[%s1671 + $0x14] sm:$0xf]
        %v1678 = vld [vmem:[%s1671 + $0x18] sm:$0xf]
        %v1679 = vld [vmem:[%s1671 + $0x1c] sm:$0xf]
        %v1680 = vld [vmem:[%s1671 + $0x20] sm:$0xf]
        %v1681 = vld [vmem:[%s1671 + $0x24] sm:$0xf]
        %v1682 = vld [vmem:[%s1671 + $0x28] sm:$0xf]
        %v1683 = vld [vmem:[%s1671 + $0x2c] sm:$0xf]
        %v1684 = vld [vmem:[%s1671 + $0x30] sm:$0xf]
        %v1685 = vld [vmem:[%s1671 + $0x34] sm:$0xf]
        %v1686 = vld [vmem:[%s1671 + $0x38] sm:$0xf]
        %v1687 = vld [vmem:[%s1671 + $0x3c] sm:$0xf]
        %v1704 = vunpack.c.l.b16 %v1672
        %v1705 = vunpack.c.l.b16 %v1673
        %v1706 = vunpack.c.l.b16 %v1674
        %v1707 = vunpack.c.l.b16 %v1675
        %v1708 = vunpack.c.l.b16 %v1676
        %v1709 = vunpack.c.l.b16 %v1677
        %v1710 = vunpack.c.l.b16 %v1678
        %v1711 = vunpack.c.l.b16 %v1679
        %v1712 = vunpack.c.l.b16 %v1680
        %v1713 = vunpack.c.l.b16 %v1681
        %v1714 = vunpack.c.l.b16 %v1682
        %v1715 = vunpack.c.l.b16 %v1683
        %v1716 = vunpack.c.l.b16 %v1684
        %v1717 = vunpack.c.l.b16 %v1685
        %v1718 = vunpack.c.l.b16 %v1686
        %v1719 = vunpack.c.l.b16 %v1687
        %v1720 = vpack.c.b16 %v1705, %v1704
        %v1721 = vpack.c.b16 %v1707, %v1706
        %v1722 = vpack.c.b16 %v1709, %v1708
        %v1723 = vpack.c.b16 %v1711, %v1710
        %v1724 = vpack.c.b16 %v1713, %v1712
        %v1725 = vpack.c.b16 %v1715, %v1714
        %v1726 = vpack.c.b16 %v1717, %v1716
        %v1727 = vpack.c.b16 %v1719, %v1718
        %1736 = vmatpush.bf16.msra.mxu0 %v1727
        %1737 = vmatpush.bf16.msra.mxu0 %v1726
        %1738 = vmatpush.bf16.msra.mxu0 %v1725
        %1739 = vmatpush.bf16.msra.mxu0 %v1724
        %1740 = vmatpush.bf16.msra.mxu0 %v1723
        %1741 = vmatpush.bf16.msra.mxu0 %v1722
        %1742 = vmatpush.bf16.msra.mxu0 %v1721
        %1743 = vmatpush.bf16.msra.mxu0 %v1720
        %1744 = vmatmul.bf16.gmra.mxu0 %v1670
        %v1745 = vpop.f32.mrf.mxu0
        %v1746 = vadd.f32 0.0, %v1745
        %v1747 = vpop.f32.mrf.mxu0
        %1748 = vdwg.mxu0
        %v1749 = vadd.f32 %v1665, %v1746
        %s1750 = sadd.s32 %s1504, 1
        %s1751 = smul.u32 %s1750, 24
        %s1752 = scalar_lea.vmem [#allocation3], %s1751
        %s1753 = scalar_lea.vmem %s1752, 7 [#allocation3]
        %v1754 = vld [vmem:[%s1753] ss:$2 sm:$0xff]
        %v1755 = vpack.c.bf16 %v1754, %v1754
        %s1756 = scalar_lea.vmem %s3, 192
        %v1757 = vld [vmem:[%s1756] sm:$0xf]
        %v1758 = vld [vmem:[%s1756 + $0x4] sm:$0xf]
        %v1759 = vld [vmem:[%s1756 + $0x8] sm:$0xf]
        %v1760 = vld [vmem:[%s1756 + $0xc] sm:$0xf]
        %v1761 = vld [vmem:[%s1756 + $0x10] sm:$0xf]
        %v1762 = vld [vmem:[%s1756 + $0x14] sm:$0xf]
        %v1763 = vld [vmem:[%s1756 + $0x18] sm:$0xf]
        %v1764 = vld [vmem:[%s1756 + $0x1c] sm:$0xf]
        %v1765 = vld [vmem:[%s1756 + $0x20] sm:$0xf]
        %v1766 = vld [vmem:[%s1756 + $0x24] sm:$0xf]
        %v1767 = vld [vmem:[%s1756 + $0x28] sm:$0xf]
        %v1768 = vld [vmem:[%s1756 + $0x2c] sm:$0xf]
        %v1769 = vld [vmem:[%s1756 + $0x30] sm:$0xf]
        %v1770 = vld [vmem:[%s1756 + $0x34] sm:$0xf]
        %v1771 = vld [vmem:[%s1756 + $0x38] sm:$0xf]
        %v1772 = vld [vmem:[%s1756 + $0x3c] sm:$0xf]
        %v1789 = vunpack.c.l.b16 %v1757
        %v1790 = vunpack.c.l.b16 %v1758
        %v1791 = vunpack.c.l.b16 %v1759
        %v1792 = vunpack.c.l.b16 %v1760
        %v1793 = vunpack.c.l.b16 %v1761
        %v1794 = vunpack.c.l.b16 %v1762
        %v1795 = vunpack.c.l.b16 %v1763
        %v1796 = vunpack.c.l.b16 %v1764
        %v1797 = vunpack.c.l.b16 %v1765
        %v1798 = vunpack.c.l.b16 %v1766
        %v1799 = vunpack.c.l.b16 %v1767
        %v1800 = vunpack.c.l.b16 %v1768
        %v1801 = vunpack.c.l.b16 %v1769
        %v1802 = vunpack.c.l.b16 %v1770
        %v1803 = vunpack.c.l.b16 %v1771
        %v1804 = vunpack.c.l.b16 %v1772
        %v1805 = vpack.c.b16 %v1790, %v1789
        %v1806 = vpack.c.b16 %v1792, %v1791
        %v1807 = vpack.c.b16 %v1794, %v1793
        %v1808 = vpack.c.b16 %v1796, %v1795
        %v1809 = vpack.c.b16 %v1798, %v1797
        %v1810 = vpack.c.b16 %v1800, %v1799
        %v1811 = vpack.c.b16 %v1802, %v1801
        %v1812 = vpack.c.b16 %v1804, %v1803
        %1821 = vmatpush.bf16.msra.mxu0 %v1812
        %1822 = vmatpush.bf16.msra.mxu0 %v1811
        %1823 = vmatpush.bf16.msra.mxu0 %v1810
        %1824 = vmatpush.bf16.msra.mxu0 %v1809
        %1825 = vmatpush.bf16.msra.mxu0 %v1808
        %1826 = vmatpush.bf16.msra.mxu0 %v1807
        %1827 = vmatpush.bf16.msra.mxu0 %v1806
        %1828 = vmatpush.bf16.msra.mxu0 %v1805
        %1829 = vmatmul.bf16.gmra.mxu0 %v1755
        %v1830 = vpop.f32.mrf.mxu0
        %v1831 = vadd.f32 0.0, %v1830
        %v1832 = vpop.f32.mrf.mxu0
        %1833 = vdwg.mxu0
        %v1834 = vadd.f32 %v1749, %v1831
        %s1835 = scalar_lea.vmem %s1752, 8 [#allocation3]
        %v1836 = vld [vmem:[%s1835] ss:$2 sm:$0xff]
        %v1837 = vpack.c.bf16 %v1836, %v1836
        %s1838 = scalar_lea.vmem %s3, 256
        %v1839 = vld [vmem:[%s1838] sm:$0xf]
        %v1840 = vld [vmem:[%s1838 + $0x4] sm:$0xf]
        %v1841 = vld [vmem:[%s1838 + $0x8] sm:$0xf]
        %v1842 = vld [vmem:[%s1838 + $0xc] sm:$0xf]
        %v1843 = vld [vmem:[%s1838 + $0x10] sm:$0xf]
        %v1844 = vld [vmem:[%s1838 + $0x14] sm:$0xf]
        %v1845 = vld [vmem:[%s1838 + $0x18] sm:$0xf]
        %v1846 = vld [vmem:[%s1838 + $0x1c] sm:$0xf]
        %v1847 = vld [vmem:[%s1838 + $0x20] sm:$0xf]
        %v1848 = vld [vmem:[%s1838 + $0x24] sm:$0xf]
        %v1849 = vld [vmem:[%s1838 + $0x28] sm:$0xf]
        %v1850 = vld [vmem:[%s1838 + $0x2c] sm:$0xf]
        %v1851 = vld [vmem:[%s1838 + $0x30] sm:$0xf]
        %v1852 = vld [vmem:[%s1838 + $0x34] sm:$0xf]
        %v1853 = vld [vmem:[%s1838 + $0x38] sm:$0xf]
        %v1854 = vld [vmem:[%s1838 + $0x3c] sm:$0xf]
        %v1871 = vunpack.c.l.b16 %v1839
        %v1872 = vunpack.c.l.b16 %v1840
        %v1873 = vunpack.c.l.b16 %v1841
        %v1874 = vunpack.c.l.b16 %v1842
        %v1875 = vunpack.c.l.b16 %v1843
        %v1876 = vunpack.c.l.b16 %v1844
        %v1877 = vunpack.c.l.b16 %v1845
        %v1878 = vunpack.c.l.b16 %v1846
        %v1879 = vunpack.c.l.b16 %v1847
        %v1880 = vunpack.c.l.b16 %v1848
        %v1881 = vunpack.c.l.b16 %v1849
        %v1882 = vunpack.c.l.b16 %v1850
        %v1883 = vunpack.c.l.b16 %v1851
        %v1884 = vunpack.c.l.b16 %v1852
        %v1885 = vunpack.c.l.b16 %v1853
        %v1886 = vunpack.c.l.b16 %v1854
        %v1887 = vpack.c.b16 %v1872, %v1871
        %v1888 = vpack.c.b16 %v1874, %v1873
        %v1889 = vpack.c.b16 %v1876, %v1875
        %v1890 = vpack.c.b16 %v1878, %v1877
        %v1891 = vpack.c.b16 %v1880, %v1879
        %v1892 = vpack.c.b16 %v1882, %v1881
        %v1893 = vpack.c.b16 %v1884, %v1883
        %v1894 = vpack.c.b16 %v1886, %v1885
        %1903 = vmatpush.bf16.msra.mxu0 %v1894
        %1904 = vmatpush.bf16.msra.mxu0 %v1893
        %1905 = vmatpush.bf16.msra.mxu0 %v1892
        %1906 = vmatpush.bf16.msra.mxu0 %v1891
        %1907 = vmatpush.bf16.msra.mxu0 %v1890
        %1908 = vmatpush.bf16.msra.mxu0 %v1889
        %1909 = vmatpush.bf16.msra.mxu0 %v1888
        %1910 = vmatpush.bf16.msra.mxu0 %v1887
        %1911 = vmatmul.bf16.gmra.mxu0 %v1837
        %v1912 = vpop.f32.mrf.mxu0
        %v1913 = vadd.f32 0.0, %v1912
        %v1914 = vpop.f32.mrf.mxu0
        %1915 = vdwg.mxu0
        %v1916 = vadd.f32 %v1834, %v1913
        %s1917 = scalar_lea.vmem %s1752, 9 [#allocation3]
        %v1918 = vld [vmem:[%s1917] ss:$2 sm:$0xff]
        %v1919 = vpack.c.bf16 %v1918, %v1918
        %s1920 = scalar_lea.vmem %s3, 320
        %v1921 = vld [vmem:[%s1920] sm:$0xf]
        %v1922 = vld [vmem:[%s1920 + $0x4] sm:$0xf]
        %v1923 = vld [vmem:[%s1920 + $0x8] sm:$0xf]
        %v1924 = vld [vmem:[%s1920 + $0xc] sm:$0xf]
        %v1925 = vld [vmem:[%s1920 + $0x10] sm:$0xf]
        %v1926 = vld [vmem:[%s1920 + $0x14] sm:$0xf]
        %v1927 = vld [vmem:[%s1920 + $0x18] sm:$0xf]
        %v1928 = vld [vmem:[%s1920 + $0x1c] sm:$0xf]
        %v1929 = vld [vmem:[%s1920 + $0x20] sm:$0xf]
        %v1930 = vld [vmem:[%s1920 + $0x24] sm:$0xf]
        %v1931 = vld [vmem:[%s1920 + $0x28] sm:$0xf]
        %v1932 = vld [vmem:[%s1920 + $0x2c] sm:$0xf]
        %v1933 = vld [vmem:[%s1920 + $0x30] sm:$0xf]
        %v1934 = vld [vmem:[%s1920 + $0x34] sm:$0xf]
        %v1935 = vld [vmem:[%s1920 + $0x38] sm:$0xf]
        %v1936 = vld [vmem:[%s1920 + $0x3c] sm:$0xf]
        %v1953 = vunpack.c.l.b16 %v1921
        %v1954 = vunpack.c.l.b16 %v1922
        %v1955 = vunpack.c.l.b16 %v1923
        %v1956 = vunpack.c.l.b16 %v1924
        %v1957 = vunpack.c.l.b16 %v1925
        %v1958 = vunpack.c.l.b16 %v1926
        %v1959 = vunpack.c.l.b16 %v1927
        %v1960 = vunpack.c.l.b16 %v1928
        %v1961 = vunpack.c.l.b16 %v1929
        %v1962 = vunpack.c.l.b16 %v1930
        %v1963 = vunpack.c.l.b16 %v1931
        %v1964 = vunpack.c.l.b16 %v1932
        %v1965 = vunpack.c.l.b16 %v1933
        %v1966 = vunpack.c.l.b16 %v1934
        %v1967 = vunpack.c.l.b16 %v1935
        %v1968 = vunpack.c.l.b16 %v1936
        %v1969 = vpack.c.b16 %v1954, %v1953
        %v1970 = vpack.c.b16 %v1956, %v1955
        %v1971 = vpack.c.b16 %v1958, %v1957
        %v1972 = vpack.c.b16 %v1960, %v1959
        %v1973 = vpack.c.b16 %v1962, %v1961
        %v1974 = vpack.c.b16 %v1964, %v1963
        %v1975 = vpack.c.b16 %v1966, %v1965
        %v1976 = vpack.c.b16 %v1968, %v1967
        %1985 = vmatpush.bf16.msra.mxu0 %v1976
        %1986 = vmatpush.bf16.msra.mxu0 %v1975
        %1987 = vmatpush.bf16.msra.mxu0 %v1974
        %1988 = vmatpush.bf16.msra.mxu0 %v1973
        %1989 = vmatpush.bf16.msra.mxu0 %v1972
        %1990 = vmatpush.bf16.msra.mxu0 %v1971
        %1991 = vmatpush.bf16.msra.mxu0 %v1970
        %1992 = vmatpush.bf16.msra.mxu0 %v1969
        %1993 = vmatmul.bf16.gmra.mxu0 %v1919
        %v1994 = vpop.f32.mrf.mxu0
        %v1995 = vadd.f32 0.0, %v1994
        %v1996 = vpop.f32.mrf.mxu0
        %1997 = vdwg.mxu0
        %v1998 = vadd.f32 %v1916, %v1995
        %s1999 = sadd.s32 %s1504, 2
        %s2000 = smul.u32 %s1999, 24
        %s2001 = scalar_lea.vmem [#allocation3], %s2000
        %s2002 = scalar_lea.vmem %s2001, 7 [#allocation3]
        %v2003 = vld [vmem:[%s2002] ss:$2 sm:$0xff]
        %v2004 = vpack.c.bf16 %v2003, %v2003
        %s2005 = scalar_lea.vmem %s3, 384
        %v2006 = vld [vmem:[%s2005] sm:$0xf]
        %v2007 = vld [vmem:[%s2005 + $0x4] sm:$0xf]
        %v2008 = vld [vmem:[%s2005 + $0x8] sm:$0xf]
        %v2009 = vld [vmem:[%s2005 + $0xc] sm:$0xf]
        %v2010 = vld [vmem:[%s2005 + $0x10] sm:$0xf]
        %v2011 = vld [vmem:[%s2005 + $0x14] sm:$0xf]
        %v2012 = vld [vmem:[%s2005 + $0x18] sm:$0xf]
        %v2013 = vld [vmem:[%s2005 + $0x1c] sm:$0xf]
        %v2014 = vld [vmem:[%s2005 + $0x20] sm:$0xf]
        %v2015 = vld [vmem:[%s2005 + $0x24] sm:$0xf]
        %v2016 = vld [vmem:[%s2005 + $0x28] sm:$0xf]
        %v2017 = vld [vmem:[%s2005 + $0x2c] sm:$0xf]
        %v2018 = vld [vmem:[%s2005 + $0x30] sm:$0xf]
        %v2019 = vld [vmem:[%s2005 + $0x34] sm:$0xf]
        %v2020 = vld [vmem:[%s2005 + $0x38] sm:$0xf]
        %v2021 = vld [vmem:[%s2005 + $0x3c] sm:$0xf]
        %v2038 = vunpack.c.l.b16 %v2006
        %v2039 = vunpack.c.l.b16 %v2007
        %v2040 = vunpack.c.l.b16 %v2008
        %v2041 = vunpack.c.l.b16 %v2009
        %v2042 = vunpack.c.l.b16 %v2010
        %v2043 = vunpack.c.l.b16 %v2011
        %v2044 = vunpack.c.l.b16 %v2012
        %v2045 = vunpack.c.l.b16 %v2013
        %v2046 = vunpack.c.l.b16 %v2014
        %v2047 = vunpack.c.l.b16 %v2015
        %v2048 = vunpack.c.l.b16 %v2016
        %v2049 = vunpack.c.l.b16 %v2017
        %v2050 = vunpack.c.l.b16 %v2018
        %v2051 = vunpack.c.l.b16 %v2019
        %v2052 = vunpack.c.l.b16 %v2020
        %v2053 = vunpack.c.l.b16 %v2021
        %v2054 = vpack.c.b16 %v2039, %v2038
        %v2055 = vpack.c.b16 %v2041, %v2040
        %v2056 = vpack.c.b16 %v2043, %v2042
        %v2057 = vpack.c.b16 %v2045, %v2044
        %v2058 = vpack.c.b16 %v2047, %v2046
        %v2059 = vpack.c.b16 %v2049, %v2048
        %v2060 = vpack.c.b16 %v2051, %v2050
        %v2061 = vpack.c.b16 %v2053, %v2052
        %2070 = vmatpush.bf16.msra.mxu0 %v2061
        %2071 = vmatpush.bf16.msra.mxu0 %v2060
        %2072 = vmatpush.bf16.msra.mxu0 %v2059
        %2073 = vmatpush.bf16.msra.mxu0 %v2058
        %2074 = vmatpush.bf16.msra.mxu0 %v2057
        %2075 = vmatpush.bf16.msra.mxu0 %v2056
        %2076 = vmatpush.bf16.msra.mxu0 %v2055
        %2077 = vmatpush.bf16.msra.mxu0 %v2054
        %2078 = vmatmul.bf16.gmra.mxu0 %v2004
        %v2079 = vpop.f32.mrf.mxu0
        %v2080 = vadd.f32 0.0, %v2079
        %v2081 = vpop.f32.mrf.mxu0
        %2082 = vdwg.mxu0
        %v2083 = vadd.f32 %v1998, %v2080
        %s2084 = scalar_lea.vmem %s2001, 8 [#allocation3]
        %v2085 = vld [vmem:[%s2084] ss:$2 sm:$0xff]
        %v2086 = vpack.c.bf16 %v2085, %v2085
        %s2087 = scalar_lea.vmem %s3, 448
        %v2088 = vld [vmem:[%s2087] sm:$0xf]
        %v2089 = vld [vmem:[%s2087 + $0x4] sm:$0xf]
        %v2090 = vld [vmem:[%s2087 + $0x8] sm:$0xf]
        %v2091 = vld [vmem:[%s2087 + $0xc] sm:$0xf]
        %v2092 = vld [vmem:[%s2087 + $0x10] sm:$0xf]
        %v2093 = vld [vmem:[%s2087 + $0x14] sm:$0xf]
        %v2094 = vld [vmem:[%s2087 + $0x18] sm:$0xf]
        %v2095 = vld [vmem:[%s2087 + $0x1c] sm:$0xf]
        %v2096 = vld [vmem:[%s2087 + $0x20] sm:$0xf]
        %v2097 = vld [vmem:[%s2087 + $0x24] sm:$0xf]
        %v2098 = vld [vmem:[%s2087 + $0x28] sm:$0xf]
        %v2099 = vld [vmem:[%s2087 + $0x2c] sm:$0xf]
        %v2100 = vld [vmem:[%s2087 + $0x30] sm:$0xf]
        %v2101 = vld [vmem:[%s2087 + $0x34] sm:$0xf]
        %v2102 = vld [vmem:[%s2087 + $0x38] sm:$0xf]
        %v2103 = vld [vmem:[%s2087 + $0x3c] sm:$0xf]
        %v2120 = vunpack.c.l.b16 %v2088
        %v2121 = vunpack.c.l.b16 %v2089
        %v2122 = vunpack.c.l.b16 %v2090
        %v2123 = vunpack.c.l.b16 %v2091
        %v2124 = vunpack.c.l.b16 %v2092
        %v2125 = vunpack.c.l.b16 %v2093
        %v2126 = vunpack.c.l.b16 %v2094
        %v2127 = vunpack.c.l.b16 %v2095
        %v2128 = vunpack.c.l.b16 %v2096
        %v2129 = vunpack.c.l.b16 %v2097
        %v2130 = vunpack.c.l.b16 %v2098
        %v2131 = vunpack.c.l.b16 %v2099
        %v2132 = vunpack.c.l.b16 %v2100
        %v2133 = vunpack.c.l.b16 %v2101
        %v2134 = vunpack.c.l.b16 %v2102
        %v2135 = vunpack.c.l.b16 %v2103
        %v2136 = vpack.c.b16 %v2121, %v2120
        %v2137 = vpack.c.b16 %v2123, %v2122
        %v2138 = vpack.c.b16 %v2125, %v2124
        %v2139 = vpack.c.b16 %v2127, %v2126
        %v2140 = vpack.c.b16 %v2129, %v2128
        %v2141 = vpack.c.b16 %v2131, %v2130
        %v2142 = vpack.c.b16 %v2133, %v2132
        %v2143 = vpack.c.b16 %v2135, %v2134
        %2152 = vmatpush.bf16.msra.mxu0 %v2143
        %2153 = vmatpush.bf16.msra.mxu0 %v2142
        %2154 = vmatpush.bf16.msra.mxu0 %v2141
        %2155 = vmatpush.bf16.msra.mxu0 %v2140
        %2156 = vmatpush.bf16.msra.mxu0 %v2139
        %2157 = vmatpush.bf16.msra.mxu0 %v2138
        %2158 = vmatpush.bf16.msra.mxu0 %v2137
        %2159 = vmatpush.bf16.msra.mxu0 %v2136
        %2160 = vmatmul.bf16.gmra.mxu0 %v2086
        %v2161 = vpop.f32.mrf.mxu0
        %v2162 = vadd.f32 0.0, %v2161
        %v2163 = vpop.f32.mrf.mxu0
        %2164 = vdwg.mxu0
        %v2165 = vadd.f32 %v2083, %v2162
        %s2166 = scalar_lea.vmem %s2001, 9 [#allocation3]
        %v2167 = vld [vmem:[%s2166] ss:$2 sm:$0xff]
        %v2168 = vpack.c.bf16 %v2167, %v2167
        %s2169 = scalar_lea.vmem %s3, 512
        %v2170 = vld [vmem:[%s2169] sm:$0xf]
        %v2171 = vld [vmem:[%s2169 + $0x4] sm:$0xf]
        %v2172 = vld [vmem:[%s2169 + $0x8] sm:$0xf]
        %v2173 = vld [vmem:[%s2169 + $0xc] sm:$0xf]
        %v2174 = vld [vmem:[%s2169 + $0x10] sm:$0xf]
        %v2175 = vld [vmem:[%s2169 + $0x14] sm:$0xf]
        %v2176 = vld [vmem:[%s2169 + $0x18] sm:$0xf]
        %v2177 = vld [vmem:[%s2169 + $0x1c] sm:$0xf]
        %v2178 = vld [vmem:[%s2169 + $0x20] sm:$0xf]
        %v2179 = vld [vmem:[%s2169 + $0x24] sm:$0xf]
        %v2180 = vld [vmem:[%s2169 + $0x28] sm:$0xf]
        %v2181 = vld [vmem:[%s2169 + $0x2c] sm:$0xf]
        %v2182 = vld [vmem:[%s2169 + $0x30] sm:$0xf]
        %v2183 = vld [vmem:[%s2169 + $0x34] sm:$0xf]
        %v2184 = vld [vmem:[%s2169 + $0x38] sm:$0xf]
        %v2185 = vld [vmem:[%s2169 + $0x3c] sm:$0xf]
        %v2202 = vunpack.c.l.b16 %v2170
        %v2203 = vunpack.c.l.b16 %v2171
        %v2204 = vunpack.c.l.b16 %v2172
        %v2205 = vunpack.c.l.b16 %v2173
        %v2206 = vunpack.c.l.b16 %v2174
        %v2207 = vunpack.c.l.b16 %v2175
        %v2208 = vunpack.c.l.b16 %v2176
        %v2209 = vunpack.c.l.b16 %v2177
        %v2210 = vunpack.c.l.b16 %v2178
        %v2211 = vunpack.c.l.b16 %v2179
        %v2212 = vunpack.c.l.b16 %v2180
        %v2213 = vunpack.c.l.b16 %v2181
        %v2214 = vunpack.c.l.b16 %v2182
        %v2215 = vunpack.c.l.b16 %v2183
        %v2216 = vunpack.c.l.b16 %v2184
        %v2217 = vunpack.c.l.b16 %v2185
        %v2218 = vpack.c.b16 %v2203, %v2202
        %v2219 = vpack.c.b16 %v2205, %v2204
        %v2220 = vpack.c.b16 %v2207, %v2206
        %v2221 = vpack.c.b16 %v2209, %v2208
        %v2222 = vpack.c.b16 %v2211, %v2210
        %v2223 = vpack.c.b16 %v2213, %v2212
        %v2224 = vpack.c.b16 %v2215, %v2214
        %v2225 = vpack.c.b16 %v2217, %v2216
        %2234 = vmatpush.bf16.msra.mxu0 %v2225
        %2235 = vmatpush.bf16.msra.mxu0 %v2224
        %2236 = vmatpush.bf16.msra.mxu0 %v2223
        %2237 = vmatpush.bf16.msra.mxu0 %v2222
        %2238 = vmatpush.bf16.msra.mxu0 %v2221
        %2239 = vmatpush.bf16.msra.mxu0 %v2220
        %2240 = vmatpush.bf16.msra.mxu0 %v2219
        %2241 = vmatpush.bf16.msra.mxu0 %v2218
        %2242 = vmatmul.bf16.gmra.mxu0 %v2168
        %v2243 = vpop.f32.mrf.mxu0
        %v2244 = vadd.f32 0.0, %v2243
        %v2245 = vpop.f32.mrf.mxu0
        %2246 = vdwg.mxu0
        %v2247 = vadd.f32 %v2165, %v2244
        %s2248 = sadd.s32 %s1497, 1
        %s2249 = smul.u32 %s2248, 16
        %s2250 = scalar_lea.vmem [#allocation4], %s2249
        %2251 = vst [vmem:[%s2250 + $0x8] sm:$0xff] %v2247
        %v2252 = vrot.slane %v2247, 4
        %v2253 = vadd.f32 %v2247, %v2252
        %v2254 = vrot.slane %v2253, 2
        %v2255 = vadd.f32 %v2253, %v2254
        %v2256 = vrot.slane %v2255, 1
        %v2257 = vadd.f32 %v2255, %v2256
        %v2258 = vadd.f32 %v1502, %v2257
        %v2259 = vmul.f32 %v2247, %v2247
        %v2260 = vrot.slane %v2259, 4
        %v2261 = vadd.f32 %v2259, %v2260
        %v2262 = vrot.slane %v2261, 2
        %v2263 = vadd.f32 %v2261, %v2262
        %v2264 = vrot.slane %v2263, 1
        %v2265 = vadd.f32 %v2263, %v2264
        %v2266 = vadd.f32 %v1503, %v2265
      $region77: #{_lambda_.1} parent=43 // loop_footer
        %s1501 = sadd.s32 1, %s1497
      $region78: #{_lambda_.1} parent=43 // loop_footer_branch
        %1496 = sbr.rel target = $region74
      $region79: #{_lambda_.1} parent=43 // loop_exit
        _
      %v2267 = vmul.f32 %v1502, 0.015625
      %v2268 = vmul.f32 %v1503, 0.015625
      %v2269 = vmul.f32 %v2267, %v2267
      %v2270 = vsub.f32 %v2268, %v2269
      %v2271 = vmax.f32 %v2270, 0.0
      %v2272 = vadd.f32 %v2271, 1e-05
      %v2273 = vrsqrt.pop %v2272
      %v2274 = vmul.f32 %v2273, %v2272
      %v2275 = vmul.f32 %v2274, %v2273
      %v2276 = vmul.f32 0.5, %v2275
      %v2277 = vsub.f32 1.5, %v2276
      %v2278 = vmul.f32 %v2273, %v2277
      %vm2279 = vweird.f32 %v2272
      %vm2280 = vweird.f32 %v2273
      %vm2281 = vmor %vm2279, %vm2280
      %v2282 = vsel %vm2281, %v2273, %v2278
      loop: start=0, step=1, limit=8
      $region80: #{_lambda_.1} parent=43 // loop_pre_header
        _
      $region81: #{_lambda_.1} parent=43 // loop_header
        %s2284 = sphi 0, %s2288
        %p2285 = scmp.ge.s32.totalorder %s2284, 8
      $region82: #{_lambda_.1} parent=43 // loop_header_branch
        %2287 = sbr.rel (%p2285) target = $region86
      $region83: #{_lambda_.1} parent=43 // loop_body
        %s2289 = sadd.s32 %s2284, 1
        %s2290 = smul.u32 %s2289, 16
        %s2291 = scalar_lea.vmem [#allocation4], %s2290
        %v2292 = vld [vmem:[%s2291 + $0x8] sm:$0xff]
        %v2293 = vsub.f32 %v2292, %v2267
        %v2294 = vmul.f32 %v2293, %v2282
        %v2295 = vmax.f32 %v2294, 0.0
        %2296 = vst [vmem:[%s2291 + $0x8] sm:$0xff] %v2295
      $region84: #{_lambda_.1} parent=43 // loop_footer
        %s2288 = sadd.s32 1, %s2284
      $region85: #{_lambda_.1} parent=43 // loop_footer_branch
        %2283 = sbr.rel target = $region81
      $region86: #{_lambda_.1} parent=43 // loop_exit
        _
      loop: start=0, step=1, limit=4
      $region87: #{_lambda_.1} parent=43 // loop_pre_header
        _
      $region88: #{_lambda_.1} parent=43 // loop_header
        %s2298 = sphi 0, %s2302
        %p2299 = scmp.ge.s32.totalorder %s2298, 4
        %v2303 = vphi 0.0, %v3061
        %v2304 = vphi 0.0, %v3070
      $region89: #{_lambda_.1} parent=43 // loop_header_branch
        %2301 = sbr.rel (%p2299) target = $region93
      $region90: #{_lambda_.1} parent=43 // loop_body
        %s2305 = smul.u32 %s2298, 2
        %s2306 = smul.u32 %s2305, 16
        %s2307 = scalar_lea.vmem [#allocation4], %s2306
        %s2308 = scalar_lea.vmem %s2307, 7 [#allocation4]
        %v2309 = vld [vmem:[%s2308] ss:$2 sm:$0xf]
        %v2310 = vpack.c.bf16 %v2309, %v2309
        %v2311 = vld [vmem:[%s4] sm:$0xf]
        %v2312 = vld [vmem:[%s4 + $0x4] sm:$0xf]
        %v2313 = vld [vmem:[%s4 + $0x8] sm:$0xf]
        %v2314 = vld [vmem:[%s4 + $0xc] sm:$0xf]
        %v2315 = vld [vmem:[%s4 + $0x10] sm:$0xf]
        %v2316 = vld [vmem:[%s4 + $0x14] sm:$0xf]
        %v2317 = vld [vmem:[%s4 + $0x18] sm:$0xf]
        %v2318 = vld [vmem:[%s4 + $0x1c] sm:$0xf]
        %v2319 = vld [vmem:[%s4 + $0x20] sm:$0xf]
        %v2320 = vld [vmem:[%s4 + $0x24] sm:$0xf]
        %v2321 = vld [vmem:[%s4 + $0x28] sm:$0xf]
        %v2322 = vld [vmem:[%s4 + $0x2c] sm:$0xf]
        %v2323 = vld [vmem:[%s4 + $0x30] sm:$0xf]
        %v2324 = vld [vmem:[%s4 + $0x34] sm:$0xf]
        %v2325 = vld [vmem:[%s4 + $0x38] sm:$0xf]
        %v2326 = vld [vmem:[%s4 + $0x3c] sm:$0xf]
        %s2327 = scalar_lea.vmem %s2307, 8 [#allocation4]
        %v2328 = vld [vmem:[%s2327] ss:$2 sm:$0xf]
        %v2329 = vpack.c.bf16 %v2328, %v2328
        %s2330 = scalar_lea.vmem %s4, 64
        %v2331 = vld [vmem:[%s2330] sm:$0xf]
        %v2332 = vld [vmem:[%s2330 + $0x4] sm:$0xf]
        %v2333 = vld [vmem:[%s2330 + $0x8] sm:$0xf]
        %v2334 = vld [vmem:[%s2330 + $0xc] sm:$0xf]
        %v2335 = vld [vmem:[%s2330 + $0x10] sm:$0xf]
        %v2336 = vld [vmem:[%s2330 + $0x14] sm:$0xf]
        %v2337 = vld [vmem:[%s2330 + $0x18] sm:$0xf]
        %v2338 = vld [vmem:[%s2330 + $0x1c] sm:$0xf]
        %v2339 = vld [vmem:[%s2330 + $0x20] sm:$0xf]
        %v2340 = vld [vmem:[%s2330 + $0x24] sm:$0xf]
        %v2341 = vld [vmem:[%s2330 + $0x28] sm:$0xf]
        %v2342 = vld [vmem:[%s2330 + $0x2c] sm:$0xf]
        %v2343 = vld [vmem:[%s2330 + $0x30] sm:$0xf]
        %v2344 = vld [vmem:[%s2330 + $0x34] sm:$0xf]
        %v2345 = vld [vmem:[%s2330 + $0x38] sm:$0xf]
        %v2346 = vld [vmem:[%s2330 + $0x3c] sm:$0xf]
        %v2363 = vunpack.c.l.b16 %v2331
        %v2364 = vunpack.c.l.b16 %v2332
        %v2365 = vunpack.c.l.b16 %v2333
        %v2366 = vunpack.c.l.b16 %v2334
        %v2367 = vunpack.c.l.b16 %v2335
        %v2368 = vunpack.c.l.b16 %v2336
        %v2369 = vunpack.c.l.b16 %v2337
        %v2370 = vunpack.c.l.b16 %v2338
        %v2371 = vunpack.c.l.b16 %v2339
        %v2372 = vunpack.c.l.b16 %v2340
        %v2373 = vunpack.c.l.b16 %v2341
        %v2374 = vunpack.c.l.b16 %v2342
        %v2375 = vunpack.c.l.b16 %v2343
        %v2376 = vunpack.c.l.b16 %v2344
        %v2377 = vunpack.c.l.b16 %v2345
        %v2378 = vunpack.c.l.b16 %v2346
        %v2379 = vpack.c.b16 %v2364, %v2363
        %v2380 = vpack.c.b16 %v2366, %v2365
        %v2381 = vpack.c.b16 %v2368, %v2367
        %v2382 = vpack.c.b16 %v2370, %v2369
        %v2383 = vpack.c.b16 %v2372, %v2371
        %v2384 = vpack.c.b16 %v2374, %v2373
        %v2385 = vpack.c.b16 %v2376, %v2375
        %v2386 = vpack.c.b16 %v2378, %v2377
        %2395 = vmatpush.bf16.msra.mxu0 %v2386
        %2396 = vmatpush.bf16.msra.mxu0 %v2385
        %2397 = vmatpush.bf16.msra.mxu0 %v2384
        %2398 = vmatpush.bf16.msra.mxu0 %v2383
        %2399 = vmatpush.bf16.msra.mxu0 %v2382
        %2400 = vmatpush.bf16.msra.mxu0 %v2381
        %2401 = vmatpush.bf16.msra.mxu0 %v2380
        %2402 = vmatpush.bf16.msra.mxu0 %v2379
        %2403 = vmatmul.bf16.gmra.mxu0 %v2329
        %v2404 = vpop.f32.mrf.mxu0
        %v2405 = vadd.f32 0.0, %v2404
        %v2406 = vpop.f32.mrf.mxu0
        %2407 = vdwg.mxu0
        %v2424 = vunpack.c.l.b16 %v2311
        %v2425 = vunpack.c.l.b16 %v2312
        %v2426 = vunpack.c.l.b16 %v2313
        %v2427 = vunpack.c.l.b16 %v2314
        %v2428 = vunpack.c.l.b16 %v2315
        %v2429 = vunpack.c.l.b16 %v2316
        %v2430 = vunpack.c.l.b16 %v2317
        %v2431 = vunpack.c.l.b16 %v2318
        %v2432 = vunpack.c.l.b16 %v2319
        %v2433 = vunpack.c.l.b16 %v2320
        %v2434 = vunpack.c.l.b16 %v2321
        %v2435 = vunpack.c.l.b16 %v2322
        %v2436 = vunpack.c.l.b16 %v2323
        %v2437 = vunpack.c.l.b16 %v2324
        %v2438 = vunpack.c.l.b16 %v2325
        %v2439 = vunpack.c.l.b16 %v2326
        %v2440 = vpack.c.b16 %v2425, %v2424
        %v2441 = vpack.c.b16 %v2427, %v2426
        %v2442 = vpack.c.b16 %v2429, %v2428
        %v2443 = vpack.c.b16 %v2431, %v2430
        %v2444 = vpack.c.b16 %v2433, %v2432
        %v2445 = vpack.c.b16 %v2435, %v2434
        %v2446 = vpack.c.b16 %v2437, %v2436
        %v2447 = vpack.c.b16 %v2439, %v2438
        %2456 = vmatpush.bf16.msra.mxu0 %v2447
        %2457 = vmatpush.bf16.msra.mxu0 %v2446
        %2458 = vmatpush.bf16.msra.mxu0 %v2445
        %2459 = vmatpush.bf16.msra.mxu0 %v2444
        %2460 = vmatpush.bf16.msra.mxu0 %v2443
        %2461 = vmatpush.bf16.msra.mxu0 %v2442
        %2462 = vmatpush.bf16.msra.mxu0 %v2441
        %2463 = vmatpush.bf16.msra.mxu0 %v2440
        %2464 = vmatmul.bf16.gmra.mxu0 %v2310
        %v2465 = vpop.f32.mrf.mxu0
        %v2466 = vadd.f32 %v2405, %v2465
        %v2467 = vpop.f32.mrf.mxu0
        %2468 = vdwg.mxu0
        %s2469 = scalar_lea.vmem %s2307, 9 [#allocation4]
        %v2470 = vld [vmem:[%s2469] ss:$2 sm:$0xf]
        %v2471 = vpack.c.bf16 %v2470, %v2470
        %s2472 = scalar_lea.vmem %s4, 128
        %v2473 = vld [vmem:[%s2472] sm:$0xf]
        %v2474 = vld [vmem:[%s2472 + $0x4] sm:$0xf]
        %v2475 = vld [vmem:[%s2472 + $0x8] sm:$0xf]
        %v2476 = vld [vmem:[%s2472 + $0xc] sm:$0xf]
        %v2477 = vld [vmem:[%s2472 + $0x10] sm:$0xf]
        %v2478 = vld [vmem:[%s2472 + $0x14] sm:$0xf]
        %v2479 = vld [vmem:[%s2472 + $0x18] sm:$0xf]
        %v2480 = vld [vmem:[%s2472 + $0x1c] sm:$0xf]
        %v2481 = vld [vmem:[%s2472 + $0x20] sm:$0xf]
        %v2482 = vld [vmem:[%s2472 + $0x24] sm:$0xf]
        %v2483 = vld [vmem:[%s2472 + $0x28] sm:$0xf]
        %v2484 = vld [vmem:[%s2472 + $0x2c] sm:$0xf]
        %v2485 = vld [vmem:[%s2472 + $0x30] sm:$0xf]
        %v2486 = vld [vmem:[%s2472 + $0x34] sm:$0xf]
        %v2487 = vld [vmem:[%s2472 + $0x38] sm:$0xf]
        %v2488 = vld [vmem:[%s2472 + $0x3c] sm:$0xf]
        %v2505 = vunpack.c.l.b16 %v2473
        %v2506 = vunpack.c.l.b16 %v2474
        %v2507 = vunpack.c.l.b16 %v2475
        %v2508 = vunpack.c.l.b16 %v2476
        %v2509 = vunpack.c.l.b16 %v2477
        %v2510 = vunpack.c.l.b16 %v2478
        %v2511 = vunpack.c.l.b16 %v2479
        %v2512 = vunpack.c.l.b16 %v2480
        %v2513 = vunpack.c.l.b16 %v2481
        %v2514 = vunpack.c.l.b16 %v2482
        %v2515 = vunpack.c.l.b16 %v2483
        %v2516 = vunpack.c.l.b16 %v2484
        %v2517 = vunpack.c.l.b16 %v2485
        %v2518 = vunpack.c.l.b16 %v2486
        %v2519 = vunpack.c.l.b16 %v2487
        %v2520 = vunpack.c.l.b16 %v2488
        %v2521 = vpack.c.b16 %v2506, %v2505
        %v2522 = vpack.c.b16 %v2508, %v2507
        %v2523 = vpack.c.b16 %v2510, %v2509
        %v2524 = vpack.c.b16 %v2512, %v2511
        %v2525 = vpack.c.b16 %v2514, %v2513
        %v2526 = vpack.c.b16 %v2516, %v2515
        %v2527 = vpack.c.b16 %v2518, %v2517
        %v2528 = vpack.c.b16 %v2520, %v2519
        %2537 = vmatpush.bf16.msra.mxu0 %v2528
        %2538 = vmatpush.bf16.msra.mxu0 %v2527
        %2539 = vmatpush.bf16.msra.mxu0 %v2526
        %2540 = vmatpush.bf16.msra.mxu0 %v2525
        %2541 = vmatpush.bf16.msra.mxu0 %v2524
        %2542 = vmatpush.bf16.msra.mxu0 %v2523
        %2543 = vmatpush.bf16.msra.mxu0 %v2522
        %2544 = vmatpush.bf16.msra.mxu0 %v2521
        %2545 = vmatmul.bf16.gmra.mxu0 %v2471
        %v2546 = vpop.f32.mrf.mxu0
        %v2547 = vadd.f32 0.0, %v2546
        %v2548 = vpop.f32.mrf.mxu0
        %2549 = vdwg.mxu0
        %v2550 = vadd.f32 %v2466, %v2547
        %s2551 = sadd.s32 %s2305, 1
        %s2552 = smul.u32 %s2551, 16
        %s2553 = scalar_lea.vmem [#allocation4], %s2552
        %s2554 = scalar_lea.vmem %s2553, 7 [#allocation4]
        %v2555 = vld [vmem:[%s2554] ss:$2 sm:$0xf]
        %v2556 = vpack.c.bf16 %v2555, %v2555
        %s2557 = scalar_lea.vmem %s4, 192
        %v2558 = vld [vmem:[%s2557] sm:$0xf]
        %v2559 = vld [vmem:[%s2557 + $0x4] sm:$0xf]
        %v2560 = vld [vmem:[%s2557 + $0x8] sm:$0xf]
        %v2561 = vld [vmem:[%s2557 + $0xc] sm:$0xf]
        %v2562 = vld [vmem:[%s2557 + $0x10] sm:$0xf]
        %v2563 = vld [vmem:[%s2557 + $0x14] sm:$0xf]
        %v2564 = vld [vmem:[%s2557 + $0x18] sm:$0xf]
        %v2565 = vld [vmem:[%s2557 + $0x1c] sm:$0xf]
        %v2566 = vld [vmem:[%s2557 + $0x20] sm:$0xf]
        %v2567 = vld [vmem:[%s2557 + $0x24] sm:$0xf]
        %v2568 = vld [vmem:[%s2557 + $0x28] sm:$0xf]
        %v2569 = vld [vmem:[%s2557 + $0x2c] sm:$0xf]
        %v2570 = vld [vmem:[%s2557 + $0x30] sm:$0xf]
        %v2571 = vld [vmem:[%s2557 + $0x34] sm:$0xf]
        %v2572 = vld [vmem:[%s2557 + $0x38] sm:$0xf]
        %v2573 = vld [vmem:[%s2557 + $0x3c] sm:$0xf]
        %v2590 = vunpack.c.l.b16 %v2558
        %v2591 = vunpack.c.l.b16 %v2559
        %v2592 = vunpack.c.l.b16 %v2560
        %v2593 = vunpack.c.l.b16 %v2561
        %v2594 = vunpack.c.l.b16 %v2562
        %v2595 = vunpack.c.l.b16 %v2563
        %v2596 = vunpack.c.l.b16 %v2564
        %v2597 = vunpack.c.l.b16 %v2565
        %v2598 = vunpack.c.l.b16 %v2566
        %v2599 = vunpack.c.l.b16 %v2567
        %v2600 = vunpack.c.l.b16 %v2568
        %v2601 = vunpack.c.l.b16 %v2569
        %v2602 = vunpack.c.l.b16 %v2570
        %v2603 = vunpack.c.l.b16 %v2571
        %v2604 = vunpack.c.l.b16 %v2572
        %v2605 = vunpack.c.l.b16 %v2573
        %v2606 = vpack.c.b16 %v2591, %v2590
        %v2607 = vpack.c.b16 %v2593, %v2592
        %v2608 = vpack.c.b16 %v2595, %v2594
        %v2609 = vpack.c.b16 %v2597, %v2596
        %v2610 = vpack.c.b16 %v2599, %v2598
        %v2611 = vpack.c.b16 %v2601, %v2600
        %v2612 = vpack.c.b16 %v2603, %v2602
        %v2613 = vpack.c.b16 %v2605, %v2604
        %2622 = vmatpush.bf16.msra.mxu0 %v2613
        %2623 = vmatpush.bf16.msra.mxu0 %v2612
        %2624 = vmatpush.bf16.msra.mxu0 %v2611
        %2625 = vmatpush.bf16.msra.mxu0 %v2610
        %2626 = vmatpush.bf16.msra.mxu0 %v2609
        %2627 = vmatpush.bf16.msra.mxu0 %v2608
        %2628 = vmatpush.bf16.msra.mxu0 %v2607
        %2629 = vmatpush.bf16.msra.mxu0 %v2606
        %2630 = vmatmul.bf16.gmra.mxu0 %v2556
        %v2631 = vpop.f32.mrf.mxu0
        %v2632 = vadd.f32 0.0, %v2631
        %v2633 = vpop.f32.mrf.mxu0
        %2634 = vdwg.mxu0
        %v2635 = vadd.f32 %v2550, %v2632
        %s2636 = scalar_lea.vmem %s2553, 8 [#allocation4]
        %v2637 = vld [vmem:[%s2636] ss:$2 sm:$0xf]
        %v2638 = vpack.c.bf16 %v2637, %v2637
        %s2639 = scalar_lea.vmem %s4, 256
        %v2640 = vld [vmem:[%s2639] sm:$0xf]
        %v2641 = vld [vmem:[%s2639 + $0x4] sm:$0xf]
        %v2642 = vld [vmem:[%s2639 + $0x8] sm:$0xf]
        %v2643 = vld [vmem:[%s2639 + $0xc] sm:$0xf]
        %v2644 = vld [vmem:[%s2639 + $0x10] sm:$0xf]
        %v2645 = vld [vmem:[%s2639 + $0x14] sm:$0xf]
        %v2646 = vld [vmem:[%s2639 + $0x18] sm:$0xf]
        %v2647 = vld [vmem:[%s2639 + $0x1c] sm:$0xf]
        %v2648 = vld [vmem:[%s2639 + $0x20] sm:$0xf]
        %v2649 = vld [vmem:[%s2639 + $0x24] sm:$0xf]
        %v2650 = vld [vmem:[%s2639 + $0x28] sm:$0xf]
        %v2651 = vld [vmem:[%s2639 + $0x2c] sm:$0xf]
        %v2652 = vld [vmem:[%s2639 + $0x30] sm:$0xf]
        %v2653 = vld [vmem:[%s2639 + $0x34] sm:$0xf]
        %v2654 = vld [vmem:[%s2639 + $0x38] sm:$0xf]
        %v2655 = vld [vmem:[%s2639 + $0x3c] sm:$0xf]
        %v2672 = vunpack.c.l.b16 %v2640
        %v2673 = vunpack.c.l.b16 %v2641
        %v2674 = vunpack.c.l.b16 %v2642
        %v2675 = vunpack.c.l.b16 %v2643
        %v2676 = vunpack.c.l.b16 %v2644
        %v2677 = vunpack.c.l.b16 %v2645
        %v2678 = vunpack.c.l.b16 %v2646
        %v2679 = vunpack.c.l.b16 %v2647
        %v2680 = vunpack.c.l.b16 %v2648
        %v2681 = vunpack.c.l.b16 %v2649
        %v2682 = vunpack.c.l.b16 %v2650
        %v2683 = vunpack.c.l.b16 %v2651
        %v2684 = vunpack.c.l.b16 %v2652
        %v2685 = vunpack.c.l.b16 %v2653
        %v2686 = vunpack.c.l.b16 %v2654
        %v2687 = vunpack.c.l.b16 %v2655
        %v2688 = vpack.c.b16 %v2673, %v2672
        %v2689 = vpack.c.b16 %v2675, %v2674
        %v2690 = vpack.c.b16 %v2677, %v2676
        %v2691 = vpack.c.b16 %v2679, %v2678
        %v2692 = vpack.c.b16 %v2681, %v2680
        %v2693 = vpack.c.b16 %v2683, %v2682
        %v2694 = vpack.c.b16 %v2685, %v2684
        %v2695 = vpack.c.b16 %v2687, %v2686
        %2704 = vmatpush.bf16.msra.mxu0 %v2695
        %2705 = vmatpush.bf16.msra.mxu0 %v2694
        %2706 = vmatpush.bf16.msra.mxu0 %v2693
        %2707 = vmatpush.bf16.msra.mxu0 %v2692
        %2708 = vmatpush.bf16.msra.mxu0 %v2691
        %2709 = vmatpush.bf16.msra.mxu0 %v2690
        %2710 = vmatpush.bf16.msra.mxu0 %v2689
        %2711 = vmatpush.bf16.msra.mxu0 %v2688
        %2712 = vmatmul.bf16.gmra.mxu0 %v2638
        %v2713 = vpop.f32.mrf.mxu0
        %v2714 = vadd.f32 0.0, %v2713
        %v2715 = vpop.f32.mrf.mxu0
        %2716 = vdwg.mxu0
        %v2717 = vadd.f32 %v2635, %v2714
        %s2718 = scalar_lea.vmem %s2553, 9 [#allocation4]
        %v2719 = vld [vmem:[%s2718] ss:$2 sm:$0xf]
        %v2720 = vpack.c.bf16 %v2719, %v2719
        %s2721 = scalar_lea.vmem %s4, 320
        %v2722 = vld [vmem:[%s2721] sm:$0xf]
        %v2723 = vld [vmem:[%s2721 + $0x4] sm:$0xf]
        %v2724 = vld [vmem:[%s2721 + $0x8] sm:$0xf]
        %v2725 = vld [vmem:[%s2721 + $0xc] sm:$0xf]
        %v2726 = vld [vmem:[%s2721 + $0x10] sm:$0xf]
        %v2727 = vld [vmem:[%s2721 + $0x14] sm:$0xf]
        %v2728 = vld [vmem:[%s2721 + $0x18] sm:$0xf]
        %v2729 = vld [vmem:[%s2721 + $0x1c] sm:$0xf]
        %v2730 = vld [vmem:[%s2721 + $0x20] sm:$0xf]
        %v2731 = vld [vmem:[%s2721 + $0x24] sm:$0xf]
        %v2732 = vld [vmem:[%s2721 + $0x28] sm:$0xf]
        %v2733 = vld [vmem:[%s2721 + $0x2c] sm:$0xf]
        %v2734 = vld [vmem:[%s2721 + $0x30] sm:$0xf]
        %v2735 = vld [vmem:[%s2721 + $0x34] sm:$0xf]
        %v2736 = vld [vmem:[%s2721 + $0x38] sm:$0xf]
        %v2737 = vld [vmem:[%s2721 + $0x3c] sm:$0xf]
        %v2754 = vunpack.c.l.b16 %v2722
        %v2755 = vunpack.c.l.b16 %v2723
        %v2756 = vunpack.c.l.b16 %v2724
        %v2757 = vunpack.c.l.b16 %v2725
        %v2758 = vunpack.c.l.b16 %v2726
        %v2759 = vunpack.c.l.b16 %v2727
        %v2760 = vunpack.c.l.b16 %v2728
        %v2761 = vunpack.c.l.b16 %v2729
        %v2762 = vunpack.c.l.b16 %v2730
        %v2763 = vunpack.c.l.b16 %v2731
        %v2764 = vunpack.c.l.b16 %v2732
        %v2765 = vunpack.c.l.b16 %v2733
        %v2766 = vunpack.c.l.b16 %v2734
        %v2767 = vunpack.c.l.b16 %v2735
        %v2768 = vunpack.c.l.b16 %v2736
        %v2769 = vunpack.c.l.b16 %v2737
        %v2770 = vpack.c.b16 %v2755, %v2754
        %v2771 = vpack.c.b16 %v2757, %v2756
        %v2772 = vpack.c.b16 %v2759, %v2758
        %v2773 = vpack.c.b16 %v2761, %v2760
        %v2774 = vpack.c.b16 %v2763, %v2762
        %v2775 = vpack.c.b16 %v2765, %v2764
        %v2776 = vpack.c.b16 %v2767, %v2766
        %v2777 = vpack.c.b16 %v2769, %v2768
        %2786 = vmatpush.bf16.msra.mxu0 %v2777
        %2787 = vmatpush.bf16.msra.mxu0 %v2776
        %2788 = vmatpush.bf16.msra.mxu0 %v2775
        %2789 = vmatpush.bf16.msra.mxu0 %v2774
        %2790 = vmatpush.bf16.msra.mxu0 %v2773
        %2791 = vmatpush.bf16.msra.mxu0 %v2772
        %2792 = vmatpush.bf16.msra.mxu0 %v2771
        %2793 = vmatpush.bf16.msra.mxu0 %v2770
        %2794 = vmatmul.bf16.gmra.mxu0 %v2720
        %v2795 = vpop.f32.mrf.mxu0
        %v2796 = vadd.f32 0.0, %v2795
        %v2797 = vpop.f32.mrf.mxu0
        %2798 = vdwg.mxu0
        %v2799 = vadd.f32 %v2717, %v2796
        %s2800 = sadd.s32 %s2305, 2
        %s2801 = smul.u32 %s2800, 16
        %s2802 = scalar_lea.vmem [#allocation4], %s2801
        %s2803 = scalar_lea.vmem %s2802, 7 [#allocation4]
        %v2804 = vld [vmem:[%s2803] ss:$2 sm:$0xf]
        %v2805 = vpack.c.bf16 %v2804, %v2804
        %s2806 = scalar_lea.vmem %s4, 384
        %v2807 = vld [vmem:[%s2806] sm:$0xf]
        %v2808 = vld [vmem:[%s2806 + $0x4] sm:$0xf]
        %v2809 = vld [vmem:[%s2806 + $0x8] sm:$0xf]
        %v2810 = vld [vmem:[%s2806 + $0xc] sm:$0xf]
        %v2811 = vld [vmem:[%s2806 + $0x10] sm:$0xf]
        %v2812 = vld [vmem:[%s2806 + $0x14] sm:$0xf]
        %v2813 = vld [vmem:[%s2806 + $0x18] sm:$0xf]
        %v2814 = vld [vmem:[%s2806 + $0x1c] sm:$0xf]
        %v2815 = vld [vmem:[%s2806 + $0x20] sm:$0xf]
        %v2816 = vld [vmem:[%s2806 + $0x24] sm:$0xf]
        %v2817 = vld [vmem:[%s2806 + $0x28] sm:$0xf]
        %v2818 = vld [vmem:[%s2806 + $0x2c] sm:$0xf]
        %v2819 = vld [vmem:[%s2806 + $0x30] sm:$0xf]
        %v2820 = vld [vmem:[%s2806 + $0x34] sm:$0xf]
        %v2821 = vld [vmem:[%s2806 + $0x38] sm:$0xf]
        %v2822 = vld [vmem:[%s2806 + $0x3c] sm:$0xf]
        %v2839 = vunpack.c.l.b16 %v2807
        %v2840 = vunpack.c.l.b16 %v2808
        %v2841 = vunpack.c.l.b16 %v2809
        %v2842 = vunpack.c.l.b16 %v2810
        %v2843 = vunpack.c.l.b16 %v2811
        %v2844 = vunpack.c.l.b16 %v2812
        %v2845 = vunpack.c.l.b16 %v2813
        %v2846 = vunpack.c.l.b16 %v2814
        %v2847 = vunpack.c.l.b16 %v2815
        %v2848 = vunpack.c.l.b16 %v2816
        %v2849 = vunpack.c.l.b16 %v2817
        %v2850 = vunpack.c.l.b16 %v2818
        %v2851 = vunpack.c.l.b16 %v2819
        %v2852 = vunpack.c.l.b16 %v2820
        %v2853 = vunpack.c.l.b16 %v2821
        %v2854 = vunpack.c.l.b16 %v2822
        %v2855 = vpack.c.b16 %v2840, %v2839
        %v2856 = vpack.c.b16 %v2842, %v2841
        %v2857 = vpack.c.b16 %v2844, %v2843
        %v2858 = vpack.c.b16 %v2846, %v2845
        %v2859 = vpack.c.b16 %v2848, %v2847
        %v2860 = vpack.c.b16 %v2850, %v2849
        %v2861 = vpack.c.b16 %v2852, %v2851
        %v2862 = vpack.c.b16 %v2854, %v2853
        %2871 = vmatpush.bf16.msra.mxu0 %v2862
        %2872 = vmatpush.bf16.msra.mxu0 %v2861
        %2873 = vmatpush.bf16.msra.mxu0 %v2860
        %2874 = vmatpush.bf16.msra.mxu0 %v2859
        %2875 = vmatpush.bf16.msra.mxu0 %v2858
        %2876 = vmatpush.bf16.msra.mxu0 %v2857
        %2877 = vmatpush.bf16.msra.mxu0 %v2856
        %2878 = vmatpush.bf16.msra.mxu0 %v2855
        %2879 = vmatmul.bf16.gmra.mxu0 %v2805
        %v2880 = vpop.f32.mrf.mxu0
        %v2881 = vadd.f32 0.0, %v2880
        %v2882 = vpop.f32.mrf.mxu0
        %2883 = vdwg.mxu0
        %v2884 = vadd.f32 %v2799, %v2881
        %s2885 = scalar_lea.vmem %s2802, 8 [#allocation4]
        %v2886 = vld [vmem:[%s2885] ss:$2 sm:$0xf]
        %v2887 = vpack.c.bf16 %v2886, %v2886
        %s2888 = scalar_lea.vmem %s4, 448
        %v2889 = vld [vmem:[%s2888] sm:$0xf]
        %v2890 = vld [vmem:[%s2888 + $0x4] sm:$0xf]
        %v2891 = vld [vmem:[%s2888 + $0x8] sm:$0xf]
        %v2892 = vld [vmem:[%s2888 + $0xc] sm:$0xf]
        %v2893 = vld [vmem:[%s2888 + $0x10] sm:$0xf]
        %v2894 = vld [vmem:[%s2888 + $0x14] sm:$0xf]
        %v2895 = vld [vmem:[%s2888 + $0x18] sm:$0xf]
        %v2896 = vld [vmem:[%s2888 + $0x1c] sm:$0xf]
        %v2897 = vld [vmem:[%s2888 + $0x20] sm:$0xf]
        %v2898 = vld [vmem:[%s2888 + $0x24] sm:$0xf]
        %v2899 = vld [vmem:[%s2888 + $0x28] sm:$0xf]
        %v2900 = vld [vmem:[%s2888 + $0x2c] sm:$0xf]
        %v2901 = vld [vmem:[%s2888 + $0x30] sm:$0xf]
        %v2902 = vld [vmem:[%s2888 + $0x34] sm:$0xf]
        %v2903 = vld [vmem:[%s2888 + $0x38] sm:$0xf]
        %v2904 = vld [vmem:[%s2888 + $0x3c] sm:$0xf]
        %v2921 = vunpack.c.l.b16 %v2889
        %v2922 = vunpack.c.l.b16 %v2890
        %v2923 = vunpack.c.l.b16 %v2891
        %v2924 = vunpack.c.l.b16 %v2892
        %v2925 = vunpack.c.l.b16 %v2893
        %v2926 = vunpack.c.l.b16 %v2894
        %v2927 = vunpack.c.l.b16 %v2895
        %v2928 = vunpack.c.l.b16 %v2896
        %v2929 = vunpack.c.l.b16 %v2897
        %v2930 = vunpack.c.l.b16 %v2898
        %v2931 = vunpack.c.l.b16 %v2899
        %v2932 = vunpack.c.l.b16 %v2900
        %v2933 = vunpack.c.l.b16 %v2901
        %v2934 = vunpack.c.l.b16 %v2902
        %v2935 = vunpack.c.l.b16 %v2903
        %v2936 = vunpack.c.l.b16 %v2904
        %v2937 = vpack.c.b16 %v2922, %v2921
        %v2938 = vpack.c.b16 %v2924, %v2923
        %v2939 = vpack.c.b16 %v2926, %v2925
        %v2940 = vpack.c.b16 %v2928, %v2927
        %v2941 = vpack.c.b16 %v2930, %v2929
        %v2942 = vpack.c.b16 %v2932, %v2931
        %v2943 = vpack.c.b16 %v2934, %v2933
        %v2944 = vpack.c.b16 %v2936, %v2935
        %2953 = vmatpush.bf16.msra.mxu0 %v2944
        %2954 = vmatpush.bf16.msra.mxu0 %v2943
        %2955 = vmatpush.bf16.msra.mxu0 %v2942
        %2956 = vmatpush.bf16.msra.mxu0 %v2941
        %2957 = vmatpush.bf16.msra.mxu0 %v2940
        %2958 = vmatpush.bf16.msra.mxu0 %v2939
        %2959 = vmatpush.bf16.msra.mxu0 %v2938
        %2960 = vmatpush.bf16.msra.mxu0 %v2937
        %2961 = vmatmul.bf16.gmra.mxu0 %v2887
        %v2962 = vpop.f32.mrf.mxu0
        %v2963 = vadd.f32 0.0, %v2962
        %v2964 = vpop.f32.mrf.mxu0
        %2965 = vdwg.mxu0
        %v2966 = vadd.f32 %v2884, %v2963
        %s2967 = scalar_lea.vmem %s2802, 9 [#allocation4]
        %v2968 = vld [vmem:[%s2967] ss:$2 sm:$0xf]
        %v2969 = vpack.c.bf16 %v2968, %v2968
        %s2970 = scalar_lea.vmem %s4, 512
        %v2971 = vld [vmem:[%s2970] sm:$0xf]
        %v2972 = vld [vmem:[%s2970 + $0x4] sm:$0xf]
        %v2973 = vld [vmem:[%s2970 + $0x8] sm:$0xf]
        %v2974 = vld [vmem:[%s2970 + $0xc] sm:$0xf]
        %v2975 = vld [vmem:[%s2970 + $0x10] sm:$0xf]
        %v2976 = vld [vmem:[%s2970 + $0x14] sm:$0xf]
        %v2977 = vld [vmem:[%s2970 + $0x18] sm:$0xf]
        %v2978 = vld [vmem:[%s2970 + $0x1c] sm:$0xf]
        %v2979 = vld [vmem:[%s2970 + $0x20] sm:$0xf]
        %v2980 = vld [vmem:[%s2970 + $0x24] sm:$0xf]
        %v2981 = vld [vmem:[%s2970 + $0x28] sm:$0xf]
        %v2982 = vld [vmem:[%s2970 + $0x2c] sm:$0xf]
        %v2983 = vld [vmem:[%s2970 + $0x30] sm:$0xf]
        %v2984 = vld [vmem:[%s2970 + $0x34] sm:$0xf]
        %v2985 = vld [vmem:[%s2970 + $0x38] sm:$0xf]
        %v2986 = vld [vmem:[%s2970 + $0x3c] sm:$0xf]
        %v3003 = vunpack.c.l.b16 %v2971
        %v3004 = vunpack.c.l.b16 %v2972
        %v3005 = vunpack.c.l.b16 %v2973
        %v3006 = vunpack.c.l.b16 %v2974
        %v3007 = vunpack.c.l.b16 %v2975
        %v3008 = vunpack.c.l.b16 %v2976
        %v3009 = vunpack.c.l.b16 %v2977
        %v3010 = vunpack.c.l.b16 %v2978
        %v3011 = vunpack.c.l.b16 %v2979
        %v3012 = vunpack.c.l.b16 %v2980
        %v3013 = vunpack.c.l.b16 %v2981
        %v3014 = vunpack.c.l.b16 %v2982
        %v3015 = vunpack.c.l.b16 %v2983
        %v3016 = vunpack.c.l.b16 %v2984
        %v3017 = vunpack.c.l.b16 %v2985
        %v3018 = vunpack.c.l.b16 %v2986
        %v3019 = vpack.c.b16 %v3004, %v3003
        %v3020 = vpack.c.b16 %v3006, %v3005
        %v3021 = vpack.c.b16 %v3008, %v3007
        %v3022 = vpack.c.b16 %v3010, %v3009
        %v3023 = vpack.c.b16 %v3012, %v3011
        %v3024 = vpack.c.b16 %v3014, %v3013
        %v3025 = vpack.c.b16 %v3016, %v3015
        %v3026 = vpack.c.b16 %v3018, %v3017
        %3035 = vmatpush.bf16.msra.mxu0 %v3026
        %3036 = vmatpush.bf16.msra.mxu0 %v3025
        %3037 = vmatpush.bf16.msra.mxu0 %v3024
        %3038 = vmatpush.bf16.msra.mxu0 %v3023
        %3039 = vmatpush.bf16.msra.mxu0 %v3022
        %3040 = vmatpush.bf16.msra.mxu0 %v3021
        %3041 = vmatpush.bf16.msra.mxu0 %v3020
        %3042 = vmatpush.bf16.msra.mxu0 %v3019
        %3043 = vmatmul.bf16.gmra.mxu0 %v2969
        %v3044 = vpop.f32.mrf.mxu0
        %v3045 = vadd.f32 0.0, %v3044
        %v3046 = vpop.f32.mrf.mxu0
        %3047 = vdwg.mxu0
        %v3048 = vadd.f32 %v2966, %v3045
        %s3049 = sadd.s32 %s2298, 1
        %s3050 = smul.u32 %s3049, 16
        %s3051 = scalar_lea.vmem [#allocation5], %s3050
        %3052 = vst [vmem:[%s3051 + $0x8] sm:$0xf] %v3048
        %vm3053 = vcmask 1043456
        %v3054 = vsel %vm3053, %v3048, 0.0
        %v3055 = vrot.slane %v3054, 4
        %v3056 = vadd.f32 %v3054, %v3055
        %v3057 = vrot.slane %v3056, 2
        %v3058 = vadd.f32 %v3056, %v3057
        %v3059 = vrot.slane %v3058, 1
        %v3060 = vadd.f32 %v3058, %v3059
        %v3061 = vadd.f32 %v2303, %v3060
        %v3062 = vmul.f32 %v3048, %v3048
        %v3063 = vsel %vm3053, %v3062, 0.0
        %v3064 = vrot.slane %v3063, 4
        %v3065 = vadd.f32 %v3063, %v3064
        %v3066 = vrot.slane %v3065, 2
        %v3067 = vadd.f32 %v3065, %v3066
        %v3068 = vrot.slane %v3067, 1
        %v3069 = vadd.f32 %v3067, %v3068
        %v3070 = vadd.f32 %v2304, %v3069
      $region91: #{_lambda_.1} parent=43 // loop_footer
        %s2302 = sadd.s32 1, %s2298
      $region92: #{_lambda_.1} parent=43 // loop_footer_branch
        %2297 = sbr.rel target = $region88
      $region93: #{_lambda_.1} parent=43 // loop_exit
        _
      %v3071 = vmul.f32 %v2303, 0.0625
      %v3072 = vmul.f32 %v2304, 0.0625
      %v3073 = vmul.f32 %v3071, %v3071
      %v3074 = vsub.f32 %v3072, %v3073
      %v3075 = vmax.f32 %v3074, 0.0
      %v3076 = vadd.f32 %v3075, 1e-05
      %v3077 = vrsqrt.pop %v3076
      %v3078 = vmul.f32 %v3077, %v3076
      %v3079 = vmul.f32 %v3078, %v3077
      %v3080 = vmul.f32 0.5, %v3079
      %v3081 = vsub.f32 1.5, %v3080
      %v3082 = vmul.f32 %v3077, %v3081
      %vm3083 = vweird.f32 %v3076
      %vm3084 = vweird.f32 %v3077
      %vm3085 = vmor %vm3083, %vm3084
      %v3086 = vsel %vm3085, %v3077, %v3082
      loop: start=0, step=1, limit=4
      $region94: #{_lambda_.1} parent=43 // loop_pre_header
        _
      $region95: #{_lambda_.1} parent=43 // loop_header
        %s3088 = sphi 0, %s3092
        %p3089 = scmp.ge.s32.totalorder %s3088, 4
      $region96: #{_lambda_.1} parent=43 // loop_header_branch
        %3091 = sbr.rel (%p3089) target = $region100
      $region97: #{_lambda_.1} parent=43 // loop_body
        %s3093 = sadd.s32 %s3088, 1
        %s3094 = smul.u32 %s3093, 16
        %s3095 = scalar_lea.vmem [#allocation5], %s3094
        %v3096 = vld [vmem:[%s3095 + $0x8] sm:$0xf]
        %v3097 = vsub.f32 %v3096, %v3071
        %v3098 = vmul.f32 %v3097, %v3086
        %v3099 = vmax.f32 %v3098, 0.0
        %3100 = vst [vmem:[%s3095 + $0x8] sm:$0xf] %v3099
      $region98: #{_lambda_.1} parent=43 // loop_footer
        %s3092 = sadd.s32 1, %s3088
      $region99: #{_lambda_.1} parent=43 // loop_footer_branch
        %3087 = sbr.rel target = $region95
      $region100: #{_lambda_.1} parent=43 // loop_exit
        _
      loop: start=0, step=1, limit=2
      $region101: #{_lambda_.1} parent=43 // loop_pre_header
        _
      $region102: #{_lambda_.1} parent=43 // loop_header
        %s3102 = sphi 0, %s3106
        %p3103 = scmp.ge.s32.totalorder %s3102, 2
        %v3107 = vphi 0.0, %v3865
        %v3108 = vphi 0.0, %v3874
      $region103: #{_lambda_.1} parent=43 // loop_header_branch
        %3105 = sbr.rel (%p3103) target = $region107
      $region104: #{_lambda_.1} parent=43 // loop_body
        %s3109 = smul.u32 %s3102, 2
        %s3110 = smul.u32 %s3109, 16
        %s3111 = scalar_lea.vmem [#allocation5], %s3110
        %s3112 = scalar_lea.vmem %s3111, 7 [#allocation5]
        %v3113 = vld [vmem:[%s3112] ss:$2 sm:$0x3]
        %v3114 = vpack.c.bf16 %v3113, %v3113
        %v3115 = vld [vmem:[%s5] sm:$0xf]
        %v3116 = vld [vmem:[%s5 + $0x4] sm:$0xf]
        %v3117 = vld [vmem:[%s5 + $0x8] sm:$0xf]
        %v3118 = vld [vmem:[%s5 + $0xc] sm:$0xf]
        %v3119 = vld [vmem:[%s5 + $0x10] sm:$0xf]
        %v3120 = vld [vmem:[%s5 + $0x14] sm:$0xf]
        %v3121 = vld [vmem:[%s5 + $0x18] sm:$0xf]
        %v3122 = vld [vmem:[%s5 + $0x1c] sm:$0xf]
        %v3123 = vld [vmem:[%s5 + $0x20] sm:$0xf]
        %v3124 = vld [vmem:[%s5 + $0x24] sm:$0xf]
        %v3125 = vld [vmem:[%s5 + $0x28] sm:$0xf]
        %v3126 = vld [vmem:[%s5 + $0x2c] sm:$0xf]
        %v3127 = vld [vmem:[%s5 + $0x30] sm:$0xf]
        %v3128 = vld [vmem:[%s5 + $0x34] sm:$0xf]
        %v3129 = vld [vmem:[%s5 + $0x38] sm:$0xf]
        %v3130 = vld [vmem:[%s5 + $0x3c] sm:$0xf]
        %s3131 = scalar_lea.vmem %s3111, 8 [#allocation5]
        %v3132 = vld [vmem:[%s3131] ss:$2 sm:$0x3]
        %v3133 = vpack.c.bf16 %v3132, %v3132
        %s3134 = scalar_lea.vmem %s5, 64
        %v3135 = vld [vmem:[%s3134] sm:$0xf]
        %v3136 = vld [vmem:[%s3134 + $0x4] sm:$0xf]
        %v3137 = vld [vmem:[%s3134 + $0x8] sm:$0xf]
        %v3138 = vld [vmem:[%s3134 + $0xc] sm:$0xf]
        %v3139 = vld [vmem:[%s3134 + $0x10] sm:$0xf]
        %v3140 = vld [vmem:[%s3134 + $0x14] sm:$0xf]
        %v3141 = vld [vmem:[%s3134 + $0x18] sm:$0xf]
        %v3142 = vld [vmem:[%s3134 + $0x1c] sm:$0xf]
        %v3143 = vld [vmem:[%s3134 + $0x20] sm:$0xf]
        %v3144 = vld [vmem:[%s3134 + $0x24] sm:$0xf]
        %v3145 = vld [vmem:[%s3134 + $0x28] sm:$0xf]
        %v3146 = vld [vmem:[%s3134 + $0x2c] sm:$0xf]
        %v3147 = vld [vmem:[%s3134 + $0x30] sm:$0xf]
        %v3148 = vld [vmem:[%s3134 + $0x34] sm:$0xf]
        %v3149 = vld [vmem:[%s3134 + $0x38] sm:$0xf]
        %v3150 = vld [vmem:[%s3134 + $0x3c] sm:$0xf]
        %v3167 = vunpack.c.l.b16 %v3135
        %v3168 = vunpack.c.l.b16 %v3136
        %v3169 = vunpack.c.l.b16 %v3137
        %v3170 = vunpack.c.l.b16 %v3138
        %v3171 = vunpack.c.l.b16 %v3139
        %v3172 = vunpack.c.l.b16 %v3140
        %v3173 = vunpack.c.l.b16 %v3141
        %v3174 = vunpack.c.l.b16 %v3142
        %v3175 = vunpack.c.l.b16 %v3143
        %v3176 = vunpack.c.l.b16 %v3144
        %v3177 = vunpack.c.l.b16 %v3145
        %v3178 = vunpack.c.l.b16 %v3146
        %v3179 = vunpack.c.l.b16 %v3147
        %v3180 = vunpack.c.l.b16 %v3148
        %v3181 = vunpack.c.l.b16 %v3149
        %v3182 = vunpack.c.l.b16 %v3150
        %v3183 = vpack.c.b16 %v3168, %v3167
        %v3184 = vpack.c.b16 %v3170, %v3169
        %v3185 = vpack.c.b16 %v3172, %v3171
        %v3186 = vpack.c.b16 %v3174, %v3173
        %v3187 = vpack.c.b16 %v3176, %v3175
        %v3188 = vpack.c.b16 %v3178, %v3177
        %v3189 = vpack.c.b16 %v3180, %v3179
        %v3190 = vpack.c.b16 %v3182, %v3181
        %3199 = vmatpush.bf16.msra.mxu0 %v3190
        %3200 = vmatpush.bf16.msra.mxu0 %v3189
        %3201 = vmatpush.bf16.msra.mxu0 %v3188
        %3202 = vmatpush.bf16.msra.mxu0 %v3187
        %3203 = vmatpush.bf16.msra.mxu0 %v3186
        %3204 = vmatpush.bf16.msra.mxu0 %v3185
        %3205 = vmatpush.bf16.msra.mxu0 %v3184
        %3206 = vmatpush.bf16.msra.mxu0 %v3183
        %3207 = vmatmul.bf16.gmra.mxu0 %v3133
        %v3208 = vpop.f32.mrf.mxu0
        %v3209 = vadd.f32 0.0, %v3208
        %v3210 = vpop.f32.mrf.mxu0
        %3211 = vdwg.mxu0
        %v3228 = vunpack.c.l.b16 %v3115
        %v3229 = vunpack.c.l.b16 %v3116
        %v3230 = vunpack.c.l.b16 %v3117
        %v3231 = vunpack.c.l.b16 %v3118
        %v3232 = vunpack.c.l.b16 %v3119
        %v3233 = vunpack.c.l.b16 %v3120
        %v3234 = vunpack.c.l.b16 %v3121
        %v3235 = vunpack.c.l.b16 %v3122
        %v3236 = vunpack.c.l.b16 %v3123
        %v3237 = vunpack.c.l.b16 %v3124
        %v3238 = vunpack.c.l.b16 %v3125
        %v3239 = vunpack.c.l.b16 %v3126
        %v3240 = vunpack.c.l.b16 %v3127
        %v3241 = vunpack.c.l.b16 %v3128
        %v3242 = vunpack.c.l.b16 %v3129
        %v3243 = vunpack.c.l.b16 %v3130
        %v3244 = vpack.c.b16 %v3229, %v3228
        %v3245 = vpack.c.b16 %v3231, %v3230
        %v3246 = vpack.c.b16 %v3233, %v3232
        %v3247 = vpack.c.b16 %v3235, %v3234
        %v3248 = vpack.c.b16 %v3237, %v3236
        %v3249 = vpack.c.b16 %v3239, %v3238
        %v3250 = vpack.c.b16 %v3241, %v3240
        %v3251 = vpack.c.b16 %v3243, %v3242
        %3260 = vmatpush.bf16.msra.mxu0 %v3251
        %3261 = vmatpush.bf16.msra.mxu0 %v3250
        %3262 = vmatpush.bf16.msra.mxu0 %v3249
        %3263 = vmatpush.bf16.msra.mxu0 %v3248
        %3264 = vmatpush.bf16.msra.mxu0 %v3247
        %3265 = vmatpush.bf16.msra.mxu0 %v3246
        %3266 = vmatpush.bf16.msra.mxu0 %v3245
        %3267 = vmatpush.bf16.msra.mxu0 %v3244
        %3268 = vmatmul.bf16.gmra.mxu0 %v3114
        %v3269 = vpop.f32.mrf.mxu0
        %v3270 = vadd.f32 %v3209, %v3269
        %v3271 = vpop.f32.mrf.mxu0
        %3272 = vdwg.mxu0
        %s3273 = scalar_lea.vmem %s3111, 9 [#allocation5]
        %v3274 = vld [vmem:[%s3273] ss:$2 sm:$0x3]
        %v3275 = vpack.c.bf16 %v3274, %v3274
        %s3276 = scalar_lea.vmem %s5, 128
        %v3277 = vld [vmem:[%s3276] sm:$0xf]
        %v3278 = vld [vmem:[%s3276 + $0x4] sm:$0xf]
        %v3279 = vld [vmem:[%s3276 + $0x8] sm:$0xf]
        %v3280 = vld [vmem:[%s3276 + $0xc] sm:$0xf]
        %v3281 = vld [vmem:[%s3276 + $0x10] sm:$0xf]
        %v3282 = vld [vmem:[%s3276 + $0x14] sm:$0xf]
        %v3283 = vld [vmem:[%s3276 + $0x18] sm:$0xf]
        %v3284 = vld [vmem:[%s3276 + $0x1c] sm:$0xf]
        %v3285 = vld [vmem:[%s3276 + $0x20] sm:$0xf]
        %v3286 = vld [vmem:[%s3276 + $0x24] sm:$0xf]
        %v3287 = vld [vmem:[%s3276 + $0x28] sm:$0xf]
        %v3288 = vld [vmem:[%s3276 + $0x2c] sm:$0xf]
        %v3289 = vld [vmem:[%s3276 + $0x30] sm:$0xf]
        %v3290 = vld [vmem:[%s3276 + $0x34] sm:$0xf]
        %v3291 = vld [vmem:[%s3276 + $0x38] sm:$0xf]
        %v3292 = vld [vmem:[%s3276 + $0x3c] sm:$0xf]
        %v3309 = vunpack.c.l.b16 %v3277
        %v3310 = vunpack.c.l.b16 %v3278
        %v3311 = vunpack.c.l.b16 %v3279
        %v3312 = vunpack.c.l.b16 %v3280
        %v3313 = vunpack.c.l.b16 %v3281
        %v3314 = vunpack.c.l.b16 %v3282
        %v3315 = vunpack.c.l.b16 %v3283
        %v3316 = vunpack.c.l.b16 %v3284
        %v3317 = vunpack.c.l.b16 %v3285
        %v3318 = vunpack.c.l.b16 %v3286
        %v3319 = vunpack.c.l.b16 %v3287
        %v3320 = vunpack.c.l.b16 %v3288
        %v3321 = vunpack.c.l.b16 %v3289
        %v3322 = vunpack.c.l.b16 %v3290
        %v3323 = vunpack.c.l.b16 %v3291
        %v3324 = vunpack.c.l.b16 %v3292
        %v3325 = vpack.c.b16 %v3310, %v3309
        %v3326 = vpack.c.b16 %v3312, %v3311
        %v3327 = vpack.c.b16 %v3314, %v3313
        %v3328 = vpack.c.b16 %v3316, %v3315
        %v3329 = vpack.c.b16 %v3318, %v3317
        %v3330 = vpack.c.b16 %v3320, %v3319
        %v3331 = vpack.c.b16 %v3322, %v3321
        %v3332 = vpack.c.b16 %v3324, %v3323
        %3341 = vmatpush.bf16.msra.mxu0 %v3332
        %3342 = vmatpush.bf16.msra.mxu0 %v3331
        %3343 = vmatpush.bf16.msra.mxu0 %v3330
        %3344 = vmatpush.bf16.msra.mxu0 %v3329
        %3345 = vmatpush.bf16.msra.mxu0 %v3328
        %3346 = vmatpush.bf16.msra.mxu0 %v3327
        %3347 = vmatpush.bf16.msra.mxu0 %v3326
        %3348 = vmatpush.bf16.msra.mxu0 %v3325
        %3349 = vmatmul.bf16.gmra.mxu0 %v3275
        %v3350 = vpop.f32.mrf.mxu0
        %v3351 = vadd.f32 0.0, %v3350
        %v3352 = vpop.f32.mrf.mxu0
        %3353 = vdwg.mxu0
        %v3354 = vadd.f32 %v3270, %v3351
        %s3355 = sadd.s32 %s3109, 1
        %s3356 = smul.u32 %s3355, 16
        %s3357 = scalar_lea.vmem [#allocation5], %s3356
        %s3358 = scalar_lea.vmem %s3357, 7 [#allocation5]
        %v3359 = vld [vmem:[%s3358] ss:$2 sm:$0x3]
        %v3360 = vpack.c.bf16 %v3359, %v3359
        %s3361 = scalar_lea.vmem %s5, 192
        %v3362 = vld [vmem:[%s3361] sm:$0xf]
        %v3363 = vld [vmem:[%s3361 + $0x4] sm:$0xf]
        %v3364 = vld [vmem:[%s3361 + $0x8] sm:$0xf]
        %v3365 = vld [vmem:[%s3361 + $0xc] sm:$0xf]
        %v3366 = vld [vmem:[%s3361 + $0x10] sm:$0xf]
        %v3367 = vld [vmem:[%s3361 + $0x14] sm:$0xf]
        %v3368 = vld [vmem:[%s3361 + $0x18] sm:$0xf]
        %v3369 = vld [vmem:[%s3361 + $0x1c] sm:$0xf]
        %v3370 = vld [vmem:[%s3361 + $0x20] sm:$0xf]
        %v3371 = vld [vmem:[%s3361 + $0x24] sm:$0xf]
        %v3372 = vld [vmem:[%s3361 + $0x28] sm:$0xf]
        %v3373 = vld [vmem:[%s3361 + $0x2c] sm:$0xf]
        %v3374 = vld [vmem:[%s3361 + $0x30] sm:$0xf]
        %v3375 = vld [vmem:[%s3361 + $0x34] sm:$0xf]
        %v3376 = vld [vmem:[%s3361 + $0x38] sm:$0xf]
        %v3377 = vld [vmem:[%s3361 + $0x3c] sm:$0xf]
        %v3394 = vunpack.c.l.b16 %v3362
        %v3395 = vunpack.c.l.b16 %v3363
        %v3396 = vunpack.c.l.b16 %v3364
        %v3397 = vunpack.c.l.b16 %v3365
        %v3398 = vunpack.c.l.b16 %v3366
        %v3399 = vunpack.c.l.b16 %v3367
        %v3400 = vunpack.c.l.b16 %v3368
        %v3401 = vunpack.c.l.b16 %v3369
        %v3402 = vunpack.c.l.b16 %v3370
        %v3403 = vunpack.c.l.b16 %v3371
        %v3404 = vunpack.c.l.b16 %v3372
        %v3405 = vunpack.c.l.b16 %v3373
        %v3406 = vunpack.c.l.b16 %v3374
        %v3407 = vunpack.c.l.b16 %v3375
        %v3408 = vunpack.c.l.b16 %v3376
        %v3409 = vunpack.c.l.b16 %v3377
        %v3410 = vpack.c.b16 %v3395, %v3394
        %v3411 = vpack.c.b16 %v3397, %v3396
        %v3412 = vpack.c.b16 %v3399, %v3398
        %v3413 = vpack.c.b16 %v3401, %v3400
        %v3414 = vpack.c.b16 %v3403, %v3402
        %v3415 = vpack.c.b16 %v3405, %v3404
        %v3416 = vpack.c.b16 %v3407, %v3406
        %v3417 = vpack.c.b16 %v3409, %v3408
        %3426 = vmatpush.bf16.msra.mxu0 %v3417
        %3427 = vmatpush.bf16.msra.mxu0 %v3416
        %3428 = vmatpush.bf16.msra.mxu0 %v3415
        %3429 = vmatpush.bf16.msra.mxu0 %v3414
        %3430 = vmatpush.bf16.msra.mxu0 %v3413
        %3431 = vmatpush.bf16.msra.mxu0 %v3412
        %3432 = vmatpush.bf16.msra.mxu0 %v3411
        %3433 = vmatpush.bf16.msra.mxu0 %v3410
        %3434 = vmatmul.bf16.gmra.mxu0 %v3360
        %v3435 = vpop.f32.mrf.mxu0
        %v3436 = vadd.f32 0.0, %v3435
        %v3437 = vpop.f32.mrf.mxu0
        %3438 = vdwg.mxu0
        %v3439 = vadd.f32 %v3354, %v3436
        %s3440 = scalar_lea.vmem %s3357, 8 [#allocation5]
        %v3441 = vld [vmem:[%s3440] ss:$2 sm:$0x3]
        %v3442 = vpack.c.bf16 %v3441, %v3441
        %s3443 = scalar_lea.vmem %s5, 256
        %v3444 = vld [vmem:[%s3443] sm:$0xf]
        %v3445 = vld [vmem:[%s3443 + $0x4] sm:$0xf]
        %v3446 = vld [vmem:[%s3443 + $0x8] sm:$0xf]
        %v3447 = vld [vmem:[%s3443 + $0xc] sm:$0xf]
        %v3448 = vld [vmem:[%s3443 + $0x10] sm:$0xf]
        %v3449 = vld [vmem:[%s3443 + $0x14] sm:$0xf]
        %v3450 = vld [vmem:[%s3443 + $0x18] sm:$0xf]
        %v3451 = vld [vmem:[%s3443 + $0x1c] sm:$0xf]
        %v3452 = vld [vmem:[%s3443 + $0x20] sm:$0xf]
        %v3453 = vld [vmem:[%s3443 + $0x24] sm:$0xf]
        %v3454 = vld [vmem:[%s3443 + $0x28] sm:$0xf]
        %v3455 = vld [vmem:[%s3443 + $0x2c] sm:$0xf]
        %v3456 = vld [vmem:[%s3443 + $0x30] sm:$0xf]
        %v3457 = vld [vmem:[%s3443 + $0x34] sm:$0xf]
        %v3458 = vld [vmem:[%s3443 + $0x38] sm:$0xf]
        %v3459 = vld [vmem:[%s3443 + $0x3c] sm:$0xf]
        %v3476 = vunpack.c.l.b16 %v3444
        %v3477 = vunpack.c.l.b16 %v3445
        %v3478 = vunpack.c.l.b16 %v3446
        %v3479 = vunpack.c.l.b16 %v3447
        %v3480 = vunpack.c.l.b16 %v3448
        %v3481 = vunpack.c.l.b16 %v3449
        %v3482 = vunpack.c.l.b16 %v3450
        %v3483 = vunpack.c.l.b16 %v3451
        %v3484 = vunpack.c.l.b16 %v3452
        %v3485 = vunpack.c.l.b16 %v3453
        %v3486 = vunpack.c.l.b16 %v3454
        %v3487 = vunpack.c.l.b16 %v3455
        %v3488 = vunpack.c.l.b16 %v3456
        %v3489 = vunpack.c.l.b16 %v3457
        %v3490 = vunpack.c.l.b16 %v3458
        %v3491 = vunpack.c.l.b16 %v3459
        %v3492 = vpack.c.b16 %v3477, %v3476
        %v3493 = vpack.c.b16 %v3479, %v3478
        %v3494 = vpack.c.b16 %v3481, %v3480
        %v3495 = vpack.c.b16 %v3483, %v3482
        %v3496 = vpack.c.b16 %v3485, %v3484
        %v3497 = vpack.c.b16 %v3487, %v3486
        %v3498 = vpack.c.b16 %v3489, %v3488
        %v3499 = vpack.c.b16 %v3491, %v3490
        %3508 = vmatpush.bf16.msra.mxu0 %v3499
        %3509 = vmatpush.bf16.msra.mxu0 %v3498
        %3510 = vmatpush.bf16.msra.mxu0 %v3497
        %3511 = vmatpush.bf16.msra.mxu0 %v3496
        %3512 = vmatpush.bf16.msra.mxu0 %v3495
        %3513 = vmatpush.bf16.msra.mxu0 %v3494
        %3514 = vmatpush.bf16.msra.mxu0 %v3493
        %3515 = vmatpush.bf16.msra.mxu0 %v3492
        %3516 = vmatmul.bf16.gmra.mxu0 %v3442
        %v3517 = vpop.f32.mrf.mxu0
        %v3518 = vadd.f32 0.0, %v3517
        %v3519 = vpop.f32.mrf.mxu0
        %3520 = vdwg.mxu0
        %v3521 = vadd.f32 %v3439, %v3518
        %s3522 = scalar_lea.vmem %s3357, 9 [#allocation5]
        %v3523 = vld [vmem:[%s3522] ss:$2 sm:$0x3]
        %v3524 = vpack.c.bf16 %v3523, %v3523
        %s3525 = scalar_lea.vmem %s5, 320
        %v3526 = vld [vmem:[%s3525] sm:$0xf]
        %v3527 = vld [vmem:[%s3525 + $0x4] sm:$0xf]
        %v3528 = vld [vmem:[%s3525 + $0x8] sm:$0xf]
        %v3529 = vld [vmem:[%s3525 + $0xc] sm:$0xf]
        %v3530 = vld [vmem:[%s3525 + $0x10] sm:$0xf]
        %v3531 = vld [vmem:[%s3525 + $0x14] sm:$0xf]
        %v3532 = vld [vmem:[%s3525 + $0x18] sm:$0xf]
        %v3533 = vld [vmem:[%s3525 + $0x1c] sm:$0xf]
        %v3534 = vld [vmem:[%s3525 + $0x20] sm:$0xf]
        %v3535 = vld [vmem:[%s3525 + $0x24] sm:$0xf]
        %v3536 = vld [vmem:[%s3525 + $0x28] sm:$0xf]
        %v3537 = vld [vmem:[%s3525 + $0x2c] sm:$0xf]
        %v3538 = vld [vmem:[%s3525 + $0x30] sm:$0xf]
        %v3539 = vld [vmem:[%s3525 + $0x34] sm:$0xf]
        %v3540 = vld [vmem:[%s3525 + $0x38] sm:$0xf]
        %v3541 = vld [vmem:[%s3525 + $0x3c] sm:$0xf]
        %v3558 = vunpack.c.l.b16 %v3526
        %v3559 = vunpack.c.l.b16 %v3527
        %v3560 = vunpack.c.l.b16 %v3528
        %v3561 = vunpack.c.l.b16 %v3529
        %v3562 = vunpack.c.l.b16 %v3530
        %v3563 = vunpack.c.l.b16 %v3531
        %v3564 = vunpack.c.l.b16 %v3532
        %v3565 = vunpack.c.l.b16 %v3533
        %v3566 = vunpack.c.l.b16 %v3534
        %v3567 = vunpack.c.l.b16 %v3535
        %v3568 = vunpack.c.l.b16 %v3536
        %v3569 = vunpack.c.l.b16 %v3537
        %v3570 = vunpack.c.l.b16 %v3538
        %v3571 = vunpack.c.l.b16 %v3539
        %v3572 = vunpack.c.l.b16 %v3540
        %v3573 = vunpack.c.l.b16 %v3541
        %v3574 = vpack.c.b16 %v3559, %v3558
        %v3575 = vpack.c.b16 %v3561, %v3560
        %v3576 = vpack.c.b16 %v3563, %v3562
        %v3577 = vpack.c.b16 %v3565, %v3564
        %v3578 = vpack.c.b16 %v3567, %v3566
        %v3579 = vpack.c.b16 %v3569, %v3568
        %v3580 = vpack.c.b16 %v3571, %v3570
        %v3581 = vpack.c.b16 %v3573, %v3572
        %3590 = vmatpush.bf16.msra.mxu0 %v3581
        %3591 = vmatpush.bf16.msra.mxu0 %v3580
        %3592 = vmatpush.bf16.msra.mxu0 %v3579
        %3593 = vmatpush.bf16.msra.mxu0 %v3578
        %3594 = vmatpush.bf16.msra.mxu0 %v3577
        %3595 = vmatpush.bf16.msra.mxu0 %v3576
        %3596 = vmatpush.bf16.msra.mxu0 %v3575
        %3597 = vmatpush.bf16.msra.mxu0 %v3574
        %3598 = vmatmul.bf16.gmra.mxu0 %v3524
        %v3599 = vpop.f32.mrf.mxu0
        %v3600 = vadd.f32 0.0, %v3599
        %v3601 = vpop.f32.mrf.mxu0
        %3602 = vdwg.mxu0
        %v3603 = vadd.f32 %v3521, %v3600
        %s3604 = sadd.s32 %s3109, 2
        %s3605 = smul.u32 %s3604, 16
        %s3606 = scalar_lea.vmem [#allocation5], %s3605
        %s3607 = scalar_lea.vmem %s3606, 7 [#allocation5]
        %v3608 = vld [vmem:[%s3607] ss:$2 sm:$0x3]
        %v3609 = vpack.c.bf16 %v3608, %v3608
        %s3610 = scalar_lea.vmem %s5, 384
        %v3611 = vld [vmem:[%s3610] sm:$0xf]
        %v3612 = vld [vmem:[%s3610 + $0x4] sm:$0xf]
        %v3613 = vld [vmem:[%s3610 + $0x8] sm:$0xf]
        %v3614 = vld [vmem:[%s3610 + $0xc] sm:$0xf]
        %v3615 = vld [vmem:[%s3610 + $0x10] sm:$0xf]
        %v3616 = vld [vmem:[%s3610 + $0x14] sm:$0xf]
        %v3617 = vld [vmem:[%s3610 + $0x18] sm:$0xf]
        %v3618 = vld [vmem:[%s3610 + $0x1c] sm:$0xf]
        %v3619 = vld [vmem:[%s3610 + $0x20] sm:$0xf]
        %v3620 = vld [vmem:[%s3610 + $0x24] sm:$0xf]
        %v3621 = vld [vmem:[%s3610 + $0x28] sm:$0xf]
        %v3622 = vld [vmem:[%s3610 + $0x2c] sm:$0xf]
        %v3623 = vld [vmem:[%s3610 + $0x30] sm:$0xf]
        %v3624 = vld [vmem:[%s3610 + $0x34] sm:$0xf]
        %v3625 = vld [vmem:[%s3610 + $0x38] sm:$0xf]
        %v3626 = vld [vmem:[%s3610 + $0x3c] sm:$0xf]
        %v3643 = vunpack.c.l.b16 %v3611
        %v3644 = vunpack.c.l.b16 %v3612
        %v3645 = vunpack.c.l.b16 %v3613
        %v3646 = vunpack.c.l.b16 %v3614
        %v3647 = vunpack.c.l.b16 %v3615
        %v3648 = vunpack.c.l.b16 %v3616
        %v3649 = vunpack.c.l.b16 %v3617
        %v3650 = vunpack.c.l.b16 %v3618
        %v3651 = vunpack.c.l.b16 %v3619
        %v3652 = vunpack.c.l.b16 %v3620
        %v3653 = vunpack.c.l.b16 %v3621
        %v3654 = vunpack.c.l.b16 %v3622
        %v3655 = vunpack.c.l.b16 %v3623
        %v3656 = vunpack.c.l.b16 %v3624
        %v3657 = vunpack.c.l.b16 %v3625
        %v3658 = vunpack.c.l.b16 %v3626
        %v3659 = vpack.c.b16 %v3644, %v3643
        %v3660 = vpack.c.b16 %v3646, %v3645
        %v3661 = vpack.c.b16 %v3648, %v3647
        %v3662 = vpack.c.b16 %v3650, %v3649
        %v3663 = vpack.c.b16 %v3652, %v3651
        %v3664 = vpack.c.b16 %v3654, %v3653
        %v3665 = vpack.c.b16 %v3656, %v3655
        %v3666 = vpack.c.b16 %v3658, %v3657
        %3675 = vmatpush.bf16.msra.mxu0 %v3666
        %3676 = vmatpush.bf16.msra.mxu0 %v3665
        %3677 = vmatpush.bf16.msra.mxu0 %v3664
        %3678 = vmatpush.bf16.msra.mxu0 %v3663
        %3679 = vmatpush.bf16.msra.mxu0 %v3662
        %3680 = vmatpush.bf16.msra.mxu0 %v3661
        %3681 = vmatpush.bf16.msra.mxu0 %v3660
        %3682 = vmatpush.bf16.msra.mxu0 %v3659
        %3683 = vmatmul.bf16.gmra.mxu0 %v3609
        %v3684 = vpop.f32.mrf.mxu0
        %v3685 = vadd.f32 0.0, %v3684
        %v3686 = vpop.f32.mrf.mxu0
        %3687 = vdwg.mxu0
        %v3688 = vadd.f32 %v3603, %v3685
        %s3689 = scalar_lea.vmem %s3606, 8 [#allocation5]
        %v3690 = vld [vmem:[%s3689] ss:$2 sm:$0x3]
        %v3691 = vpack.c.bf16 %v3690, %v3690
        %s3692 = scalar_lea.vmem %s5, 448
        %v3693 = vld [vmem:[%s3692] sm:$0xf]
        %v3694 = vld [vmem:[%s3692 + $0x4] sm:$0xf]
        %v3695 = vld [vmem:[%s3692 + $0x8] sm:$0xf]
        %v3696 = vld [vmem:[%s3692 + $0xc] sm:$0xf]
        %v3697 = vld [vmem:[%s3692 + $0x10] sm:$0xf]
        %v3698 = vld [vmem:[%s3692 + $0x14] sm:$0xf]
        %v3699 = vld [vmem:[%s3692 + $0x18] sm:$0xf]
        %v3700 = vld [vmem:[%s3692 + $0x1c] sm:$0xf]
        %v3701 = vld [vmem:[%s3692 + $0x20] sm:$0xf]
        %v3702 = vld [vmem:[%s3692 + $0x24] sm:$0xf]
        %v3703 = vld [vmem:[%s3692 + $0x28] sm:$0xf]
        %v3704 = vld [vmem:[%s3692 + $0x2c] sm:$0xf]
        %v3705 = vld [vmem:[%s3692 + $0x30] sm:$0xf]
        %v3706 = vld [vmem:[%s3692 + $0x34] sm:$0xf]
        %v3707 = vld [vmem:[%s3692 + $0x38] sm:$0xf]
        %v3708 = vld [vmem:[%s3692 + $0x3c] sm:$0xf]
        %v3725 = vunpack.c.l.b16 %v3693
        %v3726 = vunpack.c.l.b16 %v3694
        %v3727 = vunpack.c.l.b16 %v3695
        %v3728 = vunpack.c.l.b16 %v3696
        %v3729 = vunpack.c.l.b16 %v3697
        %v3730 = vunpack.c.l.b16 %v3698
        %v3731 = vunpack.c.l.b16 %v3699
        %v3732 = vunpack.c.l.b16 %v3700
        %v3733 = vunpack.c.l.b16 %v3701
        %v3734 = vunpack.c.l.b16 %v3702
        %v3735 = vunpack.c.l.b16 %v3703
        %v3736 = vunpack.c.l.b16 %v3704
        %v3737 = vunpack.c.l.b16 %v3705
        %v3738 = vunpack.c.l.b16 %v3706
        %v3739 = vunpack.c.l.b16 %v3707
        %v3740 = vunpack.c.l.b16 %v3708
        %v3741 = vpack.c.b16 %v3726, %v3725
        %v3742 = vpack.c.b16 %v3728, %v3727
        %v3743 = vpack.c.b16 %v3730, %v3729
        %v3744 = vpack.c.b16 %v3732, %v3731
        %v3745 = vpack.c.b16 %v3734, %v3733
        %v3746 = vpack.c.b16 %v3736, %v3735
        %v3747 = vpack.c.b16 %v3738, %v3737
        %v3748 = vpack.c.b16 %v3740, %v3739
        %3757 = vmatpush.bf16.msra.mxu0 %v3748
        %3758 = vmatpush.bf16.msra.mxu0 %v3747
        %3759 = vmatpush.bf16.msra.mxu0 %v3746
        %3760 = vmatpush.bf16.msra.mxu0 %v3745
        %3761 = vmatpush.bf16.msra.mxu0 %v3744
        %3762 = vmatpush.bf16.msra.mxu0 %v3743
        %3763 = vmatpush.bf16.msra.mxu0 %v3742
        %3764 = vmatpush.bf16.msra.mxu0 %v3741
        %3765 = vmatmul.bf16.gmra.mxu0 %v3691
        %v3766 = vpop.f32.mrf.mxu0
        %v3767 = vadd.f32 0.0, %v3766
        %v3768 = vpop.f32.mrf.mxu0
        %3769 = vdwg.mxu0
        %v3770 = vadd.f32 %v3688, %v3767
        %s3771 = scalar_lea.vmem %s3606, 9 [#allocation5]
        %v3772 = vld [vmem:[%s3771] ss:$2 sm:$0x3]
        %v3773 = vpack.c.bf16 %v3772, %v3772
        %s3774 = scalar_lea.vmem %s5, 512
        %v3775 = vld [vmem:[%s3774] sm:$0xf]
        %v3776 = vld [vmem:[%s3774 + $0x4] sm:$0xf]
        %v3777 = vld [vmem:[%s3774 + $0x8] sm:$0xf]
        %v3778 = vld [vmem:[%s3774 + $0xc] sm:$0xf]
        %v3779 = vld [vmem:[%s3774 + $0x10] sm:$0xf]
        %v3780 = vld [vmem:[%s3774 + $0x14] sm:$0xf]
        %v3781 = vld [vmem:[%s3774 + $0x18] sm:$0xf]
        %v3782 = vld [vmem:[%s3774 + $0x1c] sm:$0xf]
        %v3783 = vld [vmem:[%s3774 + $0x20] sm:$0xf]
        %v3784 = vld [vmem:[%s3774 + $0x24] sm:$0xf]
        %v3785 = vld [vmem:[%s3774 + $0x28] sm:$0xf]
        %v3786 = vld [vmem:[%s3774 + $0x2c] sm:$0xf]
        %v3787 = vld [vmem:[%s3774 + $0x30] sm:$0xf]
        %v3788 = vld [vmem:[%s3774 + $0x34] sm:$0xf]
        %v3789 = vld [vmem:[%s3774 + $0x38] sm:$0xf]
        %v3790 = vld [vmem:[%s3774 + $0x3c] sm:$0xf]
        %v3807 = vunpack.c.l.b16 %v3775
        %v3808 = vunpack.c.l.b16 %v3776
        %v3809 = vunpack.c.l.b16 %v3777
        %v3810 = vunpack.c.l.b16 %v3778
        %v3811 = vunpack.c.l.b16 %v3779
        %v3812 = vunpack.c.l.b16 %v3780
        %v3813 = vunpack.c.l.b16 %v3781
        %v3814 = vunpack.c.l.b16 %v3782
        %v3815 = vunpack.c.l.b16 %v3783
        %v3816 = vunpack.c.l.b16 %v3784
        %v3817 = vunpack.c.l.b16 %v3785
        %v3818 = vunpack.c.l.b16 %v3786
        %v3819 = vunpack.c.l.b16 %v3787
        %v3820 = vunpack.c.l.b16 %v3788
        %v3821 = vunpack.c.l.b16 %v3789
        %v3822 = vunpack.c.l.b16 %v3790
        %v3823 = vpack.c.b16 %v3808, %v3807
        %v3824 = vpack.c.b16 %v3810, %v3809
        %v3825 = vpack.c.b16 %v3812, %v3811
        %v3826 = vpack.c.b16 %v3814, %v3813
        %v3827 = vpack.c.b16 %v3816, %v3815
        %v3828 = vpack.c.b16 %v3818, %v3817
        %v3829 = vpack.c.b16 %v3820, %v3819
        %v3830 = vpack.c.b16 %v3822, %v3821
        %3839 = vmatpush.bf16.msra.mxu0 %v3830
        %3840 = vmatpush.bf16.msra.mxu0 %v3829
        %3841 = vmatpush.bf16.msra.mxu0 %v3828
        %3842 = vmatpush.bf16.msra.mxu0 %v3827
        %3843 = vmatpush.bf16.msra.mxu0 %v3826
        %3844 = vmatpush.bf16.msra.mxu0 %v3825
        %3845 = vmatpush.bf16.msra.mxu0 %v3824
        %3846 = vmatpush.bf16.msra.mxu0 %v3823
        %3847 = vmatmul.bf16.gmra.mxu0 %v3773
        %v3848 = vpop.f32.mrf.mxu0
        %v3849 = vadd.f32 0.0, %v3848
        %v3850 = vpop.f32.mrf.mxu0
        %3851 = vdwg.mxu0
        %v3852 = vadd.f32 %v3770, %v3849
        %s3853 = sadd.s32 %s3102, 1
        %s3854 = smul.u32 %s3853, 16
        %s3855 = scalar_lea.vmem [#allocation6], %s3854
        %3856 = vst [vmem:[%s3855 + $0x8] sm:$0x3] %v3852
        %vm3857 = vcmask 1041408
        %v3858 = vsel %vm3857, %v3852, 0.0
        %v3859 = vrot.slane %v3858, 4
        %v3860 = vadd.f32 %v3858, %v3859
        %v3861 = vrot.slane %v3860, 2
        %v3862 = vadd.f32 %v3860, %v3861
        %v3863 = vrot.slane %v3862, 1
        %v3864 = vadd.f32 %v3862, %v3863
        %v3865 = vadd.f32 %v3107, %v3864
        %v3866 = vmul.f32 %v3852, %v3852
        %v3867 = vsel %vm3857, %v3866, 0.0
        %v3868 = vrot.slane %v3867, 4
        %v3869 = vadd.f32 %v3867, %v3868
        %v3870 = vrot.slane %v3869, 2
        %v3871 = vadd.f32 %v3869, %v3870
        %v3872 = vrot.slane %v3871, 1
        %v3873 = vadd.f32 %v3871, %v3872
        %v3874 = vadd.f32 %v3108, %v3873
      $region105: #{_lambda_.1} parent=43 // loop_footer
        %s3106 = sadd.s32 1, %s3102
      $region106: #{_lambda_.1} parent=43 // loop_footer_branch
        %3101 = sbr.rel target = $region102
      $region107: #{_lambda_.1} parent=43 // loop_exit
        _
      %v3875 = vmul.f32 %v3107, 0.25
      %v3876 = vmul.f32 %v3108, 0.25
      %v3877 = vmul.f32 %v3875, %v3875
      %v3878 = vsub.f32 %v3876, %v3877
      %v3879 = vmax.f32 %v3878, 0.0
      %v3880 = vadd.f32 %v3879, 1e-05
      %v3881 = vrsqrt.pop %v3880
      %v3882 = vmul.f32 %v3881, %v3880
      %v3883 = vmul.f32 %v3882, %v3881
      %v3884 = vmul.f32 0.5, %v3883
      %v3885 = vsub.f32 1.5, %v3884
      %v3886 = vmul.f32 %v3881, %v3885
      %vm3887 = vweird.f32 %v3880
      %vm3888 = vweird.f32 %v3881
      %vm3889 = vmor %vm3887, %vm3888
      %v3890 = vsel %vm3889, %v3881, %v3886
      loop: start=0, step=1, limit=2
      $region108: #{_lambda_.1} parent=43 // loop_pre_header
        _
      $region109: #{_lambda_.1} parent=43 // loop_header
        %s3892 = sphi 0, %s3896
        %p3893 = scmp.ge.s32.totalorder %s3892, 2
      $region110: #{_lambda_.1} parent=43 // loop_header_branch
        %3895 = sbr.rel (%p3893) target = $region114
      $region111: #{_lambda_.1} parent=43 // loop_body
        %s3897 = sadd.s32 %s3892, 1
        %s3898 = smul.u32 %s3897, 16
        %s3899 = scalar_lea.vmem [#allocation6], %s3898
        %v3900 = vld [vmem:[%s3899 + $0x8] sm:$0x3]
        %v3901 = vsub.f32 %v3900, %v3875
        %v3902 = vmul.f32 %v3901, %v3890
        %v3903 = vmax.f32 %v3902, 0.0
        %3904 = vst [vmem:[%s3899 + $0x8] sm:$0x3] %v3903
      $region112: #{_lambda_.1} parent=43 // loop_footer
        %s3896 = sadd.s32 1, %s3892
      $region113: #{_lambda_.1} parent=43 // loop_footer_branch
        %3891 = sbr.rel target = $region109
      $region114: #{_lambda_.1} parent=43 // loop_exit
        _
      %s3905 = scalar_lea.vmem [#allocation6], 16
      %v3906 = vld [vmem:[%s3905 + $0x8] sm:$0x3]
      %3907 = vst [vmem:[%s249] sm:$0x3] %v3906
      %s3908 = scalar_lea.vmem [#allocation6], 32
      %v3909 = vld [vmem:[%s3908 + $0x8] sm:$0x3]
      %3910 = vst [vmem:[%s249 + $0x2] sm:$0x3] %v3909
      %p3911 = scmp.lt.s32.totalorder %s17, 1
      %s3912 = scalar_select %p3911, %s17, 1
      %s3913 = smul.addr %s3912, 4
      %s3914 = scalar_lea.vmem %s6, %s3913
      // Predicated region
      $region115: #{_lambda_.1} parent=43 // pred_check
        %p3915 = pneg %p166
      $region116: #{_lambda_.1} parent=43 // pred_check_branch
        %3917 = sbr.rel (%p3915) target = $region118
      $region117: #{_lambda_.1} parent=43 // pred_region
        _
      $region118: #{_lambda_.1} parent=43 // pred_fallthru
        _
    $region44: #{_lambda_.1} parent=5 // pred_fallthru
      _
    %p3918 = scmp.le.s32.totalorder 2, %s12
    // Predicated region
    $region119: #{_lambda_.1} parent=5 // pred_check
      %p3919 = pneg %p3918
    $region120: #{_lambda_.1} parent=5 // pred_check_branch
      %3921 = sbr.rel (%p3919) target = $region122
    $region121: #{_lambda_.1} parent=5 // pred_region
      %s3922 = ssub.s32 %s12, 2
      // Predicated region
      $region123: #{_lambda_.1} parent=121 // pred_check
        %p3923 = pneg %p172
      $region124: #{_lambda_.1} parent=121 // pred_check_branch
        %3925 = sbr.rel (%p3923) target = $region126
      $region125: #{_lambda_.1} parent=121 // pred_region
        %p3926 = scmp.lt.s32.totalorder %s18, 1
        %s3927 = scalar_select %p3926, %s18, 1
        %s3928 = smul.addr %s3927, 4
        %s3929 = scalar_lea.vmem %s6, %s3928
      $region126: #{_lambda_.1} parent=121 // pred_fallthru
        _
    $region122: #{_lambda_.1} parent=5 // pred_fallthru
      _
  $region6: #{_lambda_.1} parent=0 // loop_footer
    %s16 = sadd.s32 1, %s12
  $region7: #{_lambda_.1} parent=0 // loop_footer_branch
    %11 = sbr.rel target = $region3
  $region8: #{_lambda_.1} parent=0 // loop_exit
    _

</llo_original>
